<compile_context>
chip_gen: v5e
topology: v5e:2x2
jax: 0.10.0
libtpu: 0.0.40
codegen_flags: <defaults>
</compile_context>

<pallas_src>
from functools import partial

import jax
import jax.numpy as jnp
from jax.experimental import pallas as pl
from jax.experimental.pallas import tpu as pltpu

_INV_SQRT2 = 0.7071067811865476


def _layernorm(x, w, b, eps=1e-5):
    # x: (R, C) f32; w, b: (1, C) f32.  Statistics kept in f32 (torch parity).
    mu = jnp.mean(x, axis=-1, keepdims=True)
    var = jnp.mean(jnp.square(x - mu), axis=-1, keepdims=True)
    return (x - mu) * jax.lax.rsqrt(var + eps) * w + b


def _gelu_exact(x):
    # matches torch.nn.GELU(approximate='none')
    return 0.5 * x * (1.0 + jax.lax.erf(x * _INV_SQRT2))


def block_kernel(x_ref, ln1w_ref, ln1b_ref, wq_ref, wkT_ref, wvT_ref,
                 wproj_ref, bproj_ref, ln2w_ref, ln2b_ref,
                 w1_ref, b1_ref, w2_ref, b2_ref,
                 o_ref,
                 xn1_s, kT_s, vT_s,
                 *, num_heads, scale, tq):
    qi = pl.program_id(1)
    cdt = wq_ref.dtype                      # matmul-input dtype (bf16)
    N, C = x_ref.shape[1], x_ref.shape[2]
    hd = C // num_heads

    # ---- once per batch row (first query tile): LN1 of the full row + K/V ----
    # Scratch persists across the ("arbitrary") query-tile axis, so this runs
    # exactly once per batch element.  K^T / V^T are stored head-major
    # (nh, hd, N): lane-dense (N minor) and never relayouted again.
    @pl.when(qi == 0)
    def _():
        xf = x_ref[0].astype(jnp.float32)                       # (N, C)
        xn = _layernorm(xf, ln1w_ref[...], ln1b_ref[...]).astype(cdt)
        xn1_s[...] = xn
        xnT = jnp.transpose(xn)                                 # (C, N), once per row
        kT = jnp.dot(wkT_ref[...], xnT,
                     preferred_element_type=jnp.float32)        # K^T: (C, N)
        vT = jnp.dot(wvT_ref[...], xnT,
                     preferred_element_type=jnp.float32)        # V^T: (C, N)
        kc = kT.astype(cdt)
        vc = vT.astype(cdt)
        for h in range(num_heads):                              # static head split
            lo = h * hd
            kT_s[h] = kc[lo:lo + hd, :]
            vT_s[h] = vc[lo:lo + hd, :]

    row0 = pl.multiple_of(qi * tq, tq)
    xq = x_ref[0, pl.ds(row0, tq), :].astype(jnp.float32)       # (tq, C) residual

    # ---- attention for this query tile (all heads batched) ----
    q = jnp.dot(xn1_s[pl.ds(row0, tq), :], wq_ref[...],
                preferred_element_type=jnp.float32)             # (tq, C) f32
    q3 = (q * scale).astype(cdt).reshape(tq, num_heads, hd)     # scale folded into q

    s = jnp.einsum("qhd,hdk->hqk", q3, kT_s[...],
                   preferred_element_type=jnp.float32)          # (nh, tq, N) f32
    s = s - jnp.max(s, axis=-1, keepdims=True)
    p = jnp.exp(s)                                              # unnormalized
    denom = jnp.sum(p, axis=-1, keepdims=True)                  # (nh, tq, 1)

    ctx = jnp.einsum("hqk,hdk->hqd", p.astype(cdt), vT_s[...],
                     preferred_element_type=jnp.float32)        # (nh, tq, hd) f32
    # deferred softmax normalization (nh*tq*hd multiplies instead of nh*tq*N)
    ctx = ctx * pl.reciprocal(denom, approx=True)

    attn = jnp.swapaxes(ctx, 0, 1).reshape(tq, C)               # head concat (tq, C)
    attn = jnp.dot(attn.astype(cdt), wproj_ref[...],
                   preferred_element_type=jnp.float32) + bproj_ref[...]
    x1 = xq + attn                                              # residual 1 (f32)
    # dropout / attn_drop / drop_path are identity (rate 0.0 / eval mode)

    # ---- MLP ----
    xn2 = _layernorm(x1, ln2w_ref[...], ln2b_ref[...])
    h1 = jnp.dot(xn2.astype(cdt), w1_ref[...],
                 preferred_element_type=jnp.float32) + b1_ref[...]
    h1 = _gelu_exact(h1)                                        # exact erf (torch parity)
    h2 = jnp.dot(h1.astype(cdt), w2_ref[...],
                 preferred_element_type=jnp.float32) + b2_ref[...]

    o_ref[0] = (x1 + h2).astype(o_ref.dtype)                    # residual 2


def _vmem_capacity_bytes():
    try:
        return int(pltpu.get_tpu_info().vmem_capacity_bytes)
    except Exception:
        return 64 * 2 ** 20                                     # conservative default


def _pick_tq(n, num_heads, score_budget_bytes):
    # Query-tile: multiple of 8 (sublane) dividing N, capped at 256, chosen so
    # the (nh, tq, N) f32 score buffer stays within the per-generation budget.
    if n % 8 != 0:
        return n
    cands = [t for t in (256, 128, 64, 32, 16, 8) if n % t == 0]
    if not cands:
        return n
    for t in cands:
        if num_heads * t * n * 4 <= score_budget_bytes:
            return t
    return cands[-1]


def transformer_block(x, params, *, num_heads, compute_dtype=jnp.bfloat16):
    B, N, C = x.shape
    assert C % num_heads == 0, "dim must be divisible by num_heads"
    H = params["w_fc1"].shape[1]
    hd = C // num_heads
    scale = float(hd) ** -0.5

    cap = _vmem_capacity_bytes()
    score_budget = (4 if cap <= 64 * 2 ** 20 else 8) * 2 ** 20
    tq = _pick_tq(N, num_heads, score_budget)
    nq = N // tq

    cdt = compute_dtype
    f32 = jnp.float32
    w_qkv = params["w_qkv"]
    w_q = w_qkv[:, :C].astype(cdt)                       # (in, out)
    w_kT = jnp.transpose(w_qkv[:, C:2 * C]).astype(cdt)  # (out, in) -> K^T = WkT @ LN1(x)^T
    w_vT = jnp.transpose(w_qkv[:, 2 * C:]).astype(cdt)
    w_proj = params["w_proj"].astype(cdt)
    w_fc1 = params["w_fc1"].astype(cdt)
    w_fc2 = params["w_fc2"].astype(cdt)
    ln1_w = params["ln1_w"].astype(f32)
    ln1_b = params["ln1_b"].astype(f32)
    ln2_w = params["ln2_w"].astype(f32)
    ln2_b = params["ln2_b"].astype(f32)
    b_proj = params["b_proj"].astype(f32)
    b_fc1 = params["b_fc1"].astype(f32)
    b_fc2 = params["b_fc2"].astype(f32)

    kern = partial(block_kernel, num_heads=num_heads, scale=scale, tq=tq)
    const = lambda b, q: (0, 0)

    def make_call(single_buffer_weights):
        def wspec(shape):
            if single_buffer_weights:
                # grid-invariant: one resident copy is enough
                return pl.BlockSpec(shape, const, pipeline_mode=pl.Buffered(1))
            return pl.BlockSpec(shape, const)

        in_specs = [
            pl.BlockSpec((1, N, C), lambda b, q: (b, 0, 0)),   # x (full row)
            wspec((1, C)),                                     # ln1 weight
            wspec((1, C)),                                     # ln1 bias
            wspec((C, C)),                                     # w_q   (in, out)
            wspec((C, C)),                                     # w_k^T (out, in)
            wspec((C, C)),                                     # w_v^T (out, in)
            wspec((C, C)),                                     # w_proj
            wspec((1, C)),                                     # b_proj
            wspec((1, C)),                                     # ln2 weight
            wspec((1, C)),                                     # ln2 bias
            wspec((C, H)),                                     # w_fc1
            wspec((1, H)),                                     # b_fc1
            wspec((H, C)),                                     # w_fc2
            wspec((1, C)),                                     # b_fc2
        ]
        out_spec = pl.BlockSpec((1, tq, C), lambda b, q: (b, q, 0))

        # ---- VMEM audit ----
        wsz = jnp.dtype(cdt).itemsize
        xsz = jnp.dtype(x.dtype).itemsize
        wbuf = 1 if single_buffer_weights else 2
        w_bytes = (4 * C * C + 2 * C * H) * wsz
        act_bytes = (2 * N * C * xsz                    # x row (double-buffered)
                     + 3 * N * C * wsz                  # LN1(x) / K^T / V^T scratch
                     + 2 * tq * C * xsz                 # output tile
                     + num_heads * tq * N * (4 + wsz)   # scores f32 + p bf16
                     + tq * H * (4 + wsz)               # MLP hidden
                     + 6 * tq * C * 4                   # misc f32 tile temps
                     + 2 * N * C * 4 + N * C * wsz)     # qi==0 transients
        need = int(1.15 * (wbuf * w_bytes + act_bytes))
        headroom_cap = max(cap - 8 * 2 ** 20, 32 * 2 ** 20)
        vmem_limit = int(min(max(need, 32 * 2 ** 20), headroom_cap))

        flops = int(B * (8 * N * C * C + 4 * N * C * H + 4 * N * N * C))
        transc = int(B * (num_heads * N * N + N * H))
        bytes_accessed = int(2 * B * N * C * xsz + w_bytes)

        return pl.pallas_call(
            kern,
            out_shape=jax.ShapeDtypeStruct((B, N, C), x.dtype),
            grid_spec=pltpu.PrefetchScalarGridSpec(
                num_scalar_prefetch=0,
                grid=(B, nq),
                in_specs=in_specs,
                out_specs=out_spec,
                scratch_shapes=[
                    pltpu.VMEM((N, C), cdt),                 # LN1(x) for the row
                    pltpu.VMEM((num_heads, hd, N), cdt),     # K^T head-major
                    pltpu.VMEM((num_heads, hd, N), cdt),     # V^T head-major
                ],
            ),
            compiler_params=pltpu.CompilerParams(
                # K/V scratch is filled at qi == 0 and reused across the
                # query-tile axis, so that axis must stay "arbitrary";
                # the batch axis is megacore-parallel.
                dimension_semantics=("parallel", "arbitrary"),
                vmem_limit_bytes=vmem_limit,
            ),
            cost_estimate=pl.CostEstimate(
                flops=flops, transcendentals=transc,
                bytes_accessed=bytes_accessed),
        )

    args = (x, ln1_w, ln1_b, w_q, w_kT, w_vT, w_proj, b_proj,
            ln2_w, ln2_b, w_fc1, b_fc1, w_fc2, b_fc2)
    try:
        return make_call(True)(*args)
    except Exception:
        # Fallback if this JAX/Mosaic build rejects single-buffered inputs.
        return make_call(False)(*args)


def init_params(key, dim, num_heads, mlp_ratio=4.0, dtype=jnp.float32):
    hidden = int(dim * mlp_ratio)
    ks = jax.random.split(key, 5)
    s = 0.02
    return {
        # LayerNorm: PyTorch init (weight=1, bias=0)
        "ln1_w": jnp.ones((1, dim), dtype),
        "ln1_b": jnp.zeros((1, dim), dtype),
        "ln2_w": jnp.ones((1, dim), dtype),
        "ln2_b": jnp.zeros((1, dim), dtype),
        # Linear weights stored as (in, out) — transposed vs. torch (out, in)
        "w_qkv": (s * jax.random.normal(ks[0], (dim, 3 * dim))).astype(dtype),
        # qkv_bias=False (module default) -> no qkv bias
        "w_proj": (s * jax.random.normal(ks[1], (dim, dim))).astype(dtype),
        "b_proj": (s * jax.random.normal(ks[2], (1, dim))).astype(dtype),
        "w_fc1": (s * jax.random.normal(ks[3], (dim, hidden))).astype(dtype),
        "b_fc1": jnp.zeros((1, hidden), dtype),
        "w_fc2": (s * jax.random.normal(ks[4], (hidden, dim))).astype(dtype),
        "b_fc2": jnp.zeros((1, dim), dtype),
    }


def _reference_block(x, params, *, num_heads):
    # Pure-JAX f32 reference (mirrors the PyTorch Block forward).
    B, N, C = x.shape
    hd = C // num_heads
    scale = float(hd) ** -0.5

    def ln(y, w, b, eps=1e-5):
        mu = y.mean(-1, keepdims=True)
        var = ((y - mu) ** 2).mean(-1, keepdims=True)
        return (y - mu) / jnp.sqrt(var + eps) * w + b

    xn = ln(x, params["ln1_w"], params["ln1_b"])
    qkv = (xn @ params["w_qkv"]).reshape(B, N, 3, num_heads, hd)
    qkv = qkv.transpose(2, 0, 3, 1, 4)
    q, k, v = qkv[0], qkv[1], qkv[2]
    attn = jax.nn.softmax((q @ jnp.swapaxes(k, -2, -1)) * scale, axis=-1)
    o = (attn @ v).transpose(0, 2, 1, 3).reshape(B, N, C)
    o = o @ params["w_proj"] + params["b_proj"]
    x1 = x + o
    h = ln(x1, params["ln2_w"], params["ln2_b"]) @ params["w_fc1"] + params["b_fc1"]
    h = 0.5 * h * (1.0 + jax.lax.erf(h * _INV_SQRT2))
    h = h @ params["w_fc2"] + params["b_fc2"]
    return x1 + h


if __name__ == "__main__":
    key = jax.random.PRNGKey(0)
    k1, k2, k3, k4 = jax.random.split(key, 4)

    def run_case(B, N, C, num_heads, kx, kp):
        x = jax.random.normal(kx, (B, N, C), dtype=jnp.float32)
        params = init_params(kp, C, num_heads)
        out = transformer_block(x, params, num_heads=num_heads)
        jax.block_until_ready(out)
        assert out.shape == (B, N, C)
        ref = _reference_block(x, params, num_heads=num_heads)
        max_err = float(jnp.max(jnp.abs(out - ref)))
        assert max_err < 5e-2, f"max abs error {max_err} too large for {(B, N, C)}"

    run_case(2, 8, 32, 4, k1, k2)      # suggested small shape (single query tile)
    run_case(1, 512, 32, 4, k3, k4)    # exercises nq > 1 (tq=256) and batch=1

    print("KERNEL_OK")
</pallas_src>

<mosaic_0001>
module attributes {stable_mosaic.version = 11 : i64} {
  func.func @block_kernel(%arg0: i32, %arg1: i32, %arg2: memref<1x8x32xf32, #tpu.memory_space<vmem>>, %arg3: memref<1x32xf32, #tpu.memory_space<vmem>>, %arg4: memref<1x32xf32, #tpu.memory_space<vmem>>, %arg5: memref<32x32xbf16, #tpu.memory_space<vmem>>, %arg6: memref<32x32xbf16, #tpu.memory_space<vmem>>, %arg7: memref<32x32xbf16, #tpu.memory_space<vmem>>, %arg8: memref<32x32xbf16, #tpu.memory_space<vmem>>, %arg9: memref<1x32xf32, #tpu.memory_space<vmem>>, %arg10: memref<1x32xf32, #tpu.memory_space<vmem>>, %arg11: memref<1x32xf32, #tpu.memory_space<vmem>>, %arg12: memref<32x128xbf16, #tpu.memory_space<vmem>>, %arg13: memref<1x128xf32, #tpu.memory_space<vmem>>, %arg14: memref<128x32xbf16, #tpu.memory_space<vmem>>, %arg15: memref<1x32xf32, #tpu.memory_space<vmem>>, %arg16: memref<1x8x32xf32, #tpu.memory_space<vmem>>, %arg17: memref<8x32xbf16, #tpu.memory_space<vmem>>, %arg18: memref<4x8x8xbf16, #tpu.memory_space<vmem>>, %arg19: memref<4x8x8xbf16, #tpu.memory_space<vmem>>) attributes {dimension_semantics = [#tpu.dimension_semantics<parallel>, #tpu.dimension_semantics<arbitrary>], iteration_bounds = array<i64: 2, 1>, scalar_prefetch = 0 : i64, scratch_operands = 3 : i64, tpu.core_type = #tpu.core_type<tc>, window_params = [{transform_indices = @transform_0, window_bounds = array<i64: 1, 8, 32>}, {pipeline_mode = #tpu.pipeline_mode<synchronous>, transform_indices = @transform_1, window_bounds = array<i64: 1, 32>}, {pipeline_mode = #tpu.pipeline_mode<synchronous>, transform_indices = @transform_2, window_bounds = array<i64: 1, 32>}, {pipeline_mode = #tpu.pipeline_mode<synchronous>, transform_indices = @transform_3, window_bounds = array<i64: 32, 32>}, {pipeline_mode = #tpu.pipeline_mode<synchronous>, transform_indices = @transform_4, window_bounds = array<i64: 32, 32>}, {pipeline_mode = #tpu.pipeline_mode<synchronous>, transform_indices = @transform_5, window_bounds = array<i64: 32, 32>}, {pipeline_mode = #tpu.pipeline_mode<synchronous>, transform_indices = @transform_6, window_bounds = array<i64: 32, 32>}, {pipeline_mode = #tpu.pipeline_mode<synchronous>, transform_indices = @transform_7, window_bounds = array<i64: 1, 32>}, {pipeline_mode = #tpu.pipeline_mode<synchronous>, transform_indices = @transform_8, window_bounds = array<i64: 1, 32>}, {pipeline_mode = #tpu.pipeline_mode<synchronous>, transform_indices = @transform_9, window_bounds = array<i64: 1, 32>}, {pipeline_mode = #tpu.pipeline_mode<synchronous>, transform_indices = @transform_10, window_bounds = array<i64: 32, 128>}, {pipeline_mode = #tpu.pipeline_mode<synchronous>, transform_indices = @transform_11, window_bounds = array<i64: 1, 128>}, {pipeline_mode = #tpu.pipeline_mode<synchronous>, transform_indices = @transform_12, window_bounds = array<i64: 128, 32>}, {pipeline_mode = #tpu.pipeline_mode<synchronous>, transform_indices = @transform_13, window_bounds = array<i64: 1, 32>}, {transform_indices = @transform_14, window_bounds = array<i64: 1, 8, 32>}]} {
    %c0_i32 = arith.constant 0 : i32
    %0 = arith.cmpi eq, %arg1, %c0_i32 : i32
    %1 = arith.extui %0 : i1 to i32
    %c0_i32_0 = arith.constant 0 : i32
    %2 = arith.cmpi ne, %1, %c0_i32_0 : i32
    scf.if %2 {
      %c0_46 = arith.constant 0 : index
      %c0_47 = arith.constant 0 : index
      %c0_48 = arith.constant 0 : index
      %88 = vector.load %arg2[%c0_46, %c0_47, %c0_48] : memref<1x8x32xf32, #tpu.memory_space<vmem>>, vector<1x8x32xf32>
      %89 = vector.shape_cast %88 : vector<1x8x32xf32> to vector<8x32xf32>
      %c0_49 = arith.constant 0 : index
      %c0_50 = arith.constant 0 : index
      %90 = vector.load %arg3[%c0_49, %c0_50] : memref<1x32xf32, #tpu.memory_space<vmem>>, vector<1x32xf32>
      %c0_51 = arith.constant 0 : index
      %c0_52 = arith.constant 0 : index
      %91 = vector.load %arg4[%c0_51, %c0_52] : memref<1x32xf32, #tpu.memory_space<vmem>>, vector<1x32xf32>
      %cst_53 = arith.constant dense<0.000000e+00> : vector<8xf32>
      %92 = vector.multi_reduction <add>, %89, %cst_53 [1] : vector<8x32xf32> to vector<8xf32>
      %93 = vector.shape_cast %92 : vector<8xf32> to vector<8x1xf32>
      %cst_54 = arith.constant 3.200000e+01 : f32
      %94 = vector.broadcast %cst_54 : f32 to vector<8x1xf32>
      %95 = arith.divf %93, %94 : vector<8x1xf32>
      %96 = vector.broadcast %95 : vector<8x1xf32> to vector<8x32xf32>
      %97 = arith.subf %89, %96 : vector<8x32xf32>
      %98 = arith.mulf %97, %97 : vector<8x32xf32>
      %cst_55 = arith.constant dense<0.000000e+00> : vector<8xf32>
      %99 = vector.multi_reduction <add>, %98, %cst_55 [1] : vector<8x32xf32> to vector<8xf32>
      %100 = vector.shape_cast %99 : vector<8xf32> to vector<8x1xf32>
      %cst_56 = arith.constant 3.200000e+01 : f32
      %101 = vector.broadcast %cst_56 : f32 to vector<8x1xf32>
      %102 = arith.divf %100, %101 : vector<8x1xf32>
      %103 = vector.broadcast %95 : vector<8x1xf32> to vector<8x32xf32>
      %104 = arith.subf %89, %103 : vector<8x32xf32>
      %cst_57 = arith.constant 9.99999974E-6 : f32
      %105 = vector.broadcast %cst_57 : f32 to vector<8x1xf32>
      %106 = arith.addf %102, %105 : vector<8x1xf32>
      %107 = math.rsqrt %106 : vector<8x1xf32>
      %108 = vector.broadcast %107 : vector<8x1xf32> to vector<8x32xf32>
      %109 = arith.mulf %104, %108 : vector<8x32xf32>
      %110 = vector.broadcast %90 : vector<1x32xf32> to vector<8x32xf32>
      %111 = arith.mulf %109, %110 : vector<8x32xf32>
      %112 = vector.broadcast %91 : vector<1x32xf32> to vector<8x32xf32>
      %113 = arith.addf %111, %112 : vector<8x32xf32>
      %114 = arith.truncf %113 : vector<8x32xf32> to vector<8x32xbf16>
      %c0_58 = arith.constant 0 : index
      %c0_59 = arith.constant 0 : index
      %115 = vector.load %arg17[%c0_58, %c0_59] : memref<8x32xbf16, #tpu.memory_space<vmem>>, vector<8x32xbf16>
      tpu.vector_store %arg17[%c0_58, %c0_59], %114 {strides = array<i32>} : memref<8x32xbf16, #tpu.memory_space<vmem>>, vector<8x32xbf16>,
      %116 = tpu.transpose %114, [1, 0] : vector<8x32xbf16> -> vector<32x8xbf16>
      %c0_60 = arith.constant 0 : index
      %c0_61 = arith.constant 0 : index
      %117 = vector.load %arg6[%c0_60, %c0_61] : memref<32x32xbf16, #tpu.memory_space<vmem>>, vector<32x32xbf16>
      %cst_62 = arith.constant dense<0.000000e+00> : vector<32x8xf32>
      %118 = tpu.matmul %117, %116, %cst_62 {dimension_numbers = #tpu.dot_dimension_numbers<[1], [0], [0], [1], [0, 0, 1, 1], [], []>} : vector<32x32xbf16>, vector<32x8xbf16>, vector<32x8xf32> -> vector<32x8xf32>
      %c0_63 = arith.constant 0 : index
      %c0_64 = arith.constant 0 : index
      %119 = vector.load %arg7[%c0_63, %c0_64] : memref<32x32xbf16, #tpu.memory_space<vmem>>, vector<32x32xbf16>
      %cst_65 = arith.constant dense<0.000000e+00> : vector<32x8xf32>
      %120 = tpu.matmul %119, %116, %cst_65 {dimension_numbers = #tpu.dot_dimension_numbers<[1], [0], [0], [1], [0, 0, 1, 1], [], []>} : vector<32x32xbf16>, vector<32x8xbf16>, vector<32x8xf32> -> vector<32x8xf32>
      %121 = arith.truncf %118 : vector<32x8xf32> to vector<32x8xbf16>
      %122 = arith.truncf %120 : vector<32x8xf32> to vector<32x8xbf16>
      %123 = vector.extract_strided_slice %121 {offsets = [0, 0], sizes = [8, 8], strides = [1, 1]} : vector<32x8xbf16> to vector<8x8xbf16>
      %c0_66 = arith.constant 0 : index
      %c0_67 = arith.constant 0 : index
      %c0_68 = arith.constant 0 : index
      %124 = vector.load %arg18[%c0_66, %c0_67, %c0_68] : memref<4x8x8xbf16, #tpu.memory_space<vmem>>, vector<1x8x8xbf16>
      %125 = vector.shape_cast %124 : vector<1x8x8xbf16> to vector<8x8xbf16>
      %126 = vector.shape_cast %123 : vector<8x8xbf16> to vector<1x8x8xbf16>
      tpu.vector_store %arg18[%c0_66, %c0_67, %c0_68], %126 {strides = array<i32>} : memref<4x8x8xbf16, #tpu.memory_space<vmem>>, vector<1x8x8xbf16>,
      %127 = vector.extract_strided_slice %122 {offsets = [0, 0], sizes = [8, 8], strides = [1, 1]} : vector<32x8xbf16> to vector<8x8xbf16>
      %c0_69 = arith.constant 0 : index
      %c0_70 = arith.constant 0 : index
      %c0_71 = arith.constant 0 : index
      %128 = vector.load %arg19[%c0_69, %c0_70, %c0_71] : memref<4x8x8xbf16, #tpu.memory_space<vmem>>, vector<1x8x8xbf16>
      %129 = vector.shape_cast %128 : vector<1x8x8xbf16> to vector<8x8xbf16>
      %130 = vector.shape_cast %127 : vector<8x8xbf16> to vector<1x8x8xbf16>
      tpu.vector_store %arg19[%c0_69, %c0_70, %c0_71], %130 {strides = array<i32>} : memref<4x8x8xbf16, #tpu.memory_space<vmem>>, vector<1x8x8xbf16>,
      %131 = vector.extract_strided_slice %121 {offsets = [8, 0], sizes = [8, 8], strides = [1, 1]} : vector<32x8xbf16> to vector<8x8xbf16>
      %c1 = arith.constant 1 : index
      %c0_72 = arith.constant 0 : index
      %c0_73 = arith.constant 0 : index
      %132 = vector.load %arg18[%c1, %c0_72, %c0_73] : memref<4x8x8xbf16, #tpu.memory_space<vmem>>, vector<1x8x8xbf16>
      %133 = vector.shape_cast %132 : vector<1x8x8xbf16> to vector<8x8xbf16>
      %134 = vector.shape_cast %131 : vector<8x8xbf16> to vector<1x8x8xbf16>
      tpu.vector_store %arg18[%c1, %c0_72, %c0_73], %134 {strides = array<i32>} : memref<4x8x8xbf16, #tpu.memory_space<vmem>>, vector<1x8x8xbf16>,
      %135 = vector.extract_strided_slice %122 {offsets = [8, 0], sizes = [8, 8], strides = [1, 1]} : vector<32x8xbf16> to vector<8x8xbf16>
      %c1_74 = arith.constant 1 : index
      %c0_75 = arith.constant 0 : index
      %c0_76 = arith.constant 0 : index
      %136 = vector.load %arg19[%c1_74, %c0_75, %c0_76] : memref<4x8x8xbf16, #tpu.memory_space<vmem>>, vector<1x8x8xbf16>
      %137 = vector.shape_cast %136 : vector<1x8x8xbf16> to vector<8x8xbf16>
      %138 = vector.shape_cast %135 : vector<8x8xbf16> to vector<1x8x8xbf16>
      tpu.vector_store %arg19[%c1_74, %c0_75, %c0_76], %138 {strides = array<i32>} : memref<4x8x8xbf16, #tpu.memory_space<vmem>>, vector<1x8x8xbf16>,
      %139 = vector.extract_strided_slice %121 {offsets = [16, 0], sizes = [8, 8], strides = [1, 1]} : vector<32x8xbf16> to vector<8x8xbf16>
      %c2 = arith.constant 2 : index
      %c0_77 = arith.constant 0 : index
      %c0_78 = arith.constant 0 : index
      %140 = vector.load %arg18[%c2, %c0_77, %c0_78] : memref<4x8x8xbf16, #tpu.memory_space<vmem>>, vector<1x8x8xbf16>
      %141 = vector.shape_cast %140 : vector<1x8x8xbf16> to vector<8x8xbf16>
      %142 = vector.shape_cast %139 : vector<8x8xbf16> to vector<1x8x8xbf16>
      tpu.vector_store %arg18[%c2, %c0_77, %c0_78], %142 {strides = array<i32>} : memref<4x8x8xbf16, #tpu.memory_space<vmem>>, vector<1x8x8xbf16>,
      %143 = vector.extract_strided_slice %122 {offsets = [16, 0], sizes = [8, 8], strides = [1, 1]} : vector<32x8xbf16> to vector<8x8xbf16>
      %c2_79 = arith.constant 2 : index
      %c0_80 = arith.constant 0 : index
      %c0_81 = arith.constant 0 : index
      %144 = vector.load %arg19[%c2_79, %c0_80, %c0_81] : memref<4x8x8xbf16, #tpu.memory_space<vmem>>, vector<1x8x8xbf16>
      %145 = vector.shape_cast %144 : vector<1x8x8xbf16> to vector<8x8xbf16>
      %146 = vector.shape_cast %143 : vector<8x8xbf16> to vector<1x8x8xbf16>
      tpu.vector_store %arg19[%c2_79, %c0_80, %c0_81], %146 {strides = array<i32>} : memref<4x8x8xbf16, #tpu.memory_space<vmem>>, vector<1x8x8xbf16>,
      %147 = vector.extract_strided_slice %121 {offsets = [24, 0], sizes = [8, 8], strides = [1, 1]} : vector<32x8xbf16> to vector<8x8xbf16>
      %c3 = arith.constant 3 : index
      %c0_82 = arith.constant 0 : index
      %c0_83 = arith.constant 0 : index
      %148 = vector.load %arg18[%c3, %c0_82, %c0_83] : memref<4x8x8xbf16, #tpu.memory_space<vmem>>, vector<1x8x8xbf16>
      %149 = vector.shape_cast %148 : vector<1x8x8xbf16> to vector<8x8xbf16>
      %150 = vector.shape_cast %147 : vector<8x8xbf16> to vector<1x8x8xbf16>
      tpu.vector_store %arg18[%c3, %c0_82, %c0_83], %150 {strides = array<i32>} : memref<4x8x8xbf16, #tpu.memory_space<vmem>>, vector<1x8x8xbf16>,
      %151 = vector.extract_strided_slice %122 {offsets = [24, 0], sizes = [8, 8], strides = [1, 1]} : vector<32x8xbf16> to vector<8x8xbf16>
      %c3_84 = arith.constant 3 : index
      %c0_85 = arith.constant 0 : index
      %c0_86 = arith.constant 0 : index
      %152 = vector.load %arg19[%c3_84, %c0_85, %c0_86] : memref<4x8x8xbf16, #tpu.memory_space<vmem>>, vector<1x8x8xbf16>
      %153 = vector.shape_cast %152 : vector<1x8x8xbf16> to vector<8x8xbf16>
      %154 = vector.shape_cast %151 : vector<8x8xbf16> to vector<1x8x8xbf16>
      tpu.vector_store %arg19[%c3_84, %c0_85, %c0_86], %154 {strides = array<i32>} : memref<4x8x8xbf16, #tpu.memory_space<vmem>>, vector<1x8x8xbf16>,
    } else {
    }
    %c8_i32 = arith.constant 8 : i32
    %3 = arith.muli %arg1, %c8_i32 : i32
    %4 = tpu.assume_multiple %3, 8 : i32
    %c0 = arith.constant 0 : index
    %5 = arith.index_cast %4 : i32 to index
    %c0_1 = arith.constant 0 : index
    %6 = vector.load %arg2[%c0, %5, %c0_1] : memref<1x8x32xf32, #tpu.memory_space<vmem>>, vector<1x8x32xf32>
    %7 = vector.shape_cast %6 : vector<1x8x32xf32> to vector<8x32xf32>
    %8 = arith.index_cast %4 : i32 to index
    %c0_2 = arith.constant 0 : index
    %9 = vector.load %arg17[%8, %c0_2] : memref<8x32xbf16, #tpu.memory_space<vmem>>, vector<8x32xbf16>
    %c0_3 = arith.constant 0 : index
    %c0_4 = arith.constant 0 : index
    %10 = vector.load %arg5[%c0_3, %c0_4] : memref<32x32xbf16, #tpu.memory_space<vmem>>, vector<32x32xbf16>
    %cst = arith.constant dense<0.000000e+00> : vector<8x32xf32>
    %11 = tpu.matmul %9, %10, %cst {dimension_numbers = #tpu.dot_dimension_numbers<[1], [0], [0], [1], [0, 0, 1, 1], [], []>} : vector<8x32xbf16>, vector<32x32xbf16>, vector<8x32xf32> -> vector<8x32xf32>
    %cst_5 = arith.constant 0.353553385 : f32
    %12 = vector.broadcast %cst_5 : f32 to vector<8x32xf32>
    %13 = arith.mulf %11, %12 : vector<8x32xf32>
    %14 = arith.truncf %13 : vector<8x32xf32> to vector<8x32xbf16>
    %15 = vector.shape_cast %14 : vector<8x32xbf16> to vector<8x4x8xbf16>
    %c0_6 = arith.constant 0 : index
    %c0_7 = arith.constant 0 : index
    %c0_8 = arith.constant 0 : index
    %16 = vector.load %arg18[%c0_6, %c0_7, %c0_8] : memref<4x8x8xbf16, #tpu.memory_space<vmem>>, vector<4x8x8xbf16>
    "tpu.trace_start"() <{level = 10 : i32, message = "qhd,hdk->hqk"}> : () -> ()
    %cst_9 = arith.constant dense<0.000000e+00> : vector<4x8x8xf32>
    %17 = tpu.matmul %15, %16, %cst_9 {dimension_numbers = #tpu.dot_dimension_numbers<[2], [1], [0], [2], [0, 1, 0, 0, 1, 2], [1], [0]>} : vector<8x4x8xbf16>, vector<4x8x8xbf16>, vector<4x8x8xf32> -> vector<4x8x8xf32>
    "tpu.trace_stop"() : () -> ()
    %cst_10 = arith.constant dense<0xFF800000> : vector<4x8xf32>
    %18 = vector.multi_reduction <maximumf>, %17, %cst_10 [2] : vector<4x8x8xf32> to vector<4x8xf32>
    %19 = vector.shape_cast %18 : vector<4x8xf32> to vector<4x8x1xf32>
    %20 = vector.broadcast %19 : vector<4x8x1xf32> to vector<4x8x8xf32>
    %21 = arith.subf %17, %20 : vector<4x8x8xf32>
    %22 = math.exp %21 : vector<4x8x8xf32>
    %cst_11 = arith.constant dense<0.000000e+00> : vector<4x8xf32>
    %23 = vector.multi_reduction <add>, %22, %cst_11 [2] : vector<4x8x8xf32> to vector<4x8xf32>
    %24 = vector.shape_cast %23 : vector<4x8xf32> to vector<4x8x1xf32>
    %25 = arith.truncf %22 : vector<4x8x8xf32> to vector<4x8x8xbf16>
    %c0_12 = arith.constant 0 : index
    %c0_13 = arith.constant 0 : index
    %c0_14 = arith.constant 0 : index
    %26 = vector.load %arg19[%c0_12, %c0_13, %c0_14] : memref<4x8x8xbf16, #tpu.memory_space<vmem>>, vector<4x8x8xbf16>
    "tpu.trace_start"() <{level = 10 : i32, message = "hqk,hdk->hqd"}> : () -> ()
    %cst_15 = arith.constant dense<0.000000e+00> : vector<4x8x8xf32>
    %27 = tpu.matmul %25, %26, %cst_15 {dimension_numbers = #tpu.dot_dimension_numbers<[2], [2], [1], [1], [0, 0, 0, 1, 1, 1], [0], [0]>} : vector<4x8x8xbf16>, vector<4x8x8xbf16>, vector<4x8x8xf32> -> vector<4x8x8xf32>
    "tpu.trace_stop"() : () -> ()
    %28 = tpu.reciprocal %24 {approx = true} : vector<4x8x1xf32> -> vector<4x8x1xf32>
    %29 = vector.broadcast %28 : vector<4x8x1xf32> to vector<4x8x8xf32>
    %30 = arith.mulf %27, %29 : vector<4x8x8xf32>
    %31 = tpu.transpose %30, [1, 0, 2] : vector<4x8x8xf32> -> vector<8x4x8xf32>
    %32 = vector.shape_cast %31 : vector<8x4x8xf32> to vector<8x32xf32>
    %33 = arith.truncf %32 : vector<8x32xf32> to vector<8x32xbf16>
    %c0_16 = arith.constant 0 : index
    %c0_17 = arith.constant 0 : index
    %34 = vector.load %arg8[%c0_16, %c0_17] : memref<32x32xbf16, #tpu.memory_space<vmem>>, vector<32x32xbf16>
    %cst_18 = arith.constant dense<0.000000e+00> : vector<8x32xf32>
    %35 = tpu.matmul %33, %34, %cst_18 {dimension_numbers = #tpu.dot_dimension_numbers<[1], [0], [0], [1], [0, 0, 1, 1], [], []>} : vector<8x32xbf16>, vector<32x32xbf16>, vector<8x32xf32> -> vector<8x32xf32>
    %c0_19 = arith.constant 0 : index
    %c0_20 = arith.constant 0 : index
    %36 = vector.load %arg9[%c0_19, %c0_20] : memref<1x32xf32, #tpu.memory_space<vmem>>, vector<1x32xf32>
    %37 = vector.broadcast %36 : vector<1x32xf32> to vector<8x32xf32>
    %38 = arith.addf %35, %37 : vector<8x32xf32>
    %39 = arith.addf %7, %38 : vector<8x32xf32>
    %c0_21 = arith.constant 0 : index
    %c0_22 = arith.constant 0 : index
    %40 = vector.load %arg10[%c0_21, %c0_22] : memref<1x32xf32, #tpu.memory_space<vmem>>, vector<1x32xf32>
    %c0_23 = arith.constant 0 : index
    %c0_24 = arith.constant 0 : index
    %41 = vector.load %arg11[%c0_23, %c0_24] : memref<1x32xf32, #tpu.memory_space<vmem>>, vector<1x32xf32>
    %cst_25 = arith.constant dense<0.000000e+00> : vector<8xf32>
    %42 = vector.multi_reduction <add>, %39, %cst_25 [1] : vector<8x32xf32> to vector<8xf32>
    %43 = vector.shape_cast %42 : vector<8xf32> to vector<8x1xf32>
    %cst_26 = arith.constant 3.200000e+01 : f32
    %44 = vector.broadcast %cst_26 : f32 to vector<8x1xf32>
    %45 = arith.divf %43, %44 : vector<8x1xf32>
    %46 = vector.broadcast %45 : vector<8x1xf32> to vector<8x32xf32>
    %47 = arith.subf %39, %46 : vector<8x32xf32>
    %48 = arith.mulf %47, %47 : vector<8x32xf32>
    %cst_27 = arith.constant dense<0.000000e+00> : vector<8xf32>
    %49 = vector.multi_reduction <add>, %48, %cst_27 [1] : vector<8x32xf32> to vector<8xf32>
    %50 = vector.shape_cast %49 : vector<8xf32> to vector<8x1xf32>
    %cst_28 = arith.constant 3.200000e+01 : f32
    %51 = vector.broadcast %cst_28 : f32 to vector<8x1xf32>
    %52 = arith.divf %50, %51 : vector<8x1xf32>
    %53 = vector.broadcast %45 : vector<8x1xf32> to vector<8x32xf32>
    %54 = arith.subf %39, %53 : vector<8x32xf32>
    %cst_29 = arith.constant 9.99999974E-6 : f32
    %55 = vector.broadcast %cst_29 : f32 to vector<8x1xf32>
    %56 = arith.addf %52, %55 : vector<8x1xf32>
    %57 = math.rsqrt %56 : vector<8x1xf32>
    %58 = vector.broadcast %57 : vector<8x1xf32> to vector<8x32xf32>
    %59 = arith.mulf %54, %58 : vector<8x32xf32>
    %60 = vector.broadcast %40 : vector<1x32xf32> to vector<8x32xf32>
    %61 = arith.mulf %59, %60 : vector<8x32xf32>
    %62 = vector.broadcast %41 : vector<1x32xf32> to vector<8x32xf32>
    %63 = arith.addf %61, %62 : vector<8x32xf32>
    %64 = arith.truncf %63 : vector<8x32xf32> to vector<8x32xbf16>
    %c0_30 = arith.constant 0 : index
    %c0_31 = arith.constant 0 : index
    %65 = vector.load %arg12[%c0_30, %c0_31] : memref<32x128xbf16, #tpu.memory_space<vmem>>, vector<32x128xbf16>
    %cst_32 = arith.constant dense<0.000000e+00> : vector<8x128xf32>
    %66 = tpu.matmul %64, %65, %cst_32 {dimension_numbers = #tpu.dot_dimension_numbers<[1], [0], [0], [1], [0, 0, 1, 1], [], []>} : vector<8x32xbf16>, vector<32x128xbf16>, vector<8x128xf32> -> vector<8x128xf32>
    %c0_33 = arith.constant 0 : index
    %c0_34 = arith.constant 0 : index
    %67 = vector.load %arg13[%c0_33, %c0_34] : memref<1x128xf32, #tpu.memory_space<vmem>>, vector<1x128xf32>
    %68 = vector.broadcast %67 : vector<1x128xf32> to vector<8x128xf32>
    %69 = arith.addf %66, %68 : vector<8x128xf32>
    %cst_35 = arith.constant 5.000000e-01 : f32
    %70 = vector.broadcast %cst_35 : f32 to vector<8x128xf32>
    %71 = arith.mulf %70, %69 : vector<8x128xf32>
    %cst_36 = arith.constant 0.707106769 : f32
    %72 = vector.broadcast %cst_36 : f32 to vector<8x128xf32>
    %73 = arith.mulf %69, %72 : vector<8x128xf32>
    %74 = math.erf %73 : vector<8x128xf32>
    %cst_37 = arith.constant 1.000000e+00 : f32
    %75 = vector.broadcast %cst_37 : f32 to vector<8x128xf32>
    %76 = arith.addf %75, %74 : vector<8x128xf32>
    %77 = arith.mulf %71, %76 : vector<8x128xf32>
    %78 = arith.truncf %77 : vector<8x128xf32> to vector<8x128xbf16>
    %c0_38 = arith.constant 0 : index
    %c0_39 = arith.constant 0 : index
    %79 = vector.load %arg14[%c0_38, %c0_39] : memref<128x32xbf16, #tpu.memory_space<vmem>>, vector<128x32xbf16>
    %cst_40 = arith.constant dense<0.000000e+00> : vector<8x32xf32>
    %80 = tpu.matmul %78, %79, %cst_40 {dimension_numbers = #tpu.dot_dimension_numbers<[1], [0], [0], [1], [0, 0, 1, 1], [], []>} : vector<8x128xbf16>, vector<128x32xbf16>, vector<8x32xf32> -> vector<8x32xf32>
    %c0_41 = arith.constant 0 : index
    %c0_42 = arith.constant 0 : index
    %81 = vector.load %arg15[%c0_41, %c0_42] : memref<1x32xf32, #tpu.memory_space<vmem>>, vector<1x32xf32>
    %82 = vector.broadcast %81 : vector<1x32xf32> to vector<8x32xf32>
    %83 = arith.addf %80, %82 : vector<8x32xf32>
    %84 = arith.addf %39, %83 : vector<8x32xf32>
    %c0_43 = arith.constant 0 : index
    %c0_44 = arith.constant 0 : index
    %c0_45 = arith.constant 0 : index
    %85 = vector.load %arg16[%c0_43, %c0_44, %c0_45] : memref<1x8x32xf32, #tpu.memory_space<vmem>>, vector<1x8x32xf32>
    %86 = vector.shape_cast %85 : vector<1x8x32xf32> to vector<8x32xf32>
    %87 = vector.shape_cast %84 : vector<8x32xf32> to vector<1x8x32xf32>
    tpu.vector_store %arg16[%c0_43, %c0_44, %c0_45], %87 {strides = array<i32>} : memref<1x8x32xf32, #tpu.memory_space<vmem>>, vector<1x8x32xf32>,
    return
  }
  func.func @transform_0(%arg0: i32, %arg1: i32) -> (i32, i32, i32) {
    %c0_i32 = arith.constant 0 : i32
    %c0_i32_0 = arith.constant 0 : i32
    %c0_i32_1 = arith.constant 0 : i32
    return %arg0, %c0_i32, %c0_i32_0 : i32, i32, i32
  }
  func.func @transform_1(%arg0: i32, %arg1: i32) -> (i32, i32) {
    %c0_i32 = arith.constant 0 : i32
    %c0_i32_0 = arith.constant 0 : i32
    %c0_i32_1 = arith.constant 0 : i32
    return %c0_i32, %c0_i32_0 : i32, i32
  }
  func.func @transform_2(%arg0: i32, %arg1: i32) -> (i32, i32) {
    %c0_i32 = arith.constant 0 : i32
    %c0_i32_0 = arith.constant 0 : i32
    %c0_i32_1 = arith.constant 0 : i32
    return %c0_i32, %c0_i32_0 : i32, i32
  }
  func.func @transform_3(%arg0: i32, %arg1: i32) -> (i32, i32) {
    %c0_i32 = arith.constant 0 : i32
    %c0_i32_0 = arith.constant 0 : i32
    %c0_i32_1 = arith.constant 0 : i32
    return %c0_i32, %c0_i32_0 : i32, i32
  }
  func.func @transform_4(%arg0: i32, %arg1: i32) -> (i32, i32) {
    %c0_i32 = arith.constant 0 : i32
    %c0_i32_0 = arith.constant 0 : i32
    %c0_i32_1 = arith.constant 0 : i32
    return %c0_i32, %c0_i32_0 : i32, i32
  }
  func.func @transform_5(%arg0: i32, %arg1: i32) -> (i32, i32) {
    %c0_i32 = arith.constant 0 : i32
    %c0_i32_0 = arith.constant 0 : i32
    %c0_i32_1 = arith.constant 0 : i32
    return %c0_i32, %c0_i32_0 : i32, i32
  }
  func.func @transform_6(%arg0: i32, %arg1: i32) -> (i32, i32) {
    %c0_i32 = arith.constant 0 : i32
    %c0_i32_0 = arith.constant 0 : i32
    %c0_i32_1 = arith.constant 0 : i32
    return %c0_i32, %c0_i32_0 : i32, i32
  }
  func.func @transform_7(%arg0: i32, %arg1: i32) -> (i32, i32) {
    %c0_i32 = arith.constant 0 : i32
    %c0_i32_0 = arith.constant 0 : i32
    %c0_i32_1 = arith.constant 0 : i32
    return %c0_i32, %c0_i32_0 : i32, i32
  }
  func.func @transform_8(%arg0: i32, %arg1: i32) -> (i32, i32) {
    %c0_i32 = arith.constant 0 : i32
    %c0_i32_0 = arith.constant 0 : i32
    %c0_i32_1 = arith.constant 0 : i32
    return %c0_i32, %c0_i32_0 : i32, i32
  }
  func.func @transform_9(%arg0: i32, %arg1: i32) -> (i32, i32) {
    %c0_i32 = arith.constant 0 : i32
    %c0_i32_0 = arith.constant 0 : i32
    %c0_i32_1 = arith.constant 0 : i32
    return %c0_i32, %c0_i32_0 : i32, i32
  }
  func.func @transform_10(%arg0: i32, %arg1: i32) -> (i32, i32) {
    %c0_i32 = arith.constant 0 : i32
    %c0_i32_0 = arith.constant 0 : i32
    %c0_i32_1 = arith.constant 0 : i32
    return %c0_i32, %c0_i32_0 : i32, i32
  }
  func.func @transform_11(%arg0: i32, %arg1: i32) -> (i32, i32) {
    %c0_i32 = arith.constant 0 : i32
    %c0_i32_0 = arith.constant 0 : i32
    %c0_i32_1 = arith.constant 0 : i32
    return %c0_i32, %c0_i32_0 : i32, i32
  }
  func.func @transform_12(%arg0: i32, %arg1: i32) -> (i32, i32) {
    %c0_i32 = arith.constant 0 : i32
    %c0_i32_0 = arith.constant 0 : i32
    %c0_i32_1 = arith.constant 0 : i32
    return %c0_i32, %c0_i32_0 : i32, i32
  }
  func.func @transform_13(%arg0: i32, %arg1: i32) -> (i32, i32) {
    %c0_i32 = arith.constant 0 : i32
    %c0_i32_0 = arith.constant 0 : i32
    %c0_i32_1 = arith.constant 0 : i32
    return %c0_i32, %c0_i32_0 : i32, i32
  }
  func.func @transform_14(%arg0: i32, %arg1: i32) -> (i32, i32, i32) {
    %c0_i32 = arith.constant 0 : i32
    %c0_i32_0 = arith.constant 0 : i32
    return %arg0, %arg1, %c0_i32 : i32, i32, i32
  }
}

module attributes {stable_mosaic.version = 11 : i64} {
  func.func @block_kernel(%arg0: i32, %arg1: i32, %arg2: memref<1x8x32xf32, #tpu.memory_space<vmem>>, %arg3: memref<1x32xf32, #tpu.memory_space<vmem>>, %arg4: memref<1x32xf32, #tpu.memory_space<vmem>>, %arg5: memref<32x32xbf16, #tpu.memory_space<vmem>>, %arg6: memref<32x32xbf16, #tpu.memory_space<vmem>>, %arg7: memref<32x32xbf16, #tpu.memory_space<vmem>>, %arg8: memref<32x32xbf16, #tpu.memory_space<vmem>>, %arg9: memref<1x32xf32, #tpu.memory_space<vmem>>, %arg10: memref<1x32xf32, #tpu.memory_space<vmem>>, %arg11: memref<1x32xf32, #tpu.memory_space<vmem>>, %arg12: memref<32x128xbf16, #tpu.memory_space<vmem>>, %arg13: memref<1x128xf32, #tpu.memory_space<vmem>>, %arg14: memref<128x32xbf16, #tpu.memory_space<vmem>>, %arg15: memref<1x32xf32, #tpu.memory_space<vmem>>, %arg16: memref<1x8x32xf32, #tpu.memory_space<vmem>>, %arg17: memref<8x32xbf16, #tpu.memory_space<vmem>>, %arg18: memref<4x8x8xbf16, #tpu.memory_space<vmem>>, %arg19: memref<4x8x8xbf16, #tpu.memory_space<vmem>>) attributes {dimension_semantics = [#tpu.dimension_semantics<parallel>, #tpu.dimension_semantics<arbitrary>], iteration_bounds = array<i64: 2, 1>, scalar_prefetch = 0 : i64, scratch_operands = 3 : i64, tpu.core_type = #tpu.core_type<tc>, window_params = [{transform_indices = @transform_0, window_bounds = array<i64: 1, 8, 32>}, {pipeline_mode = #tpu.pipeline_mode<synchronous>, transform_indices = @transform_1, window_bounds = array<i64: 1, 32>}, {pipeline_mode = #tpu.pipeline_mode<synchronous>, transform_indices = @transform_2, window_bounds = array<i64: 1, 32>}, {pipeline_mode = #tpu.pipeline_mode<synchronous>, transform_indices = @transform_3, window_bounds = array<i64: 32, 32>}, {pipeline_mode = #tpu.pipeline_mode<synchronous>, transform_indices = @transform_4, window_bounds = array<i64: 32, 32>}, {pipeline_mode = #tpu.pipeline_mode<synchronous>, transform_indices = @transform_5, window_bounds = array<i64: 32, 32>}, {pipeline_mode = #tpu.pipeline_mode<synchronous>, transform_indices = @transform_6, window_bounds = array<i64: 32, 32>}, {pipeline_mode = #tpu.pipeline_mode<synchronous>, transform_indices = @transform_7, window_bounds = array<i64: 1, 32>}, {pipeline_mode = #tpu.pipeline_mode<synchronous>, transform_indices = @transform_8, window_bounds = array<i64: 1, 32>}, {pipeline_mode = #tpu.pipeline_mode<synchronous>, transform_indices = @transform_9, window_bounds = array<i64: 1, 32>}, {pipeline_mode = #tpu.pipeline_mode<synchronous>, transform_indices = @transform_10, window_bounds = array<i64: 32, 128>}, {pipeline_mode = #tpu.pipeline_mode<synchronous>, transform_indices = @transform_11, window_bounds = array<i64: 1, 128>}, {pipeline_mode = #tpu.pipeline_mode<synchronous>, transform_indices = @transform_12, window_bounds = array<i64: 128, 32>}, {pipeline_mode = #tpu.pipeline_mode<synchronous>, transform_indices = @transform_13, window_bounds = array<i64: 1, 32>}, {transform_indices = @transform_14, window_bounds = array<i64: 1, 8, 32>}]} {
    %c0_i32 = arith.constant 0 : i32
    %0 = arith.cmpi eq, %arg1, %c0_i32 : i32
    %1 = arith.extui %0 : i1 to i32
    %c0_i32_0 = arith.constant 0 : i32
    %2 = arith.cmpi ne, %1, %c0_i32_0 : i32
    scf.if %2 {
      %c0_46 = arith.constant 0 : index
      %c0_47 = arith.constant 0 : index
      %c0_48 = arith.constant 0 : index
      %88 = vector.load %arg2[%c0_46, %c0_47, %c0_48] : memref<1x8x32xf32, #tpu.memory_space<vmem>>, vector<1x8x32xf32>
      %89 = vector.shape_cast %88 : vector<1x8x32xf32> to vector<8x32xf32>
      %c0_49 = arith.constant 0 : index
      %c0_50 = arith.constant 0 : index
      %90 = vector.load %arg3[%c0_49, %c0_50] : memref<1x32xf32, #tpu.memory_space<vmem>>, vector<1x32xf32>
      %c0_51 = arith.constant 0 : index
      %c0_52 = arith.constant 0 : index
      %91 = vector.load %arg4[%c0_51, %c0_52] : memref<1x32xf32, #tpu.memory_space<vmem>>, vector<1x32xf32>
      %cst_53 = arith.constant dense<0.000000e+00> : vector<8xf32>
      %92 = vector.multi_reduction <add>, %89, %cst_53 [1] : vector<8x32xf32> to vector<8xf32>
      %93 = vector.shape_cast %92 : vector<8xf32> to vector<8x1xf32>
      %cst_54 = arith.constant 3.200000e+01 : f32
      %94 = vector.broadcast %cst_54 : f32 to vector<8x1xf32>
      %95 = arith.divf %93, %94 : vector<8x1xf32>
      %96 = vector.broadcast %95 : vector<8x1xf32> to vector<8x32xf32>
      %97 = arith.subf %89, %96 : vector<8x32xf32>
      %98 = arith.mulf %97, %97 : vector<8x32xf32>
      %cst_55 = arith.constant dense<0.000000e+00> : vector<8xf32>
      %99 = vector.multi_reduction <add>, %98, %cst_55 [1] : vector<8x32xf32> to vector<8xf32>
      %100 = vector.shape_cast %99 : vector<8xf32> to vector<8x1xf32>
      %cst_56 = arith.constant 3.200000e+01 : f32
      %101 = vector.broadcast %cst_56 : f32 to vector<8x1xf32>
      %102 = arith.divf %100, %101 : vector<8x1xf32>
      %103 = vector.broadcast %95 : vector<8x1xf32> to vector<8x32xf32>
      %104 = arith.subf %89, %103 : vector<8x32xf32>
      %cst_57 = arith.constant 9.99999974E-6 : f32
      %105 = vector.broadcast %cst_57 : f32 to vector<8x1xf32>
      %106 = arith.addf %102, %105 : vector<8x1xf32>
      %107 = math.rsqrt %106 : vector<8x1xf32>
      %108 = vector.broadcast %107 : vector<8x1xf32> to vector<8x32xf32>
      %109 = arith.mulf %104, %108 : vector<8x32xf32>
      %110 = vector.broadcast %90 : vector<1x32xf32> to vector<8x32xf32>
      %111 = arith.mulf %109, %110 : vector<8x32xf32>
      %112 = vector.broadcast %91 : vector<1x32xf32> to vector<8x32xf32>
      %113 = arith.addf %111, %112 : vector<8x32xf32>
      %114 = arith.truncf %113 : vector<8x32xf32> to vector<8x32xbf16>
      %c0_58 = arith.constant 0 : index
      %c0_59 = arith.constant 0 : index
      %115 = vector.load %arg17[%c0_58, %c0_59] : memref<8x32xbf16, #tpu.memory_space<vmem>>, vector<8x32xbf16>
      tpu.vector_store %arg17[%c0_58, %c0_59], %114 {strides = array<i32>} : memref<8x32xbf16, #tpu.memory_space<vmem>>, vector<8x32xbf16>,
      %116 = tpu.transpose %114, [1, 0] : vector<8x32xbf16> -> vector<32x8xbf16>
      %c0_60 = arith.constant 0 : index
      %c0_61 = arith.constant 0 : index
      %117 = vector.load %arg6[%c0_60, %c0_61] : memref<32x32xbf16, #tpu.memory_space<vmem>>, vector<32x32xbf16>
      %cst_62 = arith.constant dense<0.000000e+00> : vector<32x8xf32>
      %118 = tpu.matmul %117, %116, %cst_62 {dimension_numbers = #tpu.dot_dimension_numbers<[1], [0], [0], [1], [0, 0, 1, 1], [], []>} : vector<32x32xbf16>, vector<32x8xbf16>, vector<32x8xf32> -> vector<32x8xf32>
      %c0_63 = arith.constant 0 : index
      %c0_64 = arith.constant 0 : index
      %119 = vector.load %arg7[%c0_63, %c0_64] : memref<32x32xbf16, #tpu.memory_space<vmem>>, vector<32x32xbf16>
      %cst_65 = arith.constant dense<0.000000e+00> : vector<32x8xf32>
      %120 = tpu.matmul %119, %116, %cst_65 {dimension_numbers = #tpu.dot_dimension_numbers<[1], [0], [0], [1], [0, 0, 1, 1], [], []>} : vector<32x32xbf16>, vector<32x8xbf16>, vector<32x8xf32> -> vector<32x8xf32>
      %121 = arith.truncf %118 : vector<32x8xf32> to vector<32x8xbf16>
      %122 = arith.truncf %120 : vector<32x8xf32> to vector<32x8xbf16>
      %123 = vector.extract_strided_slice %121 {offsets = [0, 0], sizes = [8, 8], strides = [1, 1]} : vector<32x8xbf16> to vector<8x8xbf16>
      %c0_66 = arith.constant 0 : index
      %c0_67 = arith.constant 0 : index
      %c0_68 = arith.constant 0 : index
      %124 = vector.load %arg18[%c0_66, %c0_67, %c0_68] : memref<4x8x8xbf16, #tpu.memory_space<vmem>>, vector<1x8x8xbf16>
      %125 = vector.shape_cast %124 : vector<1x8x8xbf16> to vector<8x8xbf16>
      %126 = vector.shape_cast %123 : vector<8x8xbf16> to vector<1x8x8xbf16>
      tpu.vector_store %arg18[%c0_66, %c0_67, %c0_68], %126 {strides = array<i32>} : memref<4x8x8xbf16, #tpu.memory_space<vmem>>, vector<1x8x8xbf16>,
      %127 = vector.extract_strided_slice %122 {offsets = [0, 0], sizes = [8, 8], strides = [1, 1]} : vector<32x8xbf16> to vector<8x8xbf16>
      %c0_69 = arith.constant 0 : index
      %c0_70 = arith.constant 0 : index
      %c0_71 = arith.constant 0 : index
      %128 = vector.load %arg19[%c0_69, %c0_70, %c0_71] : memref<4x8x8xbf16, #tpu.memory_space<vmem>>, vector<1x8x8xbf16>
      %129 = vector.shape_cast %128 : vector<1x8x8xbf16> to vector<8x8xbf16>
      %130 = vector.shape_cast %127 : vector<8x8xbf16> to vector<1x8x8xbf16>
      tpu.vector_store %arg19[%c0_69, %c0_70, %c0_71], %130 {strides = array<i32>} : memref<4x8x8xbf16, #tpu.memory_space<vmem>>, vector<1x8x8xbf16>,
      %131 = vector.extract_strided_slice %121 {offsets = [8, 0], sizes = [8, 8], strides = [1, 1]} : vector<32x8xbf16> to vector<8x8xbf16>
      %c1 = arith.constant 1 : index
      %c0_72 = arith.constant 0 : index
      %c0_73 = arith.constant 0 : index
      %132 = vector.load %arg18[%c1, %c0_72, %c0_73] : memref<4x8x8xbf16, #tpu.memory_space<vmem>>, vector<1x8x8xbf16>
      %133 = vector.shape_cast %132 : vector<1x8x8xbf16> to vector<8x8xbf16>
      %134 = vector.shape_cast %131 : vector<8x8xbf16> to vector<1x8x8xbf16>
      tpu.vector_store %arg18[%c1, %c0_72, %c0_73], %134 {strides = array<i32>} : memref<4x8x8xbf16, #tpu.memory_space<vmem>>, vector<1x8x8xbf16>,
      %135 = vector.extract_strided_slice %122 {offsets = [8, 0], sizes = [8, 8], strides = [1, 1]} : vector<32x8xbf16> to vector<8x8xbf16>
      %c1_74 = arith.constant 1 : index
      %c0_75 = arith.constant 0 : index
      %c0_76 = arith.constant 0 : index
      %136 = vector.load %arg19[%c1_74, %c0_75, %c0_76] : memref<4x8x8xbf16, #tpu.memory_space<vmem>>, vector<1x8x8xbf16>
      %137 = vector.shape_cast %136 : vector<1x8x8xbf16> to vector<8x8xbf16>
      %138 = vector.shape_cast %135 : vector<8x8xbf16> to vector<1x8x8xbf16>
      tpu.vector_store %arg19[%c1_74, %c0_75, %c0_76], %138 {strides = array<i32>} : memref<4x8x8xbf16, #tpu.memory_space<vmem>>, vector<1x8x8xbf16>,
      %139 = vector.extract_strided_slice %121 {offsets = [16, 0], sizes = [8, 8], strides = [1, 1]} : vector<32x8xbf16> to vector<8x8xbf16>
      %c2 = arith.constant 2 : index
      %c0_77 = arith.constant 0 : index
      %c0_78 = arith.constant 0 : index
      %140 = vector.load %arg18[%c2, %c0_77, %c0_78] : memref<4x8x8xbf16, #tpu.memory_space<vmem>>, vector<1x8x8xbf16>
      %141 = vector.shape_cast %140 : vector<1x8x8xbf16> to vector<8x8xbf16>
      %142 = vector.shape_cast %139 : vector<8x8xbf16> to vector<1x8x8xbf16>
      tpu.vector_store %arg18[%c2, %c0_77, %c0_78], %142 {strides = array<i32>} : memref<4x8x8xbf16, #tpu.memory_space<vmem>>, vector<1x8x8xbf16>,
      %143 = vector.extract_strided_slice %122 {offsets = [16, 0], sizes = [8, 8], strides = [1, 1]} : vector<32x8xbf16> to vector<8x8xbf16>
      %c2_79 = arith.constant 2 : index
      %c0_80 = arith.constant 0 : index
      %c0_81 = arith.constant 0 : index
      %144 = vector.load %arg19[%c2_79, %c0_80, %c0_81] : memref<4x8x8xbf16, #tpu.memory_space<vmem>>, vector<1x8x8xbf16>
      %145 = vector.shape_cast %144 : vector<1x8x8xbf16> to vector<8x8xbf16>
      %146 = vector.shape_cast %143 : vector<8x8xbf16> to vector<1x8x8xbf16>
      tpu.vector_store %arg19[%c2_79, %c0_80, %c0_81], %146 {strides = array<i32>} : memref<4x8x8xbf16, #tpu.memory_space<vmem>>, vector<1x8x8xbf16>,
      %147 = vector.extract_strided_slice %121 {offsets = [24, 0], sizes = [8, 8], strides = [1, 1]} : vector<32x8xbf16> to vector<8x8xbf16>
      %c3 = arith.constant 3 : index
      %c0_82 = arith.constant 0 : index
      %c0_83 = arith.constant 0 : index
      %148 = vector.load %arg18[%c3, %c0_82, %c0_83] : memref<4x8x8xbf16, #tpu.memory_space<vmem>>, vector<1x8x8xbf16>
      %149 = vector.shape_cast %148 : vector<1x8x8xbf16> to vector<8x8xbf16>
      %150 = vector.shape_cast %147 : vector<8x8xbf16> to vector<1x8x8xbf16>
      tpu.vector_store %arg18[%c3, %c0_82, %c0_83], %150 {strides = array<i32>} : memref<4x8x8xbf16, #tpu.memory_space<vmem>>, vector<1x8x8xbf16>,
      %151 = vector.extract_strided_slice %122 {offsets = [24, 0], sizes = [8, 8], strides = [1, 1]} : vector<32x8xbf16> to vector<8x8xbf16>
      %c3_84 = arith.constant 3 : index
      %c0_85 = arith.constant 0 : index
      %c0_86 = arith.constant 0 : index
      %152 = vector.load %arg19[%c3_84, %c0_85, %c0_86] : memref<4x8x8xbf16, #tpu.memory_space<vmem>>, vector<1x8x8xbf16>
      %153 = vector.shape_cast %152 : vector<1x8x8xbf16> to vector<8x8xbf16>
      %154 = vector.shape_cast %151 : vector<8x8xbf16> to vector<1x8x8xbf16>
      tpu.vector_store %arg19[%c3_84, %c0_85, %c0_86], %154 {strides = array<i32>} : memref<4x8x8xbf16, #tpu.memory_space<vmem>>, vector<1x8x8xbf16>,
    } else {
    }
    %c8_i32 = arith.constant 8 : i32
    %3 = arith.muli %arg1, %c8_i32 : i32
    %4 = tpu.assume_multiple %3, 8 : i32
    %c0 = arith.constant 0 : index
    %5 = arith.index_cast %4 : i32 to index
    %c0_1 = arith.constant 0 : index
    %6 = vector.load %arg2[%c0, %5, %c0_1] : memref<1x8x32xf32, #tpu.memory_space<vmem>>, vector<1x8x32xf32>
    %7 = vector.shape_cast %6 : vector<1x8x32xf32> to vector<8x32xf32>
    %8 = arith.index_cast %4 : i32 to index
    %c0_2 = arith.constant 0 : index
    %9 = vector.load %arg17[%8, %c0_2] : memref<8x32xbf16, #tpu.memory_space<vmem>>, vector<8x32xbf16>
    %c0_3 = arith.constant 0 : index
    %c0_4 = arith.constant 0 : index
    %10 = vector.load %arg5[%c0_3, %c0_4] : memref<32x32xbf16, #tpu.memory_space<vmem>>, vector<32x32xbf16>
    %cst = arith.constant dense<0.000000e+00> : vector<8x32xf32>
    %11 = tpu.matmul %9, %10, %cst {dimension_numbers = #tpu.dot_dimension_numbers<[1], [0], [0], [1], [0, 0, 1, 1], [], []>} : vector<8x32xbf16>, vector<32x32xbf16>, vector<8x32xf32> -> vector<8x32xf32>
    %cst_5 = arith.constant 0.353553385 : f32
    %12 = vector.broadcast %cst_5 : f32 to vector<8x32xf32>
    %13 = arith.mulf %11, %12 : vector<8x32xf32>
    %14 = arith.truncf %13 : vector<8x32xf32> to vector<8x32xbf16>
    %15 = vector.shape_cast %14 : vector<8x32xbf16> to vector<8x4x8xbf16>
    %c0_6 = arith.constant 0 : index
    %c0_7 = arith.constant 0 : index
    %c0_8 = arith.constant 0 : index
    %16 = vector.load %arg18[%c0_6, %c0_7, %c0_8] : memref<4x8x8xbf16, #tpu.memory_space<vmem>>, vector<4x8x8xbf16>
    "tpu.trace_start"() <{level = 10 : i32, message = "qhd,hdk->hqk"}> : () -> ()
    %cst_9 = arith.constant dense<0.000000e+00> : vector<4x8x8xf32>
    %17 = tpu.matmul %15, %16, %cst_9 {dimension_numbers = #tpu.dot_dimension_numbers<[2], [1], [0], [2], [0, 1, 0, 0, 1, 2], [1], [0]>} : vector<8x4x8xbf16>, vector<4x8x8xbf16>, vector<4x8x8xf32> -> vector<4x8x8xf32>
    "tpu.trace_stop"() : () -> ()
    %cst_10 = arith.constant dense<0xFF800000> : vector<4x8xf32>
    %18 = vector.multi_reduction <maximumf>, %17, %cst_10 [2] : vector<4x8x8xf32> to vector<4x8xf32>
    %19 = vector.shape_cast %18 : vector<4x8xf32> to vector<4x8x1xf32>
    %20 = vector.broadcast %19 : vector<4x8x1xf32> to vector<4x8x8xf32>
    %21 = arith.subf %17, %20 : vector<4x8x8xf32>
    %22 = math.exp %21 : vector<4x8x8xf32>
    %cst_11 = arith.constant dense<0.000000e+00> : vector<4x8xf32>
    %23 = vector.multi_reduction <add>, %22, %cst_11 [2] : vector<4x8x8xf32> to vector<4x8xf32>
    %24 = vector.shape_cast %23 : vector<4x8xf32> to vector<4x8x1xf32>
    %25 = arith.truncf %22 : vector<4x8x8xf32> to vector<4x8x8xbf16>
    %c0_12 = arith.constant 0 : index
    %c0_13 = arith.constant 0 : index
    %c0_14 = arith.constant 0 : index
    %26 = vector.load %arg19[%c0_12, %c0_13, %c0_14] : memref<4x8x8xbf16, #tpu.memory_space<vmem>>, vector<4x8x8xbf16>
    "tpu.trace_start"() <{level = 10 : i32, message = "hqk,hdk->hqd"}> : () -> ()
    %cst_15 = arith.constant dense<0.000000e+00> : vector<4x8x8xf32>
    %27 = tpu.matmul %25, %26, %cst_15 {dimension_numbers = #tpu.dot_dimension_numbers<[2], [2], [1], [1], [0, 0, 0, 1, 1, 1], [0], [0]>} : vector<4x8x8xbf16>, vector<4x8x8xbf16>, vector<4x8x8xf32> -> vector<4x8x8xf32>
    "tpu.trace_stop"() : () -> ()
    %28 = tpu.reciprocal %24 {approx = true} : vector<4x8x1xf32> -> vector<4x8x1xf32>
    %29 = vector.broadcast %28 : vector<4x8x1xf32> to vector<4x8x8xf32>
    %30 = arith.mulf %27, %29 : vector<4x8x8xf32>
    %31 = tpu.transpose %30, [1, 0, 2] : vector<4x8x8xf32> -> vector<8x4x8xf32>
    %32 = vector.shape_cast %31 : vector<8x4x8xf32> to vector<8x32xf32>
    %33 = arith.truncf %32 : vector<8x32xf32> to vector<8x32xbf16>
    %c0_16 = arith.constant 0 : index
    %c0_17 = arith.constant 0 : index
    %34 = vector.load %arg8[%c0_16, %c0_17] : memref<32x32xbf16, #tpu.memory_space<vmem>>, vector<32x32xbf16>
    %cst_18 = arith.constant dense<0.000000e+00> : vector<8x32xf32>
    %35 = tpu.matmul %33, %34, %cst_18 {dimension_numbers = #tpu.dot_dimension_numbers<[1], [0], [0], [1], [0, 0, 1, 1], [], []>} : vector<8x32xbf16>, vector<32x32xbf16>, vector<8x32xf32> -> vector<8x32xf32>
    %c0_19 = arith.constant 0 : index
    %c0_20 = arith.constant 0 : index
    %36 = vector.load %arg9[%c0_19, %c0_20] : memref<1x32xf32, #tpu.memory_space<vmem>>, vector<1x32xf32>
    %37 = vector.broadcast %36 : vector<1x32xf32> to vector<8x32xf32>
    %38 = arith.addf %35, %37 : vector<8x32xf32>
    %39 = arith.addf %7, %38 : vector<8x32xf32>
    %c0_21 = arith.constant 0 : index
    %c0_22 = arith.constant 0 : index
    %40 = vector.load %arg10[%c0_21, %c0_22] : memref<1x32xf32, #tpu.memory_space<vmem>>, vector<1x32xf32>
    %c0_23 = arith.constant 0 : index
    %c0_24 = arith.constant 0 : index
    %41 = vector.load %arg11[%c0_23, %c0_24] : memref<1x32xf32, #tpu.memory_space<vmem>>, vector<1x32xf32>
    %cst_25 = arith.constant dense<0.000000e+00> : vector<8xf32>
    %42 = vector.multi_reduction <add>, %39, %cst_25 [1] : vector<8x32xf32> to vector<8xf32>
    %43 = vector.shape_cast %42 : vector<8xf32> to vector<8x1xf32>
    %cst_26 = arith.constant 3.200000e+01 : f32
    %44 = vector.broadcast %cst_26 : f32 to vector<8x1xf32>
    %45 = arith.divf %43, %44 : vector<8x1xf32>
    %46 = vector.broadcast %45 : vector<8x1xf32> to vector<8x32xf32>
    %47 = arith.subf %39, %46 : vector<8x32xf32>
    %48 = arith.mulf %47, %47 : vector<8x32xf32>
    %cst_27 = arith.constant dense<0.000000e+00> : vector<8xf32>
    %49 = vector.multi_reduction <add>, %48, %cst_27 [1] : vector<8x32xf32> to vector<8xf32>
    %50 = vector.shape_cast %49 : vector<8xf32> to vector<8x1xf32>
    %cst_28 = arith.constant 3.200000e+01 : f32
    %51 = vector.broadcast %cst_28 : f32 to vector<8x1xf32>
    %52 = arith.divf %50, %51 : vector<8x1xf32>
    %53 = vector.broadcast %45 : vector<8x1xf32> to vector<8x32xf32>
    %54 = arith.subf %39, %53 : vector<8x32xf32>
    %cst_29 = arith.constant 9.99999974E-6 : f32
    %55 = vector.broadcast %cst_29 : f32 to vector<8x1xf32>
    %56 = arith.addf %52, %55 : vector<8x1xf32>
    %57 = math.rsqrt %56 : vector<8x1xf32>
    %58 = vector.broadcast %57 : vector<8x1xf32> to vector<8x32xf32>
    %59 = arith.mulf %54, %58 : vector<8x32xf32>
    %60 = vector.broadcast %40 : vector<1x32xf32> to vector<8x32xf32>
    %61 = arith.mulf %59, %60 : vector<8x32xf32>
    %62 = vector.broadcast %41 : vector<1x32xf32> to vector<8x32xf32>
    %63 = arith.addf %61, %62 : vector<8x32xf32>
    %64 = arith.truncf %63 : vector<8x32xf32> to vector<8x32xbf16>
    %c0_30 = arith.constant 0 : index
    %c0_31 = arith.constant 0 : index
    %65 = vector.load %arg12[%c0_30, %c0_31] : memref<32x128xbf16, #tpu.memory_space<vmem>>, vector<32x128xbf16>
    %cst_32 = arith.constant dense<0.000000e+00> : vector<8x128xf32>
    %66 = tpu.matmul %64, %65, %cst_32 {dimension_numbers = #tpu.dot_dimension_numbers<[1], [0], [0], [1], [0, 0, 1, 1], [], []>} : vector<8x32xbf16>, vector<32x128xbf16>, vector<8x128xf32> -> vector<8x128xf32>
    %c0_33 = arith.constant 0 : index
    %c0_34 = arith.constant 0 : index
    %67 = vector.load %arg13[%c0_33, %c0_34] : memref<1x128xf32, #tpu.memory_space<vmem>>, vector<1x128xf32>
    %68 = vector.broadcast %67 : vector<1x128xf32> to vector<8x128xf32>
    %69 = arith.addf %66, %68 : vector<8x128xf32>
    %cst_35 = arith.constant 5.000000e-01 : f32
    %70 = vector.broadcast %cst_35 : f32 to vector<8x128xf32>
    %71 = arith.mulf %70, %69 : vector<8x128xf32>
    %cst_36 = arith.constant 0.707106769 : f32
    %72 = vector.broadcast %cst_36 : f32 to vector<8x128xf32>
    %73 = arith.mulf %69, %72 : vector<8x128xf32>
    %74 = math.erf %73 : vector<8x128xf32>
    %cst_37 = arith.constant 1.000000e+00 : f32
    %75 = vector.broadcast %cst_37 : f32 to vector<8x128xf32>
    %76 = arith.addf %75, %74 : vector<8x128xf32>
    %77 = arith.mulf %71, %76 : vector<8x128xf32>
    %78 = arith.truncf %77 : vector<8x128xf32> to vector<8x128xbf16>
    %c0_38 = arith.constant 0 : index
    %c0_39 = arith.constant 0 : index
    %79 = vector.load %arg14[%c0_38, %c0_39] : memref<128x32xbf16, #tpu.memory_space<vmem>>, vector<128x32xbf16>
    %cst_40 = arith.constant dense<0.000000e+00> : vector<8x32xf32>
    %80 = tpu.matmul %78, %79, %cst_40 {dimension_numbers = #tpu.dot_dimension_numbers<[1], [0], [0], [1], [0, 0, 1, 1], [], []>} : vector<8x128xbf16>, vector<128x32xbf16>, vector<8x32xf32> -> vector<8x32xf32>
    %c0_41 = arith.constant 0 : index
    %c0_42 = arith.constant 0 : index
    %81 = vector.load %arg15[%c0_41, %c0_42] : memref<1x32xf32, #tpu.memory_space<vmem>>, vector<1x32xf32>
    %82 = vector.broadcast %81 : vector<1x32xf32> to vector<8x32xf32>
    %83 = arith.addf %80, %82 : vector<8x32xf32>
    %84 = arith.addf %39, %83 : vector<8x32xf32>
    %c0_43 = arith.constant 0 : index
    %c0_44 = arith.constant 0 : index
    %c0_45 = arith.constant 0 : index
    %85 = vector.load %arg16[%c0_43, %c0_44, %c0_45] : memref<1x8x32xf32, #tpu.memory_space<vmem>>, vector<1x8x32xf32>
    %86 = vector.shape_cast %85 : vector<1x8x32xf32> to vector<8x32xf32>
    %87 = vector.shape_cast %84 : vector<8x32xf32> to vector<1x8x32xf32>
    tpu.vector_store %arg16[%c0_43, %c0_44, %c0_45], %87 {strides = array<i32>} : memref<1x8x32xf32, #tpu.memory_space<vmem>>, vector<1x8x32xf32>,
    return
  }
  func.func @transform_0(%arg0: i32, %arg1: i32) -> (i32, i32, i32) {
    %c0_i32 = arith.constant 0 : i32
    %c0_i32_0 = arith.constant 0 : i32
    %c0_i32_1 = arith.constant 0 : i32
    return %arg0, %c0_i32, %c0_i32_0 : i32, i32, i32
  }
  func.func @transform_1(%arg0: i32, %arg1: i32) -> (i32, i32) {
    %c0_i32 = arith.constant 0 : i32
    %c0_i32_0 = arith.constant 0 : i32
    %c0_i32_1 = arith.constant 0 : i32
    return %c0_i32, %c0_i32_0 : i32, i32
  }
  func.func @transform_2(%arg0: i32, %arg1: i32) -> (i32, i32) {
    %c0_i32 = arith.constant 0 : i32
    %c0_i32_0 = arith.constant 0 : i32
    %c0_i32_1 = arith.constant 0 : i32
    return %c0_i32, %c0_i32_0 : i32, i32
  }
  func.func @transform_3(%arg0: i32, %arg1: i32) -> (i32, i32) {
    %c0_i32 = arith.constant 0 : i32
    %c0_i32_0 = arith.constant 0 : i32
    %c0_i32_1 = arith.constant 0 : i32
    return %c0_i32, %c0_i32_0 : i32, i32
  }
  func.func @transform_4(%arg0: i32, %arg1: i32) -> (i32, i32) {
    %c0_i32 = arith.constant 0 : i32
    %c0_i32_0 = arith.constant 0 : i32
    %c0_i32_1 = arith.constant 0 : i32
    return %c0_i32, %c0_i32_0 : i32, i32
  }
  func.func @transform_5(%arg0: i32, %arg1: i32) -> (i32, i32) {
    %c0_i32 = arith.constant 0 : i32
    %c0_i32_0 = arith.constant 0 : i32
    %c0_i32_1 = arith.constant 0 : i32
    return %c0_i32, %c0_i32_0 : i32, i32
  }
  func.func @transform_6(%arg0: i32, %arg1: i32) -> (i32, i32) {
    %c0_i32 = arith.constant 0 : i32
    %c0_i32_0 = arith.constant 0 : i32
    %c0_i32_1 = arith.constant 0 : i32
    return %c0_i32, %c0_i32_0 : i32, i32
  }
  func.func @transform_7(%arg0: i32, %arg1: i32) -> (i32, i32) {
    %c0_i32 = arith.constant 0 : i32
    %c0_i32_0 = arith.constant 0 : i32
    %c0_i32_1 = arith.constant 0 : i32
    return %c0_i32, %c0_i32_0 : i32, i32
  }
  func.func @transform_8(%arg0: i32, %arg1: i32) -> (i32, i32) {
    %c0_i32 = arith.constant 0 : i32
    %c0_i32_0 = arith.constant 0 : i32
    %c0_i32_1 = arith.constant 0 : i32
    return %c0_i32, %c0_i32_0 : i32, i32
  }
  func.func @transform_9(%arg0: i32, %arg1: i32) -> (i32, i32) {
    %c0_i32 = arith.constant 0 : i32
    %c0_i32_0 = arith.constant 0 : i32
    %c0_i32_1 = arith.constant 0 : i32
    return %c0_i32, %c0_i32_0 : i32, i32
  }
  func.func @transform_10(%arg0: i32, %arg1: i32) -> (i32, i32) {
    %c0_i32 = arith.constant 0 : i32
    %c0_i32_0 = arith.constant 0 : i32
    %c0_i32_1 = arith.constant 0 : i32
    return %c0_i32, %c0_i32_0 : i32, i32
  }
  func.func @transform_11(%arg0: i32, %arg1: i32) -> (i32, i32) {
    %c0_i32 = arith.constant 0 : i32
    %c0_i32_0 = arith.constant 0 : i32
    %c0_i32_1 = arith.constant 0 : i32
    return %c0_i32, %c0_i32_0 : i32, i32
  }
  func.func @transform_12(%arg0: i32, %arg1: i32) -> (i32, i32) {
    %c0_i32 = arith.constant 0 : i32
    %c0_i32_0 = arith.constant 0 : i32
    %c0_i32_1 = arith.constant 0 : i32
    return %c0_i32, %c0_i32_0 : i32, i32
  }
  func.func @transform_13(%arg0: i32, %arg1: i32) -> (i32, i32) {
    %c0_i32 = arith.constant 0 : i32
    %c0_i32_0 = arith.constant 0 : i32
    %c0_i32_1 = arith.constant 0 : i32
    return %c0_i32, %c0_i32_0 : i32, i32
  }
  func.func @transform_14(%arg0: i32, %arg1: i32) -> (i32, i32, i32) {
    %c0_i32 = arith.constant 0 : i32
    %c0_i32_0 = arith.constant 0 : i32
    return %arg0, %arg1, %c0_i32 : i32, i32, i32
  }
}

</mosaic_0001>

<llo_original>
// kernel: tpu_custom_call.1
$region0: #{tpu_custom_call.1}
  #allocation0 [shape = 'u32[]', space=smem, size = 0x4, offset = 0x4, fixed_abs, tag = 'smem constant byte address 0x4 - core index']
  #allocation1 [shape = 'u32[72,128]{1,0:T(1,128)}', space=vmem, size = 0x9000, scoped, tag = 'internal scratch']
  #allocation2 [shape = 'bf16[8,32]{1,0:T(8,128)(2,1)}', space=vmem, size = 0x800, scoped, tag = 'scratch operand']
  #allocation3 [shape = 'bf16[4,8,8]{2,1,0:T(8,128)(2,1)}', space=vmem, size = 0x2000, scoped, tag = 'scratch operand']
  #allocation4 [shape = 'bf16[4,8,8]{2,1,0:T(8,128)(2,1)}', space=vmem, size = 0x2000, scoped, tag = 'scratch operand']
  %s0 = inlined_call_operand.vmem [shape: f32[2,8,32], index: 0, kind: input, shape index: {}]
  %s1 = inlined_call_operand.hbm [shape: f32[1,32], index: 1, kind: input, shape index: {}]
  %s2 = inlined_call_operand.vmem [shape: f32[1,32], index: 2, kind: input, shape index: {}]
  %s3 = inlined_call_operand.vmem [shape: bf16[32,32], index: 3, kind: input, shape index: {}]
  %s4 = inlined_call_operand.vmem [shape: bf16[32,32], index: 4, kind: input, shape index: {}]
  %s5 = inlined_call_operand.vmem [shape: bf16[32,32], index: 5, kind: input, shape index: {}]
  %s6 = inlined_call_operand.vmem [shape: bf16[32,32], index: 6, kind: input, shape index: {}]
  %s7 = inlined_call_operand.vmem [shape: f32[1,32], index: 7, kind: input, shape index: {}]
  %s8 = inlined_call_operand.vmem [shape: f32[1,32], index: 8, kind: input, shape index: {}]
  %s9 = inlined_call_operand.vmem [shape: f32[1,32], index: 9, kind: input, shape index: {}]
  %s10 = inlined_call_operand.hbm [shape: bf16[32,128], index: 10, kind: input, shape index: {}]
  %s11 = inlined_call_operand.vmem [shape: f32[1,128], index: 11, kind: input, shape index: {}]
  %s12 = inlined_call_operand.vmem [shape: bf16[128,32], index: 12, kind: input, shape index: {}]
  %s13 = inlined_call_operand.vmem [shape: f32[1,32], index: 13, kind: input, shape index: {}]
  %s14 = inlined_call_operand.hbm [shape: f32[2,8,32], index: 14, kind: output, shape index: {}]
  %s15 = sld [smem:[#allocation0]]
  $region101: #{tpu_custom_call.1} parent=0
    _
  %s17 = ssub.s32 1, %s15
  %s18 = scalar_select 0, %s17, %s15
  $region1: #{tpu_custom_call.1} parent=0
    #allocation5 [shape = 'u8[512]{0}', space=vmem, size = 0x400, scoped, tag = 'input window, operand 1, single buffered']
    #allocation6 [shape = 's32[2]{0}', space=sflag, size = 0x8, scoped, tag = 'scoped memory for tpu_custom_call.1']
    #allocation7 [shape = 's32[2]{0}', space=sflag, size = 0x8, scoped, tag = 'scoped memory for tpu_custom_call.1']
    #allocation8 [shape = 'u8[8192]{0}', space=vmem, size = 0x2000, scoped, tag = 'input window, operand 10, single buffered']
    #allocation9 [shape = 's32[1]{0}', space=sflag, size = 0x4, scoped, tag = 'scoped memory for tpu_custom_call.1']
    #allocation10 [shape = 'u8[8192]{0}', space=vmem, size = 0x2000, scoped, tag = 'output window, operand 0']
    %19 = vsyncpa [#allocation6], 0
    %20 = vsyncpa [#allocation9], 0
    %21 = vsyncpa [#allocation7], 0
    %s22 = scalar_lea.sflag [#allocation7], 1
    %23 = vsyncpa %s22, 0
    loop: start=0, step=1, limit=4
    $region2: #{tpu_custom_call.1} parent=1 // loop_pre_header
      _
    $region3: #{tpu_custom_call.1} parent=1 // loop_header
      %s25 = sphi 0, %s29
      %p26 = scmp.ge.s32.totalorder %s25, 4
      %s32 = sphi 0, %s44
      %s33 = sphi 0, %s40
      %s34 = sphi 0, %s32
      %s35 = sphi 0, %s33
      %s36 = sphi 0, %s34
      %s37 = sphi 0, %s35
      %s47 = sphi 0, %s49
      %s50 = sphi 0, %s47
      %s51 = sphi 0, %s50
      %s67 = sphi 0, %s51
      %s71 = sphi 0, %s71
      %s73 = sphi 0, %s71
      %s74 = sphi 0, %s73
      %s88 = sphi 0, %s74
      %s92 = sphi 0, %s92
      %s94 = sphi 0, %s92
      %s95 = sphi 0, %s94
      %s109 = sphi 0, %s95
      %s113 = sphi 0, %s113
      %s115 = sphi 0, %s113
      %s116 = sphi 0, %s115
      %s130 = sphi 0, %s116
      %s134 = sphi 0, %s134
      %s136 = sphi 0, %s134
      %s137 = sphi 0, %s136
      %s151 = sphi 0, %s137
      %s155 = sphi 0, %s155
      %s157 = sphi 0, %s155
      %s158 = sphi 0, %s157
      %s172 = sphi 0, %s158
      %s176 = sphi 0, %s176
      %s178 = sphi 0, %s176
      %s179 = sphi 0, %s178
      %s193 = sphi 0, %s179
      %s197 = sphi 0, %s197
      %s199 = sphi 0, %s197
      %s200 = sphi 0, %s199
      %s214 = sphi 0, %s200
      %s218 = sphi 0, %s218
      %s220 = sphi 0, %s218
      %s221 = sphi 0, %s220
      %s235 = sphi 0, %s221
      %s239 = sphi 0, %s239
      %s241 = sphi 0, %s239
      %s242 = sphi 0, %s241
      %s256 = sphi 0, %s242
      %s260 = sphi 0, %s260
      %s262 = sphi 0, %s260
      %s263 = sphi 0, %s262
      %s277 = sphi 0, %s263
      %s281 = sphi 0, %s281
      %s283 = sphi 0, %s281
      %s284 = sphi 0, %s283
      %s298 = sphi 0, %s284
      %s302 = sphi 0, %s302
      %s304 = sphi 0, %s302
      %s305 = sphi 0, %s304
      %s319 = sphi 0, %s305
      %s323 = sphi 0, %s323
      %s325 = sphi 0, %s323
      %s326 = sphi 0, %s325
      %s340 = sphi 0, %s326
      %s348 = sphi 0, %s350
      %s351 = sphi 0, %s348
      %s352 = sphi 0, %s351
      %s368 = sphi 0, %s352
    $region4: #{tpu_custom_call.1} parent=1 // loop_header_branch
      %28 = sbr.rel (%p26) target = $region8
    $region5: #{tpu_custom_call.1} parent=1 // loop_body
      %s30 = ssub.s32 %s25, 1
      %s31 = ssub.s32 %s25, 2
      %s38 = sadd.s32 1, %s33
      %p39 = scmp.ge.s32.totalorder %s38, 1
      %s40 = scalar_select %p39, 0, %s38
      %s41 = sadd.s32 1, %s32
      %s42 = scalar_select %p39, %s41, %s32
      %p43 = scmp.ge.s32.totalorder %s42, 2
      %s44 = scalar_select %p43, 0, %s42
      %s45 = ssub.s32 %s32, %s44
      %p46 = scmp.eq.s32.totalorder %s45, 0
      %s48 = sadd.s32 %s47, 1
      %s49 = scalar_select %p46, %s47, %s48
      %p52 = pneg %p46
      %p53 = scmp.eq.s32.totalorder %s25, 1
      %p54 = por %p52, %p53
      %p55 = scmp.ne.s32.totalorder %s47, %s50
      %p56 = scmp.eq.s32.totalorder %s25, 0
      %p57 = por %p55, %p56
      %p58 = scmp.ne.s32.totalorder %s47, %s50
      %p59 = scmp.eq.s32.totalorder %s30, 1
      %p60 = por %p58, %p59
      %p61 = scmp.ne.s32.totalorder %s50, %s51
      %p62 = scmp.eq.s32.totalorder %s30, 0
      %p63 = por %p61, %p62
      %p64 = scmp.ne.s32.totalorder %s50, %s51
      %p65 = scmp.eq.s32.totalorder %s31, 1
      %p66 = por %p64, %p65
      %p68 = scmp.ne.s32.totalorder %s51, %s67
      %p69 = scmp.eq.s32.totalorder %s31, 0
      %p70 = por %p68, %p69
      %s72 = sadd.s32 %s71, 1
      %p75 = scmp.eq.s32.totalorder %s25, 1
      %p76 = scmp.ne.s32.totalorder %s71, %s73
      %p77 = scmp.eq.s32.totalorder %s25, 0
      %p78 = por %p76, %p77
      %p79 = scmp.ne.s32.totalorder %s71, %s73
      %p80 = scmp.eq.s32.totalorder %s30, 1
      %p81 = por %p79, %p80
      %p82 = scmp.ne.s32.totalorder %s73, %s74
      %p83 = scmp.eq.s32.totalorder %s30, 0
      %p84 = por %p82, %p83
      %p85 = scmp.ne.s32.totalorder %s73, %s74
      %p86 = scmp.eq.s32.totalorder %s31, 1
      %p87 = por %p85, %p86
      %p89 = scmp.ne.s32.totalorder %s74, %s88
      %p90 = scmp.eq.s32.totalorder %s31, 0
      %p91 = por %p89, %p90
      %s93 = sadd.s32 %s92, 1
      %p96 = scmp.eq.s32.totalorder %s25, 1
      %p97 = scmp.ne.s32.totalorder %s92, %s94
      %p98 = scmp.eq.s32.totalorder %s25, 0
      %p99 = por %p97, %p98
      %p100 = scmp.ne.s32.totalorder %s92, %s94
      %p101 = scmp.eq.s32.totalorder %s30, 1
      %p102 = por %p100, %p101
      %p103 = scmp.ne.s32.totalorder %s94, %s95
      %p104 = scmp.eq.s32.totalorder %s30, 0
      %p105 = por %p103, %p104
      %p106 = scmp.ne.s32.totalorder %s94, %s95
      %p107 = scmp.eq.s32.totalorder %s31, 1
      %p108 = por %p106, %p107
      %p110 = scmp.ne.s32.totalorder %s95, %s109
      %p111 = scmp.eq.s32.totalorder %s31, 0
      %p112 = por %p110, %p111
      %s114 = sadd.s32 %s113, 1
      %p117 = scmp.eq.s32.totalorder %s25, 1
      %p118 = scmp.ne.s32.totalorder %s113, %s115
      %p119 = scmp.eq.s32.totalorder %s25, 0
      %p120 = por %p118, %p119
      %p121 = scmp.ne.s32.totalorder %s113, %s115
      %p122 = scmp.eq.s32.totalorder %s30, 1
      %p123 = por %p121, %p122
      %p124 = scmp.ne.s32.totalorder %s115, %s116
      %p125 = scmp.eq.s32.totalorder %s30, 0
      %p126 = por %p124, %p125
      %p127 = scmp.ne.s32.totalorder %s115, %s116
      %p128 = scmp.eq.s32.totalorder %s31, 1
      %p129 = por %p127, %p128
      %p131 = scmp.ne.s32.totalorder %s116, %s130
      %p132 = scmp.eq.s32.totalorder %s31, 0
      %p133 = por %p131, %p132
      %s135 = sadd.s32 %s134, 1
      %p138 = scmp.eq.s32.totalorder %s25, 1
      %p139 = scmp.ne.s32.totalorder %s134, %s136
      %p140 = scmp.eq.s32.totalorder %s25, 0
      %p141 = por %p139, %p140
      %p142 = scmp.ne.s32.totalorder %s134, %s136
      %p143 = scmp.eq.s32.totalorder %s30, 1
      %p144 = por %p142, %p143
      %p145 = scmp.ne.s32.totalorder %s136, %s137
      %p146 = scmp.eq.s32.totalorder %s30, 0
      %p147 = por %p145, %p146
      %p148 = scmp.ne.s32.totalorder %s136, %s137
      %p149 = scmp.eq.s32.totalorder %s31, 1
      %p150 = por %p148, %p149
      %p152 = scmp.ne.s32.totalorder %s137, %s151
      %p153 = scmp.eq.s32.totalorder %s31, 0
      %p154 = por %p152, %p153
      %s156 = sadd.s32 %s155, 1
      %p159 = scmp.eq.s32.totalorder %s25, 1
      %p160 = scmp.ne.s32.totalorder %s155, %s157
      %p161 = scmp.eq.s32.totalorder %s25, 0
      %p162 = por %p160, %p161
      %p163 = scmp.ne.s32.totalorder %s155, %s157
      %p164 = scmp.eq.s32.totalorder %s30, 1
      %p165 = por %p163, %p164
      %p166 = scmp.ne.s32.totalorder %s157, %s158
      %p167 = scmp.eq.s32.totalorder %s30, 0
      %p168 = por %p166, %p167
      %p169 = scmp.ne.s32.totalorder %s157, %s158
      %p170 = scmp.eq.s32.totalorder %s31, 1
      %p171 = por %p169, %p170
      %p173 = scmp.ne.s32.totalorder %s158, %s172
      %p174 = scmp.eq.s32.totalorder %s31, 0
      %p175 = por %p173, %p174
      %s177 = sadd.s32 %s176, 1
      %p180 = scmp.eq.s32.totalorder %s25, 1
      %p181 = scmp.ne.s32.totalorder %s176, %s178
      %p182 = scmp.eq.s32.totalorder %s25, 0
      %p183 = por %p181, %p182
      %p184 = scmp.ne.s32.totalorder %s176, %s178
      %p185 = scmp.eq.s32.totalorder %s30, 1
      %p186 = por %p184, %p185
      %p187 = scmp.ne.s32.totalorder %s178, %s179
      %p188 = scmp.eq.s32.totalorder %s30, 0
      %p189 = por %p187, %p188
      %p190 = scmp.ne.s32.totalorder %s178, %s179
      %p191 = scmp.eq.s32.totalorder %s31, 1
      %p192 = por %p190, %p191
      %p194 = scmp.ne.s32.totalorder %s179, %s193
      %p195 = scmp.eq.s32.totalorder %s31, 0
      %p196 = por %p194, %p195
      %s198 = sadd.s32 %s197, 1
      %p201 = scmp.eq.s32.totalorder %s25, 1
      %p202 = scmp.ne.s32.totalorder %s197, %s199
      %p203 = scmp.eq.s32.totalorder %s25, 0
      %p204 = por %p202, %p203
      %p205 = scmp.ne.s32.totalorder %s197, %s199
      %p206 = scmp.eq.s32.totalorder %s30, 1
      %p207 = por %p205, %p206
      %p208 = scmp.ne.s32.totalorder %s199, %s200
      %p209 = scmp.eq.s32.totalorder %s30, 0
      %p210 = por %p208, %p209
      %p211 = scmp.ne.s32.totalorder %s199, %s200
      %p212 = scmp.eq.s32.totalorder %s31, 1
      %p213 = por %p211, %p212
      %p215 = scmp.ne.s32.totalorder %s200, %s214
      %p216 = scmp.eq.s32.totalorder %s31, 0
      %p217 = por %p215, %p216
      %s219 = sadd.s32 %s218, 1
      %p222 = scmp.eq.s32.totalorder %s25, 1
      %p223 = scmp.ne.s32.totalorder %s218, %s220
      %p224 = scmp.eq.s32.totalorder %s25, 0
      %p225 = por %p223, %p224
      %p226 = scmp.ne.s32.totalorder %s218, %s220
      %p227 = scmp.eq.s32.totalorder %s30, 1
      %p228 = por %p226, %p227
      %p229 = scmp.ne.s32.totalorder %s220, %s221
      %p230 = scmp.eq.s32.totalorder %s30, 0
      %p231 = por %p229, %p230
      %p232 = scmp.ne.s32.totalorder %s220, %s221
      %p233 = scmp.eq.s32.totalorder %s31, 1
      %p234 = por %p232, %p233
      %p236 = scmp.ne.s32.totalorder %s221, %s235
      %p237 = scmp.eq.s32.totalorder %s31, 0
      %p238 = por %p236, %p237
      %s240 = sadd.s32 %s239, 1
      %p243 = scmp.eq.s32.totalorder %s25, 1
      %p244 = scmp.ne.s32.totalorder %s239, %s241
      %p245 = scmp.eq.s32.totalorder %s25, 0
      %p246 = por %p244, %p245
      %p247 = scmp.ne.s32.totalorder %s239, %s241
      %p248 = scmp.eq.s32.totalorder %s30, 1
      %p249 = por %p247, %p248
      %p250 = scmp.ne.s32.totalorder %s241, %s242
      %p251 = scmp.eq.s32.totalorder %s30, 0
      %p252 = por %p250, %p251
      %p253 = scmp.ne.s32.totalorder %s241, %s242
      %p254 = scmp.eq.s32.totalorder %s31, 1
      %p255 = por %p253, %p254
      %p257 = scmp.ne.s32.totalorder %s242, %s256
      %p258 = scmp.eq.s32.totalorder %s31, 0
      %p259 = por %p257, %p258
      %s261 = sadd.s32 %s260, 1
      %p264 = scmp.eq.s32.totalorder %s25, 1
      %p265 = scmp.ne.s32.totalorder %s260, %s262
      %p266 = scmp.eq.s32.totalorder %s25, 0
      %p267 = por %p265, %p266
      %p268 = scmp.ne.s32.totalorder %s260, %s262
      %p269 = scmp.eq.s32.totalorder %s30, 1
      %p270 = por %p268, %p269
      %p271 = scmp.ne.s32.totalorder %s262, %s263
      %p272 = scmp.eq.s32.totalorder %s30, 0
      %p273 = por %p271, %p272
      %p274 = scmp.ne.s32.totalorder %s262, %s263
      %p275 = scmp.eq.s32.totalorder %s31, 1
      %p276 = por %p274, %p275
      %p278 = scmp.ne.s32.totalorder %s263, %s277
      %p279 = scmp.eq.s32.totalorder %s31, 0
      %p280 = por %p278, %p279
      %s282 = sadd.s32 %s281, 1
      %p285 = scmp.eq.s32.totalorder %s25, 1
      %p286 = scmp.ne.s32.totalorder %s281, %s283
      %p287 = scmp.eq.s32.totalorder %s25, 0
      %p288 = por %p286, %p287
      %p289 = scmp.ne.s32.totalorder %s281, %s283
      %p290 = scmp.eq.s32.totalorder %s30, 1
      %p291 = por %p289, %p290
      %p292 = scmp.ne.s32.totalorder %s283, %s284
      %p293 = scmp.eq.s32.totalorder %s30, 0
      %p294 = por %p292, %p293
      %p295 = scmp.ne.s32.totalorder %s283, %s284
      %p296 = scmp.eq.s32.totalorder %s31, 1
      %p297 = por %p295, %p296
      %p299 = scmp.ne.s32.totalorder %s284, %s298
      %p300 = scmp.eq.s32.totalorder %s31, 0
      %p301 = por %p299, %p300
      %s303 = sadd.s32 %s302, 1
      %p306 = scmp.eq.s32.totalorder %s25, 1
      %p307 = scmp.ne.s32.totalorder %s302, %s304
      %p308 = scmp.eq.s32.totalorder %s25, 0
      %p309 = por %p307, %p308
      %p310 = scmp.ne.s32.totalorder %s302, %s304
      %p311 = scmp.eq.s32.totalorder %s30, 1
      %p312 = por %p310, %p311
      %p313 = scmp.ne.s32.totalorder %s304, %s305
      %p314 = scmp.eq.s32.totalorder %s30, 0
      %p315 = por %p313, %p314
      %p316 = scmp.ne.s32.totalorder %s304, %s305
      %p317 = scmp.eq.s32.totalorder %s31, 1
      %p318 = por %p316, %p317
      %p320 = scmp.ne.s32.totalorder %s305, %s319
      %p321 = scmp.eq.s32.totalorder %s31, 0
      %p322 = por %p320, %p321
      %s324 = sadd.s32 %s323, 1
      %p327 = scmp.eq.s32.totalorder %s25, 1
      %p328 = scmp.ne.s32.totalorder %s323, %s325
      %p329 = scmp.eq.s32.totalorder %s25, 0
      %p330 = por %p328, %p329
      %p331 = scmp.ne.s32.totalorder %s323, %s325
      %p332 = scmp.eq.s32.totalorder %s30, 1
      %p333 = por %p331, %p332
      %p334 = scmp.ne.s32.totalorder %s325, %s326
      %p335 = scmp.eq.s32.totalorder %s30, 0
      %p336 = por %p334, %p335
      %p337 = scmp.ne.s32.totalorder %s325, %s326
      %p338 = scmp.eq.s32.totalorder %s31, 1
      %p339 = por %p337, %p338
      %p341 = scmp.ne.s32.totalorder %s326, %s340
      %p342 = scmp.eq.s32.totalorder %s31, 0
      %p343 = por %p341, %p342
      %s344 = ssub.s32 %s32, %s44
      %s345 = ssub.s32 %s33, %s40
      %s346 = sor.u32 %s344, %s345
      %p347 = scmp.eq.s32.totalorder %s346, 0
      %s349 = sadd.s32 %s348, 1
      %s350 = scalar_select %p347, %s348, %s349
      %p353 = pneg %p347
      %p354 = scmp.eq.s32.totalorder %s25, 1
      %p355 = por %p353, %p354
      %p356 = scmp.ne.s32.totalorder %s348, %s351
      %p357 = scmp.eq.s32.totalorder %s25, 0
      %p358 = por %p356, %p357
      %p359 = scmp.ne.s32.totalorder %s348, %s351
      %p360 = scmp.eq.s32.totalorder %s30, 1
      %p361 = por %p359, %p360
      %p362 = scmp.ne.s32.totalorder %s351, %s352
      %p363 = scmp.eq.s32.totalorder %s30, 0
      %p364 = por %p362, %p363
      %p365 = scmp.ne.s32.totalorder %s351, %s352
      %p366 = scmp.eq.s32.totalorder %s31, 1
      %p367 = por %p365, %p366
      %p369 = scmp.ne.s32.totalorder %s352, %s368
      %p370 = scmp.eq.s32.totalorder %s31, 0
      %p371 = por %p369, %p370
      %p372 = scmp.le.s32.totalorder 1, %s25
      %p373 = scmp.lt.s32.totalorder %s25, 3
      %p374 = pnand %p372, %p373
      %p375 = pneg %p374
      // Predicated region
      $region9: #{tpu_custom_call.1} parent=5 // pred_check
        _
      $region10: #{tpu_custom_call.1} parent=5 // pred_check_branch
        %377 = sbr.rel (%p374) target = $region12
      $region11: #{tpu_custom_call.1} parent=5 // pred_region
        %s378 = ssub.s32 %s25, 1
        // Predicated region
        $region13: #{tpu_custom_call.1} parent=11 // pred_check
          %p379 = pneg %p84
        $region14: #{tpu_custom_call.1} parent=11 // pred_check_branch
          %381 = sbr.rel (%p379) target = $region16
        $region15: #{tpu_custom_call.1} parent=11 // pred_region
          %383 = vsyncadd [#allocation6], 0
          %s385 = sshll.u32 %s1, 4
          %s386 = int_to_ptr.hbm [resolvable:$true] %s385
          %s387 = sshll.u32 [#allocation5], 4
          %s388 = int_to_ptr.vmem [resolvable:$true] %s387
          %390 = dma.hbm_to_vmem [thread:$0]  %s386, 16, %s388, [#allocation6]
        $region16: #{tpu_custom_call.1} parent=11 // pred_fallthru
          _
        // Predicated region
        $region17: #{tpu_custom_call.1} parent=11 // pred_check
          %p391 = pneg %p105
        $region18: #{tpu_custom_call.1} parent=11 // pred_check_branch
          %393 = sbr.rel (%p391) target = $region20
        $region19: #{tpu_custom_call.1} parent=11 // pred_region
          _
        $region20: #{tpu_custom_call.1} parent=11 // pred_fallthru
          _
        // Predicated region
        $region21: #{tpu_custom_call.1} parent=11 // pred_check
          %p394 = pneg %p126
        $region22: #{tpu_custom_call.1} parent=11 // pred_check_branch
          %396 = sbr.rel (%p394) target = $region24
        $region23: #{tpu_custom_call.1} parent=11 // pred_region
          _
        $region24: #{tpu_custom_call.1} parent=11 // pred_fallthru
          _
        // Predicated region
        $region25: #{tpu_custom_call.1} parent=11 // pred_check
          %p397 = pneg %p147
        $region26: #{tpu_custom_call.1} parent=11 // pred_check_branch
          %399 = sbr.rel (%p397) target = $region28
        $region27: #{tpu_custom_call.1} parent=11 // pred_region
          _
        $region28: #{tpu_custom_call.1} parent=11 // pred_fallthru
          _
        // Predicated region
        $region29: #{tpu_custom_call.1} parent=11 // pred_check
          %p400 = pneg %p168
        $region30: #{tpu_custom_call.1} parent=11 // pred_check_branch
          %402 = sbr.rel (%p400) target = $region32
        $region31: #{tpu_custom_call.1} parent=11 // pred_region
          _
        $region32: #{tpu_custom_call.1} parent=11 // pred_fallthru
          _
        // Predicated region
        $region33: #{tpu_custom_call.1} parent=11 // pred_check
          %p403 = pneg %p189
        $region34: #{tpu_custom_call.1} parent=11 // pred_check_branch
          %405 = sbr.rel (%p403) target = $region36
        $region35: #{tpu_custom_call.1} parent=11 // pred_region
          _
        $region36: #{tpu_custom_call.1} parent=11 // pred_fallthru
          _
        // Predicated region
        $region37: #{tpu_custom_call.1} parent=11 // pred_check
          %p406 = pneg %p210
        $region38: #{tpu_custom_call.1} parent=11 // pred_check_branch
          %408 = sbr.rel (%p406) target = $region40
        $region39: #{tpu_custom_call.1} parent=11 // pred_region
          _
        $region40: #{tpu_custom_call.1} parent=11 // pred_fallthru
          _
        // Predicated region
        $region41: #{tpu_custom_call.1} parent=11 // pred_check
          %p409 = pneg %p231
        $region42: #{tpu_custom_call.1} parent=11 // pred_check_branch
          %411 = sbr.rel (%p409) target = $region44
        $region43: #{tpu_custom_call.1} parent=11 // pred_region
          _
        $region44: #{tpu_custom_call.1} parent=11 // pred_fallthru
          _
        // Predicated region
        $region45: #{tpu_custom_call.1} parent=11 // pred_check
          %p412 = pneg %p252
        $region46: #{tpu_custom_call.1} parent=11 // pred_check_branch
          %414 = sbr.rel (%p412) target = $region48
        $region47: #{tpu_custom_call.1} parent=11 // pred_region
          _
        $region48: #{tpu_custom_call.1} parent=11 // pred_fallthru
          _
        // Predicated region
        $region49: #{tpu_custom_call.1} parent=11 // pred_check
          %p415 = pneg %p273
        $region50: #{tpu_custom_call.1} parent=11 // pred_check_branch
          %417 = sbr.rel (%p415) target = $region52
        $region51: #{tpu_custom_call.1} parent=11 // pred_region
          %419 = vsyncadd [#allocation9], 0
          %s420 = sshll.u32 %s10, 4
          %s421 = int_to_ptr.hbm [resolvable:$true] %s420
          %s422 = sshll.u32 [#allocation8], 4
          %s423 = int_to_ptr.vmem [resolvable:$true] %s422
          %428 = dma.hbm_to_vmem [thread:$0]  %s421, 256, %s423, [#allocation9], 64, 64, 4
        $region52: #{tpu_custom_call.1} parent=11 // pred_fallthru
          _
        // Predicated region
        $region53: #{tpu_custom_call.1} parent=11 // pred_check
          %p429 = pneg %p294
        $region54: #{tpu_custom_call.1} parent=11 // pred_check_branch
          %431 = sbr.rel (%p429) target = $region56
        $region55: #{tpu_custom_call.1} parent=11 // pred_region
          _
        $region56: #{tpu_custom_call.1} parent=11 // pred_fallthru
          _
        // Predicated region
        $region57: #{tpu_custom_call.1} parent=11 // pred_check
          %p432 = pneg %p315
        $region58: #{tpu_custom_call.1} parent=11 // pred_check_branch
          %434 = sbr.rel (%p432) target = $region60
        $region59: #{tpu_custom_call.1} parent=11 // pred_region
          _
        $region60: #{tpu_custom_call.1} parent=11 // pred_fallthru
          _
        // Predicated region
        $region61: #{tpu_custom_call.1} parent=11 // pred_check
          %p435 = pneg %p336
        $region62: #{tpu_custom_call.1} parent=11 // pred_check_branch
          %437 = sbr.rel (%p435) target = $region64
        $region63: #{tpu_custom_call.1} parent=11 // pred_region
          _
        $region64: #{tpu_custom_call.1} parent=11 // pred_fallthru
          _
      $region12: #{tpu_custom_call.1} parent=5 // pred_fallthru
        _
      %p438 = scmp.lt.s32.totalorder %s25, 2
      // Predicated region
      $region65: #{tpu_custom_call.1} parent=5 // pred_check
        %p439 = pneg %p438
      $region66: #{tpu_custom_call.1} parent=5 // pred_check_branch
        %441 = sbr.rel (%p439) target = $region68
      $region67: #{tpu_custom_call.1} parent=5 // pred_region
        // Predicated region
        $region69: #{tpu_custom_call.1} parent=67 // pred_check
          %p442 = pneg %p57
        $region70: #{tpu_custom_call.1} parent=67 // pred_check_branch
          %444 = sbr.rel (%p442) target = $region72
        $region71: #{tpu_custom_call.1} parent=67 // pred_region
          %p445 = scmp.lt.s32.totalorder %s32, 1
          %s446 = scalar_select %p445, %s32, 1
          %s447 = smul.addr %s446, 8
          %s448 = scalar_lea.vmem %s0, %s447
        $region72: #{tpu_custom_call.1} parent=67 // pred_fallthru
          _
      $region68: #{tpu_custom_call.1} parent=5 // pred_fallthru
        _
      %p449 = scmp.le.s32.totalorder 1, %s25
      %p450 = scmp.lt.s32.totalorder %s25, 3
      %p451 = pnand %p449, %p450
      %p452 = pneg %p451
      // Predicated region
      $region73: #{tpu_custom_call.1} parent=5 // pred_check
        _
      $region74: #{tpu_custom_call.1} parent=5 // pred_check_branch
        %454 = sbr.rel (%p451) target = $region76
      $region75: #{tpu_custom_call.1} parent=5 // pred_region
        %s455 = ssub.s32 %s25, 1
        // Predicated region
        $region77: #{tpu_custom_call.1} parent=75 // pred_check
          %p456 = pneg %p84
        $region78: #{tpu_custom_call.1} parent=75 // pred_check_branch
          %458 = sbr.rel (%p456) target = $region80
        $region79: #{tpu_custom_call.1} parent=75 // pred_region
          %460 = dma.done [#allocation6], 16
        $region80: #{tpu_custom_call.1} parent=75 // pred_fallthru
          _
        // Predicated region
        $region81: #{tpu_custom_call.1} parent=75 // pred_check
          %p461 = pneg %p273
        $region82: #{tpu_custom_call.1} parent=75 // pred_check_branch
          %463 = sbr.rel (%p461) target = $region84
        $region83: #{tpu_custom_call.1} parent=75 // pred_region
          %465 = dma.done [#allocation9], 256
        $region84: #{tpu_custom_call.1} parent=75 // pred_fallthru
          _
        %p466 = scmp.lt.s32.totalorder %s34, 1
        %s467 = scalar_select %p466, %s34, 1
        %s468 = smul.addr %s467, 8
        %s469 = scalar_lea.vmem %s0, %s468
        %p470 = pneg %p63
        %p471 = pneg %p60
        %p472 = pneg %p84
        %p473 = pneg %p81
        %p474 = pneg %p105
        %p475 = pneg %p102
        %p476 = pneg %p126
        %p477 = pneg %p123
        %p478 = pneg %p147
        %p479 = pneg %p144
        %p480 = pneg %p168
        %p481 = pneg %p165
        %p482 = pneg %p189
        %p483 = pneg %p186
        %p484 = pneg %p210
        %p485 = pneg %p207
        %p486 = pneg %p231
        %p487 = pneg %p228
        %p488 = pneg %p252
        %p489 = pneg %p249
        %p490 = pneg %p273
        %p491 = pneg %p270
        %p492 = pneg %p294
        %p493 = pneg %p291
        %p494 = pneg %p315
        %p495 = pneg %p312
        %p496 = pneg %p336
        %p497 = pneg %p333
        %p498 = pneg %p364
        %p499 = pneg %p361
        %s500 = sand.u32 %s351, 1
        %s501 = scalar_lea.sflag [#allocation7], %s500
        %s502 = sand.u32 %s351, 1
        %s503 = smul.addr %s502, 8
        %s504 = scalar_lea.vmem [#allocation10], %s503
        %p505 = scmp.lt.s32.totalorder %s34, 1
        %s506 = scalar_select %p505, %s34, 1
        %s507 = smul.addr %s506, 8
        %s508 = scalar_lea.vmem %s0, %s507
        %p510 = scmp.eq.s32.totalorder %s35, 0
        // Predicated region
        $region85: #{tpu_custom_call.1} parent=75 // pred_check
          %p511 = pneg %p510
        $region86: #{tpu_custom_call.1} parent=75 // pred_check_branch
          %513 = sbr.rel (%p511) target = $region88
        $region87: #{tpu_custom_call.1} parent=75 // pred_region
          %v514 = vld [vmem:[%s508] sm:$0xff]
          %v515 = vld [vmem:[#allocation5] sm:$0x1]
          %v516 = vld [vmem:[%s2] sm:$0x1]
          %vm517 = vcmask 261120
          %v518 = vsel %vm517, %v514, 0.0
          %519 = vadd.xlane.f32.xlu0 %v518
          %v520 = vpop.xlane.xlu0 %519
          %v521 = vrcp.pop 32.0
          %v522 = vmul.f32 32.0, %v521
          %v523 = vsub.f32 1.0, %v522
          %v524 = vmul.f32 %v521, %v523
          %v525 = vadd.f32 %v521, %v524
          %vm526 = vweird.f32 %v521
          %v527 = vsel %vm526, %v521, %v525
          %v528 = vmul.f32 %v520, %v527
          %v529 = vsub.f32 %v514, %v528
          %v530 = vmul.f32 %v529, %v529
          %v531 = vsel %vm517, %v530, 0.0
          %532 = vadd.xlane.f32.xlu0 %v531
          %v533 = vpop.xlane.xlu0 %532
          %v534 = vmul.f32 %v533, %v527
          %v535 = vadd.f32 %v534, 1e-05
          %v536 = vrsqrt.pop %v535
          %v537 = vmul.f32 %v536, %v535
          %v538 = vmul.f32 %v537, %v536
          %v539 = vmul.f32 0.5, %v538
          %v540 = vsub.f32 1.5, %v539
          %v541 = vmul.f32 %v536, %v540
          %vm542 = vweird.f32 %v535
          %vm543 = vweird.f32 %v536
          %vm544 = vmor %vm542, %vm543
          %v545 = vsel %vm544, %v536, %v541
          %v546 = vmul.f32 %v529, %v545
          %v548 = vperm.slane %v515, 0
          %v550 = vmul.f32 %v546, %v548
          %v552 = vperm.slane %v516, 0
          %v554 = vadd.f32 %v550, %v552
          %v555 = vpack.c.bf16 %v554, %v554
          %vm556 = vcmask 257024
          %557 = vst.msk [vmem:[#allocation2] sm:$0xf] %vm556, %v555
          %v558 = vld [vmem:[%s4] sm:$0xf]
          %v559 = vld [vmem:[%s4 + $0x4] sm:$0xf]
          %v560 = vld [vmem:[%s4 + $0x8] sm:$0xf]
          %v561 = vld [vmem:[%s4 + $0xc] sm:$0xf]
          %v566 = vunpack.c.l.b16 %v558
          %v567 = vunpack.c.l.b16 %v559
          %v568 = vunpack.c.l.b16 %v560
          %v569 = vunpack.c.l.b16 %v561
          %v570 = vpack.c.b16 %v567, %v566
          %v571 = vpack.c.b16 %v569, %v568
          %v573 = vsel %vm517, %v570, 0
          %v576 = vsel %vm517, %v571, 0
          %v579 = vsel %vm517, %v555, 0
          %581 = vmatpush.bf16.xpose.msra.mxu0 0
          %582 = vmatpush.bf16.xpose.msra.mxu0 0
          %583 = vmatpush.bf16.xpose.msra.mxu0 0
          %584 = vmatpush.bf16.xpose.msra.mxu0 0
          %585 = vmatpush.bf16.xpose.msra.mxu0 0
          %586 = vmatpush.bf16.xpose.msra.mxu0 0
          %587 = vmatpush.bf16.xpose.msra.mxu0 0
          %588 = vmatpush.bf16.xpose.msra.mxu0 %v579
          %589 = vmatmul.bf16.gmra.mxu0 %v573
          %v590 = vpop.f32.mrf.mxu0
          %v591 = vadd.f32 0.0, %v590
          %v592 = vpop.f32.mrf.mxu0
          %v593 = vadd.f32 0.0, %v592
          %594 = vmatmul.bf16.gmra.mxu0 %v576
          %v595 = vpop.f32.mrf.mxu0
          %v596 = vadd.f32 0.0, %v595
          %v597 = vpop.f32.mrf.mxu0
          %v598 = vadd.f32 0.0, %v597
          %599 = vdwg.mxu0
          %v600 = vld [vmem:[%s5] sm:$0xf]
          %v601 = vld [vmem:[%s5 + $0x4] sm:$0xf]
          %v602 = vld [vmem:[%s5 + $0x8] sm:$0xf]
          %v603 = vld [vmem:[%s5 + $0xc] sm:$0xf]
          %v608 = vunpack.c.l.b16 %v600
          %v609 = vunpack.c.l.b16 %v601
          %v610 = vunpack.c.l.b16 %v602
          %v611 = vunpack.c.l.b16 %v603
          %v612 = vpack.c.b16 %v609, %v608
          %v613 = vpack.c.b16 %v611, %v610
          %v615 = vsel %vm517, %v612, 0
          %v618 = vsel %vm517, %v613, 0
          %620 = vmatpush.bf16.xpose.msra.mxu0 0
          %621 = vmatpush.bf16.xpose.msra.mxu0 0
          %622 = vmatpush.bf16.xpose.msra.mxu0 0
          %623 = vmatpush.bf16.xpose.msra.mxu0 0
          %624 = vmatpush.bf16.xpose.msra.mxu0 0
          %625 = vmatpush.bf16.xpose.msra.mxu0 0
          %626 = vmatpush.bf16.xpose.msra.mxu0 0
          %627 = vmatpush.bf16.xpose.msra.mxu0 %v579
          %628 = vmatmul.bf16.gmra.mxu0 %v615
          %v629 = vpop.f32.mrf.mxu0
          %v630 = vadd.f32 0.0, %v629
          %v631 = vpop.f32.mrf.mxu0
          %v632 = vadd.f32 0.0, %v631
          %633 = vmatmul.bf16.gmra.mxu0 %v618
          %v634 = vpop.f32.mrf.mxu0
          %v635 = vadd.f32 0.0, %v634
          %v636 = vpop.f32.mrf.mxu0
          %v637 = vadd.f32 0.0, %v636
          %638 = vdwg.mxu0
          %v639 = vpack.c.bf16 %v591, %v591
          %v640 = vpack.c.bf16 %v593, %v593
          %v641 = vpack.c.bf16 %v596, %v596
          %v642 = vpack.c.bf16 %v598, %v598
          %v643 = vpack.c.bf16 %v630, %v630
          %v644 = vpack.c.bf16 %v632, %v632
          %v645 = vpack.c.bf16 %v635, %v635
          %v646 = vpack.c.bf16 %v637, %v637
          %vm647 = vcmask 60416
          %648 = vst.msk [vmem:[#allocation3] sm:$0xf] %vm647, %v639
          %649 = vst.msk [vmem:[#allocation4] sm:$0xf] %vm647, %v643
          %s650 = scalar_lea.vmem [#allocation3], 4
          %651 = vst.msk [vmem:[%s650] sm:$0xf] %vm647, %v640
          %s652 = scalar_lea.vmem [#allocation4], 4
          %653 = vst.msk [vmem:[%s652] sm:$0xf] %vm647, %v644
          %s654 = scalar_lea.vmem [#allocation3], 8
          %655 = vst.msk [vmem:[%s654] sm:$0xf] %vm647, %v641
          %s656 = scalar_lea.vmem [#allocation4], 8
          %657 = vst.msk [vmem:[%s656] sm:$0xf] %vm647, %v645
          %s658 = scalar_lea.vmem [#allocation3], 12
          %659 = vst.msk [vmem:[%s658] sm:$0xf] %vm647, %v642
          %s660 = scalar_lea.vmem [#allocation4], 12
          %661 = vst.msk [vmem:[%s660] sm:$0xf] %vm647, %v646
        $region88: #{tpu_custom_call.1} parent=75 // pred_fallthru
          _
        %s662 = smul.u32 %s35, 8
        %s663 = scalar_lea.vmem %s508, %s662
        %v664 = vld [vmem:[%s663] sm:$0xff]
        %s665 = sshra.s32 %s662, 3
        %s666 = sand.u32 %s662, 7
        %s667 = smul.addr %s665, 4
        %s668 = scalar_lea.vmem [#allocation2], %s667
        %v669 = vld [vmem:[%s668] sm:$0xf]
        %v670 = vld [vmem:[%s3] sm:$0xf]
        %v671 = vld [vmem:[%s3 + $0x4] sm:$0xf]
        %v672 = vld [vmem:[%s3 + $0x8] sm:$0xf]
        %v673 = vld [vmem:[%s3 + $0xc] sm:$0xf]
        %v678 = vunpack.c.l.b16 %v670
        %v679 = vunpack.c.l.b16 %v671
        %v680 = vunpack.c.l.b16 %v672
        %v681 = vunpack.c.l.b16 %v673
        %v682 = vpack.c.b16 %v679, %v678
        %v683 = vpack.c.b16 %v681, %v680
        %vm686 = vcmask 261120
        %v688 = vsel %vm686, %v669, 0
        %690 = vmatpush.bf16.msra.mxu0 0
        %691 = vmatpush.bf16.msra.mxu0 0
        %692 = vmatpush.bf16.msra.mxu0 0
        %693 = vmatpush.bf16.msra.mxu0 0
        %694 = vmatpush.bf16.msra.mxu0 0
        %695 = vmatpush.bf16.msra.mxu0 0
        %696 = vmatpush.bf16.msra.mxu0 %v683
        %697 = vmatpush.bf16.msra.mxu0 %v682
        %698 = vmatmul.bf16.gmra.mxu0 %v688
        %v699 = vpop.f32.mrf.mxu0
        %v700 = vadd.f32 0.0, %v699
        %v701 = vpop.f32.mrf.mxu0
        %702 = vdwg.mxu0
        %v703 = vmul.f32 %v700, 0.35355338
        %v704 = vpack.c.bf16 %v703, %v703
        %706 = vrot.lane.b32.xlu0 %v704, 120
        %v707 = vpop.permute.xlu0 %706
        %708 = vrot.lane.b32.xlu0 %v704, 112
        %v709 = vpop.permute.xlu0 %708
        %710 = vrot.lane.b32.xlu0 %v704, 104
        %v711 = vpop.permute.xlu0 %710
        %v712 = vld [vmem:[#allocation3] sm:$0xf]
        %v713 = vld [vmem:[#allocation3 + $0x4] sm:$0xf]
        %v714 = vld [vmem:[#allocation3 + $0x8] sm:$0xf]
        %v715 = vld [vmem:[#allocation3 + $0xc] sm:$0xf]
        %vm716 = vcmask 64512
        %v718 = vsel %vm716, %v704, 0
        %vm720 = vcmask 1043456
        %v722 = vsel %vm720, %v712, 0
        %724 = vmatpush.bf16.msra.mxu0 0
        %725 = vmatpush.bf16.msra.mxu0 0
        %726 = vmatpush.bf16.msra.mxu0 0
        %727 = vmatpush.bf16.msra.mxu0 0
        %728 = vmatpush.bf16.msra.mxu0 0
        %729 = vmatpush.bf16.msra.mxu0 0
        %730 = vmatpush.bf16.msra.mxu0 0
        %731 = vmatpush.bf16.msra.mxu0 %v722
        %732 = vmatmul.bf16.gmra.mxu0 %v718
        %v733 = vpop.f32.mrf.mxu0
        %v734 = vadd.f32 0.0, %v733
        %v735 = vpop.f32.mrf.mxu0
        %736 = vdwg.mxu0
        %v738 = vsel %vm716, %v707, 0
        %v741 = vsel %vm720, %v713, 0
        %743 = vmatpush.bf16.msra.mxu0 0
        %744 = vmatpush.bf16.msra.mxu0 0
        %745 = vmatpush.bf16.msra.mxu0 0
        %746 = vmatpush.bf16.msra.mxu0 0
        %747 = vmatpush.bf16.msra.mxu0 0
        %748 = vmatpush.bf16.msra.mxu0 0
        %749 = vmatpush.bf16.msra.mxu0 0
        %750 = vmatpush.bf16.msra.mxu0 %v741
        %751 = vmatmul.bf16.gmra.mxu0 %v738
        %v752 = vpop.f32.mrf.mxu0
        %v753 = vadd.f32 0.0, %v752
        %v754 = vpop.f32.mrf.mxu0
        %755 = vdwg.mxu0
        %v757 = vsel %vm716, %v709, 0
        %v760 = vsel %vm720, %v714, 0
        %762 = vmatpush.bf16.msra.mxu0 0
        %763 = vmatpush.bf16.msra.mxu0 0
        %764 = vmatpush.bf16.msra.mxu0 0
        %765 = vmatpush.bf16.msra.mxu0 0
        %766 = vmatpush.bf16.msra.mxu0 0
        %767 = vmatpush.bf16.msra.mxu0 0
        %768 = vmatpush.bf16.msra.mxu0 0
        %769 = vmatpush.bf16.msra.mxu0 %v760
        %770 = vmatmul.bf16.gmra.mxu0 %v757
        %v771 = vpop.f32.mrf.mxu0
        %v772 = vadd.f32 0.0, %v771
        %v773 = vpop.f32.mrf.mxu0
        %774 = vdwg.mxu0
        %v776 = vsel %vm716, %v711, 0
        %v779 = vsel %vm720, %v715, 0
        %781 = vmatpush.bf16.msra.mxu0 0
        %782 = vmatpush.bf16.msra.mxu0 0
        %783 = vmatpush.bf16.msra.mxu0 0
        %784 = vmatpush.bf16.msra.mxu0 0
        %785 = vmatpush.bf16.msra.mxu0 0
        %786 = vmatpush.bf16.msra.mxu0 0
        %787 = vmatpush.bf16.msra.mxu0 0
        %788 = vmatpush.bf16.msra.mxu0 %v779
        %789 = vmatmul.bf16.gmra.mxu0 %v776
        %v790 = vpop.f32.mrf.mxu0
        %v791 = vadd.f32 0.0, %v790
        %v792 = vpop.f32.mrf.mxu0
        %793 = vdwg.mxu0
        %v794 = vsel %vm716, %v734, -inf
        %795 = vmax.xlane.f32.xlu0 %v794
        %v796 = vpop.xlane.xlu0 %795
        %v797 = vsel %vm716, %v753, -inf
        %798 = vmax.xlane.f32.xlu0 %v797
        %v799 = vpop.xlane.xlu0 %798
        %v800 = vsel %vm716, %v772, -inf
        %801 = vmax.xlane.f32.xlu0 %v800
        %v802 = vpop.xlane.xlu0 %801
        %v803 = vsel %vm716, %v791, -inf
        %804 = vmax.xlane.f32.xlu0 %v803
        %v805 = vpop.xlane.xlu0 %804
        %v806 = vsub.f32 %v734, %v796
        %v807 = vsub.f32 %v753, %v799
        %v808 = vsub.f32 %v772, %v802
        %v809 = vsub.f32 %v791, %v805
        %v810 = vmul.f32 %v806, 1.442695
        %v811 = vpow.pop %v810
        %v812 = vmul.f32 %v807, 1.442695
        %v813 = vpow.pop %v812
        %v814 = vmul.f32 %v808, 1.442695
        %v815 = vpow.pop %v814
        %v816 = vmul.f32 %v809, 1.442695
        %v817 = vpow.pop %v816
        %v818 = vsel %vm716, %v811, 0.0
        %819 = vadd.xlane.f32.xlu0 %v818
        %v820 = vpop.xlane.xlu0 %819
        %v821 = vsel %vm716, %v813, 0.0
        %822 = vadd.xlane.f32.xlu0 %v821
        %v823 = vpop.xlane.xlu0 %822
        %v824 = vsel %vm716, %v815, 0.0
        %825 = vadd.xlane.f32.xlu0 %v824
        %v826 = vpop.xlane.xlu0 %825
        %v827 = vsel %vm716, %v817, 0.0
        %828 = vadd.xlane.f32.xlu0 %v827
        %v829 = vpop.xlane.xlu0 %828
        %v830 = vpack.c.bf16 %v811, %v811
        %v831 = vpack.c.bf16 %v813, %v813
        %v832 = vpack.c.bf16 %v815, %v815
        %v833 = vpack.c.bf16 %v817, %v817
        %v834 = vld [vmem:[#allocation4] sm:$0xf]
        %v835 = vld [vmem:[#allocation4 + $0x4] sm:$0xf]
        %v836 = vld [vmem:[#allocation4 + $0x8] sm:$0xf]
        %v837 = vld [vmem:[#allocation4 + $0xc] sm:$0xf]
        %v839 = vsel %vm716, %v830, 0
        %v842 = vsel %vm716, %v834, 0
        %844 = vmatpush.bf16.xpose.msra.mxu0 0
        %845 = vmatpush.bf16.xpose.msra.mxu0 0
        %846 = vmatpush.bf16.xpose.msra.mxu0 0
        %847 = vmatpush.bf16.xpose.msra.mxu0 0
        %848 = vmatpush.bf16.xpose.msra.mxu0 0
        %849 = vmatpush.bf16.xpose.msra.mxu0 0
        %850 = vmatpush.bf16.xpose.msra.mxu0 0
        %851 = vmatpush.bf16.xpose.msra.mxu0 %v842
        %852 = vmatmul.bf16.gmra.mxu0 %v839
        %v853 = vpop.f32.mrf.mxu0
        %v854 = vadd.f32 0.0, %v853
        %v855 = vpop.f32.mrf.mxu0
        %856 = vdwg.mxu0
        %v858 = vsel %vm716, %v831, 0
        %v861 = vsel %vm716, %v835, 0
        %863 = vmatpush.bf16.xpose.msra.mxu0 0
        %864 = vmatpush.bf16.xpose.msra.mxu0 0
        %865 = vmatpush.bf16.xpose.msra.mxu0 0
        %866 = vmatpush.bf16.xpose.msra.mxu0 0
        %867 = vmatpush.bf16.xpose.msra.mxu0 0
        %868 = vmatpush.bf16.xpose.msra.mxu0 0
        %869 = vmatpush.bf16.xpose.msra.mxu0 0
        %870 = vmatpush.bf16.xpose.msra.mxu0 %v861
        %871 = vmatmul.bf16.gmra.mxu0 %v858
        %v872 = vpop.f32.mrf.mxu0
        %v873 = vadd.f32 0.0, %v872
        %v874 = vpop.f32.mrf.mxu0
        %875 = vdwg.mxu0
        %v877 = vsel %vm716, %v832, 0
        %v880 = vsel %vm716, %v836, 0
        %882 = vmatpush.bf16.xpose.msra.mxu0 0
        %883 = vmatpush.bf16.xpose.msra.mxu0 0
        %884 = vmatpush.bf16.xpose.msra.mxu0 0
        %885 = vmatpush.bf16.xpose.msra.mxu0 0
        %886 = vmatpush.bf16.xpose.msra.mxu0 0
        %887 = vmatpush.bf16.xpose.msra.mxu0 0
        %888 = vmatpush.bf16.xpose.msra.mxu0 0
        %889 = vmatpush.bf16.xpose.msra.mxu0 %v880
        %890 = vmatmul.bf16.gmra.mxu0 %v877
        %v891 = vpop.f32.mrf.mxu0
        %v892 = vadd.f32 0.0, %v891
        %v893 = vpop.f32.mrf.mxu0
        %894 = vdwg.mxu0
        %v896 = vsel %vm716, %v833, 0
        %v899 = vsel %vm716, %v837, 0
        %901 = vmatpush.bf16.xpose.msra.mxu0 0
        %902 = vmatpush.bf16.xpose.msra.mxu0 0
        %903 = vmatpush.bf16.xpose.msra.mxu0 0
        %904 = vmatpush.bf16.xpose.msra.mxu0 0
        %905 = vmatpush.bf16.xpose.msra.mxu0 0
        %906 = vmatpush.bf16.xpose.msra.mxu0 0
        %907 = vmatpush.bf16.xpose.msra.mxu0 0
        %908 = vmatpush.bf16.xpose.msra.mxu0 %v899
        %909 = vmatmul.bf16.gmra.mxu0 %v896
        %v910 = vpop.f32.mrf.mxu0
        %v911 = vadd.f32 0.0, %v910
        %v912 = vpop.f32.mrf.mxu0
        %913 = vdwg.mxu0
        %v914 = vrcp.pop %v820
        %v915 = vrcp.pop %v823
        %v916 = vrcp.pop %v826
        %v917 = vrcp.pop %v829
        %v918 = vmul.f32 %v854, %v914
        %v919 = vmul.f32 %v873, %v915
        %v920 = vmul.f32 %v892, %v916
        %v921 = vmul.f32 %v911, %v917
        %v922 = vrot.slane %v920, 4
        %vm923 = vcmask 1047556
        %v924 = vsel %vm923, %v922, %v918
        %v925 = vrot.slane %v918, 4
        %v926 = vsel %vm923, %v920, %v925
        %v928 = vunpack.c.l.s4 1983009808
        %v929 = vunpack.c.0.s8 %v928
        %v930 = vperm.slane %v924, %v929
        %v932 = vunpack.c.l.s4 1983009808
        %v933 = vunpack.c.0.s8 %v932
        %v934 = vperm.slane %v926, %v933
        %v935 = vrot.slane %v921, 4
        %v936 = vsel %vm923, %v935, %v919
        %v937 = vrot.slane %v919, 4
        %v938 = vsel %vm923, %v921, %v937
        %v940 = vunpack.c.l.s4 1983009808
        %v941 = vunpack.c.0.s8 %v940
        %v942 = vperm.slane %v936, %v941
        %v944 = vunpack.c.l.s4 1983009808
        %v945 = vunpack.c.0.s8 %v944
        %v946 = vperm.slane %v938, %v945
        %v947 = vrot.slane %v942, 4
        %v948 = vsel %vm923, %v947, %v930
        %v949 = vrot.slane %v930, 4
        %v950 = vsel %vm923, %v942, %v949
        %v952 = vunpack.c.l.s4 1934713408
        %v953 = vunpack.c.0.s8 %v952
        %v954 = vperm.slane %v948, %v953
        %v956 = vunpack.c.l.s4 1934713408
        %v957 = vunpack.c.0.s8 %v956
        %v958 = vperm.slane %v950, %v957
        %v959 = vrot.slane %v946, 4
        %v960 = vsel %vm923, %v959, %v934
        %v961 = vrot.slane %v934, 4
        %v962 = vsel %vm923, %v946, %v961
        %v964 = vunpack.c.l.s4 1934713408
        %v965 = vunpack.c.0.s8 %v964
        %v966 = vperm.slane %v960, %v965
        %v968 = vunpack.c.l.s4 1934713408
        %v969 = vunpack.c.0.s8 %v968
        %v970 = vperm.slane %v962, %v969
        %v971 = vrot.slane %v954, 4
        %v972 = vsel %vm923, 0.0, %v971
        %v973 = vrot.slane %v958, 4
        %v974 = vsel %vm923, 0.0, %v973
        %v975 = vrot.slane %v966, 4
        %v976 = vsel %vm923, 0.0, %v975
        %v977 = vrot.slane %v970, 4
        %v978 = vsel %vm923, 0.0, %v977
        %v979 = vsel %vm923, %v973, %v954
        %v981 = vunpack.c.l.s4 1983009808
        %v982 = vunpack.c.0.s8 %v981
        %v983 = vperm.slane %v979, %v982
        %v984 = vrot.slane %v974, 4
        %v985 = vsel %vm923, %v984, %v972
        %v987 = vunpack.c.l.s4 1983009808
        %v988 = vunpack.c.0.s8 %v987
        %v989 = vperm.slane %v985, %v988
        %v990 = vsel %vm923, %v977, %v966
        %v992 = vunpack.c.l.s4 1983009808
        %v993 = vunpack.c.0.s8 %v992
        %v994 = vperm.slane %v990, %v993
        %v995 = vrot.slane %v978, 4
        %v996 = vsel %vm923, %v995, %v976
        %v998 = vunpack.c.l.s4 1983009808
        %v999 = vunpack.c.0.s8 %v998
        %v1000 = vperm.slane %v996, %v999
        %v1001 = vrot.slane %v989, 4
        %v1002 = vsel %vm923, %v1001, %v983
        %v1003 = vrot.slane %v983, 4
        %v1004 = vsel %vm923, %v989, %v1003
        %v1006 = vunpack.c.l.s4 1934713408
        %v1007 = vunpack.c.0.s8 %v1006
        %v1008 = vperm.slane %v1002, %v1007
        %v1010 = vunpack.c.l.s4 1934713408
        %v1011 = vunpack.c.0.s8 %v1010
        %v1012 = vperm.slane %v1004, %v1011
        %v1013 = vrot.slane %v1000, 4
        %v1014 = vsel %vm923, %v1013, %v994
        %v1015 = vrot.slane %v994, 4
        %v1016 = vsel %vm923, %v1000, %v1015
        %v1018 = vunpack.c.l.s4 1934713408
        %v1019 = vunpack.c.0.s8 %v1018
        %v1020 = vperm.slane %v1014, %v1019
        %v1022 = vunpack.c.l.s4 1934713408
        %v1023 = vunpack.c.0.s8 %v1022
        %v1024 = vperm.slane %v1016, %v1023
        %v1025 = vrot.slane %v1020, 4
        %v1026 = vsel %vm923, %v1025, %v1008
        %v1027 = vrot.slane %v1008, 4
        %v1028 = vsel %vm923, %v1020, %v1027
        %v1029 = vrot.slane %v1024, 4
        %v1030 = vsel %vm923, %v1029, %v1012
        %v1031 = vrot.slane %v1012, 4
        %v1032 = vsel %vm923, %v1024, %v1031
        %1034 = vrot.lane.b32.xlu0 %v1028, 8
        %v1035 = vpop.permute.xlu0 %1034
        %1038 = vrot.lane.b32.xlu0 %v1030, 16
        %v1039 = vpop.permute.xlu0 %1038
        %1042 = vrot.lane.b32.xlu0 %v1032, 24
        %v1043 = vpop.permute.xlu0 %1042
        %v1045 = vsel %vm716, %v1026, %v1035
        %vm1046 = vcmask 130048
        %v1047 = vsel %vm1046, %v1045, %v1039
        %vm1048 = vcmask 195584
        %v1049 = vsel %vm1048, %v1047, %v1043
        %v1050 = vpack.c.bf16 %v1049, %v1049
        %v1051 = vld [vmem:[%s6] sm:$0xf]
        %v1052 = vld [vmem:[%s6 + $0x4] sm:$0xf]
        %v1053 = vld [vmem:[%s6 + $0x8] sm:$0xf]
        %v1054 = vld [vmem:[%s6 + $0xc] sm:$0xf]
        %v1055 = vld [vmem:[%s7] sm:$0x1]
        %v1057 = vperm.slane %v1055, 0
        %v1063 = vunpack.c.l.b16 %v1051
        %v1064 = vunpack.c.l.b16 %v1052
        %v1065 = vunpack.c.l.b16 %v1053
        %v1066 = vunpack.c.l.b16 %v1054
        %v1067 = vpack.c.b16 %v1064, %v1063
        %v1068 = vpack.c.b16 %v1066, %v1065
        %v1072 = vsel %vm686, %v1050, 0
        %1074 = vmatpush.bf16.msra.mxu0 0
        %1075 = vmatpush.bf16.msra.mxu0 0
        %1076 = vmatpush.bf16.msra.mxu0 0
        %1077 = vmatpush.bf16.msra.mxu0 0
        %1078 = vmatpush.bf16.msra.mxu0 0
        %1079 = vmatpush.bf16.msra.mxu0 0
        %1080 = vmatpush.bf16.msra.mxu0 %v1068
        %1081 = vmatpush.bf16.msra.mxu0 %v1067
        %1082 = vmatmul.bf16.gmra.mxu0 %v1072
        %v1083 = vpop.f32.mrf.mxu0
        %v1084 = vadd.f32 %v1057, %v1083
        %v1085 = vpop.f32.mrf.mxu0
        %1086 = vdwg.mxu0
        %v1087 = vadd.f32 %v664, %v1084
        %v1088 = vld [vmem:[%s8] sm:$0x1]
        %v1089 = vld [vmem:[%s9] sm:$0x1]
        %v1090 = vsel %vm686, %v1087, 0.0
        %1091 = vadd.xlane.f32.xlu0 %v1090
        %v1092 = vpop.xlane.xlu0 %1091
        %v1093 = vrcp.pop 32.0
        %v1094 = vmul.f32 32.0, %v1093
        %v1095 = vsub.f32 1.0, %v1094
        %v1096 = vmul.f32 %v1093, %v1095
        %v1097 = vadd.f32 %v1093, %v1096
        %vm1098 = vweird.f32 %v1093
        %v1099 = vsel %vm1098, %v1093, %v1097
        %v1100 = vmul.f32 %v1092, %v1099
        %v1101 = vsub.f32 %v1087, %v1100
        %v1102 = vmul.f32 %v1101, %v1101
        %v1103 = vsel %vm686, %v1102, 0.0
        %1104 = vadd.xlane.f32.xlu0 %v1103
        %v1105 = vpop.xlane.xlu0 %1104
        %v1106 = vmul.f32 %v1105, %v1099
        %v1107 = vadd.f32 %v1106, 1e-05
        %v1108 = vrsqrt.pop %v1107
        %v1109 = vmul.f32 %v1108, %v1107
        %v1110 = vmul.f32 %v1109, %v1108
        %v1111 = vmul.f32 0.5, %v1110
        %v1112 = vsub.f32 1.5, %v1111
        %v1113 = vmul.f32 %v1108, %v1112
        %vm1114 = vweird.f32 %v1107
        %vm1115 = vweird.f32 %v1108
        %vm1116 = vmor %vm1114, %vm1115
        %v1117 = vsel %vm1116, %v1108, %v1113
        %v1118 = vmul.f32 %v1101, %v1117
        %v1120 = vperm.slane %v1088, 0
        %v1122 = vmul.f32 %v1118, %v1120
        %v1124 = vperm.slane %v1089, 0
        %v1126 = vadd.f32 %v1122, %v1124
        %v1127 = vpack.c.bf16 %v1126, %v1126
        %v1128 = vld [vmem:[#allocation8] sm:$0xf]
        %v1129 = vld [vmem:[#allocation8 + $0x4] sm:$0xf]
        %v1130 = vld [vmem:[#allocation8 + $0x8] sm:$0xf]
        %v1131 = vld [vmem:[#allocation8 + $0xc] sm:$0xf]
        %v1132 = vld [vmem:[%s11] sm:$0x1]
        %v1134 = vperm.slane %v1132, 0
        %v1140 = vunpack.c.l.b16 %v1128
        %v1141 = vunpack.c.l.b16 %v1129
        %v1142 = vunpack.c.l.b16 %v1130
        %v1143 = vunpack.c.l.b16 %v1131
        %v1144 = vpack.c.b16 %v1141, %v1140
        %v1145 = vpack.c.b16 %v1143, %v1142
        %v1149 = vsel %vm686, %v1127, 0
        %1151 = vmatpush.bf16.msra.mxu0 0
        %1152 = vmatpush.bf16.msra.mxu0 0
        %1153 = vmatpush.bf16.msra.mxu0 0
        %1154 = vmatpush.bf16.msra.mxu0 0
        %1155 = vmatpush.bf16.msra.mxu0 0
        %1156 = vmatpush.bf16.msra.mxu0 0
        %1157 = vmatpush.bf16.msra.mxu0 %v1145
        %1158 = vmatpush.bf16.msra.mxu0 %v1144
        %1159 = vmatmul.bf16.gmra.mxu0 %v1149
        %v1160 = vpop.f32.mrf.mxu0
        %v1161 = vadd.f32 %v1134, %v1160
        %v1162 = vpop.f32.mrf.mxu0
        %1163 = vdwg.mxu0
        %v1164 = vmul.f32 %v1161, 0.5
        %v1165 = vmul.f32 %v1161, 0.70710677
        %v1166 = vmul.f32 %v1165, %v1165
        %v1167 = vmin.f32 16.0, %v1166
        %v1168 = vmul.f32 %v1167, 2.1237322e-06
        %v1169 = vadd.f32 %v1168, 0.00028619796
        %v1170 = vmul.f32 %v1167, %v1169
        %v1171 = vadd.f32 %v1170, 0.0036580483
        %v1172 = vmul.f32 %v1167, %v1171
        %v1173 = vadd.f32 %v1172, 0.05243302
        %v1174 = vmul.f32 %v1167, %v1173
        %v1175 = vadd.f32 %v1174, 0.18741608
        %v1176 = vmul.f32 %v1167, %v1175
        %v1177 = vadd.f32 %v1176, 1.1283791
        %v1178 = vmul.f32 %v1165, %v1177
        %v1179 = vmul.f32 %v1167, 3.8918573e-05
        %v1180 = vadd.f32 %v1179, 0.001143296
        %v1181 = vmul.f32 %v1167, %v1180
        %v1182 = vadd.f32 %v1181, 0.014752088
        %v1183 = vmul.f32 %v1167, %v1182
        %v1184 = vadd.f32 %v1183, 0.112945676
        %v1185 = vmul.f32 %v1167, %v1184
        %v1186 = vadd.f32 %v1185, 0.4994258
        %v1187 = vmul.f32 %v1167, %v1186
        %v1188 = vadd.f32 %v1187, 1.0
        %v1189 = vrcp.pop %v1188
        %v1190 = vmul.f32 %v1188, %v1189
        %v1191 = vsub.f32 1.0, %v1190
        %v1192 = vmul.f32 %v1189, %v1191
        %v1193 = vadd.f32 %v1189, %v1192
        %vm1194 = vweird.f32 %v1188
        %vm1195 = vweird.f32 %v1189
        %vm1196 = vmor %vm1194, %vm1195
        %v1197 = vsel %vm1196, %v1189, %v1193
        %v1198 = vand.u32 2147483647, %v1188
        %vm1199 = vcmp.eq.f32.partialorder %v1198, 8.507059e+37
        %v1200 = vand.u32 %v1188, 2147483648
        %v1201 = vor.u32 1.1754944e-38, %v1200
        %v1202 = vsel %vm1199, %v1201, %v1197
        %v1203 = vmul.f32 %v1178, %v1202
        %v1204 = vmin.f32 %v1203, 1.0
        %v1205 = vmax.f32 %v1204, -1.0
        %v1206 = vadd.f32 %v1205, 1.0
        %v1207 = vmul.f32 %v1164, %v1206
        %v1208 = vpack.c.bf16 %v1207, %v1207
        %v1209 = vld [vmem:[%s12] sm:$0xf]
        %v1210 = vld [vmem:[%s12 + $0x4] sm:$0xf]
        %v1211 = vld [vmem:[%s12 + $0x8] sm:$0xf]
        %v1212 = vld [vmem:[%s12 + $0xc] sm:$0xf]
        %v1213 = vld [vmem:[%s12 + $0x10] sm:$0xf]
        %v1214 = vld [vmem:[%s12 + $0x14] sm:$0xf]
        %v1215 = vld [vmem:[%s12 + $0x18] sm:$0xf]
        %v1216 = vld [vmem:[%s12 + $0x1c] sm:$0xf]
        %v1217 = vld [vmem:[%s12 + $0x20] sm:$0xf]
        %v1218 = vld [vmem:[%s12 + $0x24] sm:$0xf]
        %v1219 = vld [vmem:[%s12 + $0x28] sm:$0xf]
        %v1220 = vld [vmem:[%s12 + $0x2c] sm:$0xf]
        %v1221 = vld [vmem:[%s12 + $0x30] sm:$0xf]
        %v1222 = vld [vmem:[%s12 + $0x34] sm:$0xf]
        %v1223 = vld [vmem:[%s12 + $0x38] sm:$0xf]
        %v1224 = vld [vmem:[%s12 + $0x3c] sm:$0xf]
        %v1225 = vld [vmem:[%s13] sm:$0x1]
        %v1227 = vperm.slane %v1225, 0
        %v1245 = vunpack.c.l.b16 %v1209
        %v1246 = vunpack.c.l.b16 %v1210
        %v1247 = vunpack.c.l.b16 %v1211
        %v1248 = vunpack.c.l.b16 %v1212
        %v1249 = vunpack.c.l.b16 %v1213
        %v1250 = vunpack.c.l.b16 %v1214
        %v1251 = vunpack.c.l.b16 %v1215
        %v1252 = vunpack.c.l.b16 %v1216
        %v1253 = vunpack.c.l.b16 %v1217
        %v1254 = vunpack.c.l.b16 %v1218
        %v1255 = vunpack.c.l.b16 %v1219
        %v1256 = vunpack.c.l.b16 %v1220
        %v1257 = vunpack.c.l.b16 %v1221
        %v1258 = vunpack.c.l.b16 %v1222
        %v1259 = vunpack.c.l.b16 %v1223
        %v1260 = vunpack.c.l.b16 %v1224
        %v1261 = vpack.c.b16 %v1246, %v1245
        %v1262 = vpack.c.b16 %v1248, %v1247
        %v1263 = vpack.c.b16 %v1250, %v1249
        %v1264 = vpack.c.b16 %v1252, %v1251
        %v1265 = vpack.c.b16 %v1254, %v1253
        %v1266 = vpack.c.b16 %v1256, %v1255
        %v1267 = vpack.c.b16 %v1258, %v1257
        %v1268 = vpack.c.b16 %v1260, %v1259
        %1277 = vmatpush.bf16.msra.mxu0 %v1268
        %1278 = vmatpush.bf16.msra.mxu0 %v1267
        %1279 = vmatpush.bf16.msra.mxu0 %v1266
        %1280 = vmatpush.bf16.msra.mxu0 %v1265
        %1281 = vmatpush.bf16.msra.mxu0 %v1264
        %1282 = vmatpush.bf16.msra.mxu0 %v1263
        %1283 = vmatpush.bf16.msra.mxu0 %v1262
        %1284 = vmatpush.bf16.msra.mxu0 %v1261
        %1285 = vmatmul.bf16.gmra.mxu0 %v1208
        %v1286 = vpop.f32.mrf.mxu0
        %v1287 = vadd.f32 %v1227, %v1286
        %v1288 = vpop.f32.mrf.mxu0
        %1289 = vdwg.mxu0
        %v1290 = vadd.f32 %v1087, %v1287
        %1291 = vst.msk [vmem:[%s504] sm:$0xff] %vm686, %v1290
        %s1292 = sand.u32 %s351, 1
        %s1293 = scalar_lea.sflag [#allocation7], %s1292
        %s1294 = sand.u32 %s351, 1
        %s1295 = smul.addr %s1294, 8
        %s1296 = scalar_lea.vmem [#allocation10], %s1295
        // Predicated region
        $region89: #{tpu_custom_call.1} parent=75 // pred_check
          %p1297 = pneg %p361
        $region90: #{tpu_custom_call.1} parent=75 // pred_check_branch
          %1299 = sbr.rel (%p1297) target = $region92
        $region91: #{tpu_custom_call.1} parent=75 // pred_region
          %1301 = vsyncadd %s1293, 0
          %s1302 = sadd.s32 %s35, %s34
          %s1303 = smul.addr %s1302, 8
          %s1304 = scalar_lea.hbm %s14, %s1303
          %s1306 = sshll.u32 %s1296, 4
          %s1307 = int_to_ptr.vmem [resolvable:$true] %s1306
          %s1308 = sshll.u32 %s1304, 4
          %s1309 = int_to_ptr.hbm [resolvable:$true] %s1308
          %1311 = dma.vmem_to_hbm [thread:$0]  %s1307, 128, %s1309, %s1293
        $region92: #{tpu_custom_call.1} parent=75 // pred_fallthru
          _
      $region76: #{tpu_custom_call.1} parent=5 // pred_fallthru
        _
      %p1312 = scmp.le.s32.totalorder 2, %s25
      // Predicated region
      $region93: #{tpu_custom_call.1} parent=5 // pred_check
        %p1313 = pneg %p1312
      $region94: #{tpu_custom_call.1} parent=5 // pred_check_branch
        %1315 = sbr.rel (%p1313) target = $region96
      $region95: #{tpu_custom_call.1} parent=5 // pred_region
        %s1316 = ssub.s32 %s25, 2
        // Predicated region
        $region97: #{tpu_custom_call.1} parent=95 // pred_check
          %p1317 = pneg %p367
        $region98: #{tpu_custom_call.1} parent=95 // pred_check_branch
          %1319 = sbr.rel (%p1317) target = $region100
        $region99: #{tpu_custom_call.1} parent=95 // pred_region
          %s1320 = sand.u32 %s352, 1
          %s1321 = scalar_lea.sflag [#allocation7], %s1320
          %s1322 = sand.u32 %s352, 1
          %s1323 = smul.addr %s1322, 8
          %s1324 = scalar_lea.vmem [#allocation10], %s1323
          %1326 = dma.done %s1321, 128
        $region100: #{tpu_custom_call.1} parent=95 // pred_fallthru
          _
      $region96: #{tpu_custom_call.1} parent=5 // pred_fallthru
        _
    $region6: #{tpu_custom_call.1} parent=1 // loop_footer
      %s29 = sadd.s32 1, %s25
    $region7: #{tpu_custom_call.1} parent=1 // loop_footer_branch
      %24 = sbr.rel target = $region3
    $region8: #{tpu_custom_call.1} parent=1 // loop_exit
      _
    %1327 = vsyncpa [#allocation6], 1
    %s1328 = scalar_lea.sflag [#allocation6], 1
    %1329 = vsyncpa %s1328, 1
    %1330 = vsyncpa [#allocation9], 1
    %1331 = vsyncpa [#allocation7], 1
    %s1332 = scalar_lea.sflag [#allocation7], 1
    %1333 = vsyncpa %s1332, 1

// kernel: tpu_custom_call.1
$region0: #{tpu_custom_call.1}
  #allocation0 [shape = 'u32[]', space=smem, size = 0x4, offset = 0x4, fixed_abs, tag = 'smem constant byte address 0x4 - core index']
  #allocation1 [shape = 'u32[72,128]{1,0:T(1,128)}', space=vmem, size = 0x9000, scoped, tag = 'internal scratch']
  #allocation2 [shape = 'bf16[8,32]{1,0:T(8,128)(2,1)}', space=vmem, size = 0x800, scoped, tag = 'scratch operand']
  #allocation3 [shape = 'bf16[4,8,8]{2,1,0:T(8,128)(2,1)}', space=vmem, size = 0x2000, scoped, tag = 'scratch operand']
  #allocation4 [shape = 'bf16[4,8,8]{2,1,0:T(8,128)(2,1)}', space=vmem, size = 0x2000, scoped, tag = 'scratch operand']
  %s0 = inlined_call_operand.vmem [shape: f32[2,8,32], index: 0, kind: input, shape index: {}]
  %s1 = inlined_call_operand.hbm [shape: f32[1,32], index: 1, kind: input, shape index: {}]
  %s2 = inlined_call_operand.vmem [shape: f32[1,32], index: 2, kind: input, shape index: {}]
  %s3 = inlined_call_operand.vmem [shape: bf16[32,32], index: 3, kind: input, shape index: {}]
  %s4 = inlined_call_operand.vmem [shape: bf16[32,32], index: 4, kind: input, shape index: {}]
  %s5 = inlined_call_operand.vmem [shape: bf16[32,32], index: 5, kind: input, shape index: {}]
  %s6 = inlined_call_operand.vmem [shape: bf16[32,32], index: 6, kind: input, shape index: {}]
  %s7 = inlined_call_operand.vmem [shape: f32[1,32], index: 7, kind: input, shape index: {}]
  %s8 = inlined_call_operand.vmem [shape: f32[1,32], index: 8, kind: input, shape index: {}]
  %s9 = inlined_call_operand.vmem [shape: f32[1,32], index: 9, kind: input, shape index: {}]
  %s10 = inlined_call_operand.hbm [shape: bf16[32,128], index: 10, kind: input, shape index: {}]
  %s11 = inlined_call_operand.vmem [shape: f32[1,128], index: 11, kind: input, shape index: {}]
  %s12 = inlined_call_operand.vmem [shape: bf16[128,32], index: 12, kind: input, shape index: {}]
  %s13 = inlined_call_operand.vmem [shape: f32[1,32], index: 13, kind: input, shape index: {}]
  %s14 = inlined_call_operand.hbm [shape: f32[2,8,32], index: 14, kind: output, shape index: {}]
  %s15 = sld [smem:[#allocation0]]
  $region101: #{tpu_custom_call.1} parent=0
    _
  %s17 = ssub.s32 1, %s15
  %s18 = scalar_select 0, %s17, %s15
  $region1: #{tpu_custom_call.1} parent=0
    #allocation5 [shape = 'u8[512]{0}', space=vmem, size = 0x400, scoped, tag = 'input window, operand 1, single buffered']
    #allocation6 [shape = 's32[2]{0}', space=sflag, size = 0x8, scoped, tag = 'scoped memory for tpu_custom_call.1']
    #allocation7 [shape = 's32[2]{0}', space=sflag, size = 0x8, scoped, tag = 'scoped memory for tpu_custom_call.1']
    #allocation8 [shape = 'u8[8192]{0}', space=vmem, size = 0x2000, scoped, tag = 'input window, operand 10, single buffered']
    #allocation9 [shape = 's32[1]{0}', space=sflag, size = 0x4, scoped, tag = 'scoped memory for tpu_custom_call.1']
    #allocation10 [shape = 'u8[8192]{0}', space=vmem, size = 0x2000, scoped, tag = 'output window, operand 0']
    %19 = vsyncpa [#allocation6], 0
    %20 = vsyncpa [#allocation9], 0
    %21 = vsyncpa [#allocation7], 0
    %s22 = scalar_lea.sflag [#allocation7], 1
    %23 = vsyncpa %s22, 0
    loop: start=0, step=1, limit=4
    $region2: #{tpu_custom_call.1} parent=1 // loop_pre_header
      _
    $region3: #{tpu_custom_call.1} parent=1 // loop_header
      %s25 = sphi 0, %s29
      %p26 = scmp.ge.s32.totalorder %s25, 4
      %s32 = sphi 0, %s44
      %s33 = sphi 0, %s40
      %s34 = sphi 0, %s32
      %s35 = sphi 0, %s33
      %s36 = sphi 0, %s34
      %s37 = sphi 0, %s35
      %s47 = sphi 0, %s49
      %s50 = sphi 0, %s47
      %s51 = sphi 0, %s50
      %s67 = sphi 0, %s51
      %s71 = sphi 0, %s71
      %s73 = sphi 0, %s71
      %s74 = sphi 0, %s73
      %s88 = sphi 0, %s74
      %s92 = sphi 0, %s92
      %s94 = sphi 0, %s92
      %s95 = sphi 0, %s94
      %s109 = sphi 0, %s95
      %s113 = sphi 0, %s113
      %s115 = sphi 0, %s113
      %s116 = sphi 0, %s115
      %s130 = sphi 0, %s116
      %s134 = sphi 0, %s134
      %s136 = sphi 0, %s134
      %s137 = sphi 0, %s136
      %s151 = sphi 0, %s137
      %s155 = sphi 0, %s155
      %s157 = sphi 0, %s155
      %s158 = sphi 0, %s157
      %s172 = sphi 0, %s158
      %s176 = sphi 0, %s176
      %s178 = sphi 0, %s176
      %s179 = sphi 0, %s178
      %s193 = sphi 0, %s179
      %s197 = sphi 0, %s197
      %s199 = sphi 0, %s197
      %s200 = sphi 0, %s199
      %s214 = sphi 0, %s200
      %s218 = sphi 0, %s218
      %s220 = sphi 0, %s218
      %s221 = sphi 0, %s220
      %s235 = sphi 0, %s221
      %s239 = sphi 0, %s239
      %s241 = sphi 0, %s239
      %s242 = sphi 0, %s241
      %s256 = sphi 0, %s242
      %s260 = sphi 0, %s260
      %s262 = sphi 0, %s260
      %s263 = sphi 0, %s262
      %s277 = sphi 0, %s263
      %s281 = sphi 0, %s281
      %s283 = sphi 0, %s281
      %s284 = sphi 0, %s283
      %s298 = sphi 0, %s284
      %s302 = sphi 0, %s302
      %s304 = sphi 0, %s302
      %s305 = sphi 0, %s304
      %s319 = sphi 0, %s305
      %s323 = sphi 0, %s323
      %s325 = sphi 0, %s323
      %s326 = sphi 0, %s325
      %s340 = sphi 0, %s326
      %s348 = sphi 0, %s350
      %s351 = sphi 0, %s348
      %s352 = sphi 0, %s351
      %s368 = sphi 0, %s352
    $region4: #{tpu_custom_call.1} parent=1 // loop_header_branch
      %28 = sbr.rel (%p26) target = $region8
    $region5: #{tpu_custom_call.1} parent=1 // loop_body
      %s30 = ssub.s32 %s25, 1
      %s31 = ssub.s32 %s25, 2
      %s38 = sadd.s32 1, %s33
      %p39 = scmp.ge.s32.totalorder %s38, 1
      %s40 = scalar_select %p39, 0, %s38
      %s41 = sadd.s32 1, %s32
      %s42 = scalar_select %p39, %s41, %s32
      %p43 = scmp.ge.s32.totalorder %s42, 2
      %s44 = scalar_select %p43, 0, %s42
      %s45 = ssub.s32 %s32, %s44
      %p46 = scmp.eq.s32.totalorder %s45, 0
      %s48 = sadd.s32 %s47, 1
      %s49 = scalar_select %p46, %s47, %s48
      %p52 = pneg %p46
      %p53 = scmp.eq.s32.totalorder %s25, 1
      %p54 = por %p52, %p53
      %p55 = scmp.ne.s32.totalorder %s47, %s50
      %p56 = scmp.eq.s32.totalorder %s25, 0
      %p57 = por %p55, %p56
      %p58 = scmp.ne.s32.totalorder %s47, %s50
      %p59 = scmp.eq.s32.totalorder %s30, 1
      %p60 = por %p58, %p59
      %p61 = scmp.ne.s32.totalorder %s50, %s51
      %p62 = scmp.eq.s32.totalorder %s30, 0
      %p63 = por %p61, %p62
      %p64 = scmp.ne.s32.totalorder %s50, %s51
      %p65 = scmp.eq.s32.totalorder %s31, 1
      %p66 = por %p64, %p65
      %p68 = scmp.ne.s32.totalorder %s51, %s67
      %p69 = scmp.eq.s32.totalorder %s31, 0
      %p70 = por %p68, %p69
      %s72 = sadd.s32 %s71, 1
      %p75 = scmp.eq.s32.totalorder %s25, 1
      %p76 = scmp.ne.s32.totalorder %s71, %s73
      %p77 = scmp.eq.s32.totalorder %s25, 0
      %p78 = por %p76, %p77
      %p79 = scmp.ne.s32.totalorder %s71, %s73
      %p80 = scmp.eq.s32.totalorder %s30, 1
      %p81 = por %p79, %p80
      %p82 = scmp.ne.s32.totalorder %s73, %s74
      %p83 = scmp.eq.s32.totalorder %s30, 0
      %p84 = por %p82, %p83
      %p85 = scmp.ne.s32.totalorder %s73, %s74
      %p86 = scmp.eq.s32.totalorder %s31, 1
      %p87 = por %p85, %p86
      %p89 = scmp.ne.s32.totalorder %s74, %s88
      %p90 = scmp.eq.s32.totalorder %s31, 0
      %p91 = por %p89, %p90
      %s93 = sadd.s32 %s92, 1
      %p96 = scmp.eq.s32.totalorder %s25, 1
      %p97 = scmp.ne.s32.totalorder %s92, %s94
      %p98 = scmp.eq.s32.totalorder %s25, 0
      %p99 = por %p97, %p98
      %p100 = scmp.ne.s32.totalorder %s92, %s94
      %p101 = scmp.eq.s32.totalorder %s30, 1
      %p102 = por %p100, %p101
      %p103 = scmp.ne.s32.totalorder %s94, %s95
      %p104 = scmp.eq.s32.totalorder %s30, 0
      %p105 = por %p103, %p104
      %p106 = scmp.ne.s32.totalorder %s94, %s95
      %p107 = scmp.eq.s32.totalorder %s31, 1
      %p108 = por %p106, %p107
      %p110 = scmp.ne.s32.totalorder %s95, %s109
      %p111 = scmp.eq.s32.totalorder %s31, 0
      %p112 = por %p110, %p111
      %s114 = sadd.s32 %s113, 1
      %p117 = scmp.eq.s32.totalorder %s25, 1
      %p118 = scmp.ne.s32.totalorder %s113, %s115
      %p119 = scmp.eq.s32.totalorder %s25, 0
      %p120 = por %p118, %p119
      %p121 = scmp.ne.s32.totalorder %s113, %s115
      %p122 = scmp.eq.s32.totalorder %s30, 1
      %p123 = por %p121, %p122
      %p124 = scmp.ne.s32.totalorder %s115, %s116
      %p125 = scmp.eq.s32.totalorder %s30, 0
      %p126 = por %p124, %p125
      %p127 = scmp.ne.s32.totalorder %s115, %s116
      %p128 = scmp.eq.s32.totalorder %s31, 1
      %p129 = por %p127, %p128
      %p131 = scmp.ne.s32.totalorder %s116, %s130
      %p132 = scmp.eq.s32.totalorder %s31, 0
      %p133 = por %p131, %p132
      %s135 = sadd.s32 %s134, 1
      %p138 = scmp.eq.s32.totalorder %s25, 1
      %p139 = scmp.ne.s32.totalorder %s134, %s136
      %p140 = scmp.eq.s32.totalorder %s25, 0
      %p141 = por %p139, %p140
      %p142 = scmp.ne.s32.totalorder %s134, %s136
      %p143 = scmp.eq.s32.totalorder %s30, 1
      %p144 = por %p142, %p143
      %p145 = scmp.ne.s32.totalorder %s136, %s137
      %p146 = scmp.eq.s32.totalorder %s30, 0
      %p147 = por %p145, %p146
      %p148 = scmp.ne.s32.totalorder %s136, %s137
      %p149 = scmp.eq.s32.totalorder %s31, 1
      %p150 = por %p148, %p149
      %p152 = scmp.ne.s32.totalorder %s137, %s151
      %p153 = scmp.eq.s32.totalorder %s31, 0
      %p154 = por %p152, %p153
      %s156 = sadd.s32 %s155, 1
      %p159 = scmp.eq.s32.totalorder %s25, 1
      %p160 = scmp.ne.s32.totalorder %s155, %s157
      %p161 = scmp.eq.s32.totalorder %s25, 0
      %p162 = por %p160, %p161
      %p163 = scmp.ne.s32.totalorder %s155, %s157
      %p164 = scmp.eq.s32.totalorder %s30, 1
      %p165 = por %p163, %p164
      %p166 = scmp.ne.s32.totalorder %s157, %s158
      %p167 = scmp.eq.s32.totalorder %s30, 0
      %p168 = por %p166, %p167
      %p169 = scmp.ne.s32.totalorder %s157, %s158
      %p170 = scmp.eq.s32.totalorder %s31, 1
      %p171 = por %p169, %p170
      %p173 = scmp.ne.s32.totalorder %s158, %s172
      %p174 = scmp.eq.s32.totalorder %s31, 0
      %p175 = por %p173, %p174
      %s177 = sadd.s32 %s176, 1
      %p180 = scmp.eq.s32.totalorder %s25, 1
      %p181 = scmp.ne.s32.totalorder %s176, %s178
      %p182 = scmp.eq.s32.totalorder %s25, 0
      %p183 = por %p181, %p182
      %p184 = scmp.ne.s32.totalorder %s176, %s178
      %p185 = scmp.eq.s32.totalorder %s30, 1
      %p186 = por %p184, %p185
      %p187 = scmp.ne.s32.totalorder %s178, %s179
      %p188 = scmp.eq.s32.totalorder %s30, 0
      %p189 = por %p187, %p188
      %p190 = scmp.ne.s32.totalorder %s178, %s179
      %p191 = scmp.eq.s32.totalorder %s31, 1
      %p192 = por %p190, %p191
      %p194 = scmp.ne.s32.totalorder %s179, %s193
      %p195 = scmp.eq.s32.totalorder %s31, 0
      %p196 = por %p194, %p195
      %s198 = sadd.s32 %s197, 1
      %p201 = scmp.eq.s32.totalorder %s25, 1
      %p202 = scmp.ne.s32.totalorder %s197, %s199
      %p203 = scmp.eq.s32.totalorder %s25, 0
      %p204 = por %p202, %p203
      %p205 = scmp.ne.s32.totalorder %s197, %s199
      %p206 = scmp.eq.s32.totalorder %s30, 1
      %p207 = por %p205, %p206
      %p208 = scmp.ne.s32.totalorder %s199, %s200
      %p209 = scmp.eq.s32.totalorder %s30, 0
      %p210 = por %p208, %p209
      %p211 = scmp.ne.s32.totalorder %s199, %s200
      %p212 = scmp.eq.s32.totalorder %s31, 1
      %p213 = por %p211, %p212
      %p215 = scmp.ne.s32.totalorder %s200, %s214
      %p216 = scmp.eq.s32.totalorder %s31, 0
      %p217 = por %p215, %p216
      %s219 = sadd.s32 %s218, 1
      %p222 = scmp.eq.s32.totalorder %s25, 1
      %p223 = scmp.ne.s32.totalorder %s218, %s220
      %p224 = scmp.eq.s32.totalorder %s25, 0
      %p225 = por %p223, %p224
      %p226 = scmp.ne.s32.totalorder %s218, %s220
      %p227 = scmp.eq.s32.totalorder %s30, 1
      %p228 = por %p226, %p227
      %p229 = scmp.ne.s32.totalorder %s220, %s221
      %p230 = scmp.eq.s32.totalorder %s30, 0
      %p231 = por %p229, %p230
      %p232 = scmp.ne.s32.totalorder %s220, %s221
      %p233 = scmp.eq.s32.totalorder %s31, 1
      %p234 = por %p232, %p233
      %p236 = scmp.ne.s32.totalorder %s221, %s235
      %p237 = scmp.eq.s32.totalorder %s31, 0
      %p238 = por %p236, %p237
      %s240 = sadd.s32 %s239, 1
      %p243 = scmp.eq.s32.totalorder %s25, 1
      %p244 = scmp.ne.s32.totalorder %s239, %s241
      %p245 = scmp.eq.s32.totalorder %s25, 0
      %p246 = por %p244, %p245
      %p247 = scmp.ne.s32.totalorder %s239, %s241
      %p248 = scmp.eq.s32.totalorder %s30, 1
      %p249 = por %p247, %p248
      %p250 = scmp.ne.s32.totalorder %s241, %s242
      %p251 = scmp.eq.s32.totalorder %s30, 0
      %p252 = por %p250, %p251
      %p253 = scmp.ne.s32.totalorder %s241, %s242
      %p254 = scmp.eq.s32.totalorder %s31, 1
      %p255 = por %p253, %p254
      %p257 = scmp.ne.s32.totalorder %s242, %s256
      %p258 = scmp.eq.s32.totalorder %s31, 0
      %p259 = por %p257, %p258
      %s261 = sadd.s32 %s260, 1
      %p264 = scmp.eq.s32.totalorder %s25, 1
      %p265 = scmp.ne.s32.totalorder %s260, %s262
      %p266 = scmp.eq.s32.totalorder %s25, 0
      %p267 = por %p265, %p266
      %p268 = scmp.ne.s32.totalorder %s260, %s262
      %p269 = scmp.eq.s32.totalorder %s30, 1
      %p270 = por %p268, %p269
      %p271 = scmp.ne.s32.totalorder %s262, %s263
      %p272 = scmp.eq.s32.totalorder %s30, 0
      %p273 = por %p271, %p272
      %p274 = scmp.ne.s32.totalorder %s262, %s263
      %p275 = scmp.eq.s32.totalorder %s31, 1
      %p276 = por %p274, %p275
      %p278 = scmp.ne.s32.totalorder %s263, %s277
      %p279 = scmp.eq.s32.totalorder %s31, 0
      %p280 = por %p278, %p279
      %s282 = sadd.s32 %s281, 1
      %p285 = scmp.eq.s32.totalorder %s25, 1
      %p286 = scmp.ne.s32.totalorder %s281, %s283
      %p287 = scmp.eq.s32.totalorder %s25, 0
      %p288 = por %p286, %p287
      %p289 = scmp.ne.s32.totalorder %s281, %s283
      %p290 = scmp.eq.s32.totalorder %s30, 1
      %p291 = por %p289, %p290
      %p292 = scmp.ne.s32.totalorder %s283, %s284
      %p293 = scmp.eq.s32.totalorder %s30, 0
      %p294 = por %p292, %p293
      %p295 = scmp.ne.s32.totalorder %s283, %s284
      %p296 = scmp.eq.s32.totalorder %s31, 1
      %p297 = por %p295, %p296
      %p299 = scmp.ne.s32.totalorder %s284, %s298
      %p300 = scmp.eq.s32.totalorder %s31, 0
      %p301 = por %p299, %p300
      %s303 = sadd.s32 %s302, 1
      %p306 = scmp.eq.s32.totalorder %s25, 1
      %p307 = scmp.ne.s32.totalorder %s302, %s304
      %p308 = scmp.eq.s32.totalorder %s25, 0
      %p309 = por %p307, %p308
      %p310 = scmp.ne.s32.totalorder %s302, %s304
      %p311 = scmp.eq.s32.totalorder %s30, 1
      %p312 = por %p310, %p311
      %p313 = scmp.ne.s32.totalorder %s304, %s305
      %p314 = scmp.eq.s32.totalorder %s30, 0
      %p315 = por %p313, %p314
      %p316 = scmp.ne.s32.totalorder %s304, %s305
      %p317 = scmp.eq.s32.totalorder %s31, 1
      %p318 = por %p316, %p317
      %p320 = scmp.ne.s32.totalorder %s305, %s319
      %p321 = scmp.eq.s32.totalorder %s31, 0
      %p322 = por %p320, %p321
      %s324 = sadd.s32 %s323, 1
      %p327 = scmp.eq.s32.totalorder %s25, 1
      %p328 = scmp.ne.s32.totalorder %s323, %s325
      %p329 = scmp.eq.s32.totalorder %s25, 0
      %p330 = por %p328, %p329
      %p331 = scmp.ne.s32.totalorder %s323, %s325
      %p332 = scmp.eq.s32.totalorder %s30, 1
      %p333 = por %p331, %p332
      %p334 = scmp.ne.s32.totalorder %s325, %s326
      %p335 = scmp.eq.s32.totalorder %s30, 0
      %p336 = por %p334, %p335
      %p337 = scmp.ne.s32.totalorder %s325, %s326
      %p338 = scmp.eq.s32.totalorder %s31, 1
      %p339 = por %p337, %p338
      %p341 = scmp.ne.s32.totalorder %s326, %s340
      %p342 = scmp.eq.s32.totalorder %s31, 0
      %p343 = por %p341, %p342
      %s344 = ssub.s32 %s32, %s44
      %s345 = ssub.s32 %s33, %s40
      %s346 = sor.u32 %s344, %s345
      %p347 = scmp.eq.s32.totalorder %s346, 0
      %s349 = sadd.s32 %s348, 1
      %s350 = scalar_select %p347, %s348, %s349
      %p353 = pneg %p347
      %p354 = scmp.eq.s32.totalorder %s25, 1
      %p355 = por %p353, %p354
      %p356 = scmp.ne.s32.totalorder %s348, %s351
      %p357 = scmp.eq.s32.totalorder %s25, 0
      %p358 = por %p356, %p357
      %p359 = scmp.ne.s32.totalorder %s348, %s351
      %p360 = scmp.eq.s32.totalorder %s30, 1
      %p361 = por %p359, %p360
      %p362 = scmp.ne.s32.totalorder %s351, %s352
      %p363 = scmp.eq.s32.totalorder %s30, 0
      %p364 = por %p362, %p363
      %p365 = scmp.ne.s32.totalorder %s351, %s352
      %p366 = scmp.eq.s32.totalorder %s31, 1
      %p367 = por %p365, %p366
      %p369 = scmp.ne.s32.totalorder %s352, %s368
      %p370 = scmp.eq.s32.totalorder %s31, 0
      %p371 = por %p369, %p370
      %p372 = scmp.le.s32.totalorder 1, %s25
      %p373 = scmp.lt.s32.totalorder %s25, 3
      %p374 = pnand %p372, %p373
      %p375 = pneg %p374
      // Predicated region
      $region9: #{tpu_custom_call.1} parent=5 // pred_check
        _
      $region10: #{tpu_custom_call.1} parent=5 // pred_check_branch
        %377 = sbr.rel (%p374) target = $region12
      $region11: #{tpu_custom_call.1} parent=5 // pred_region
        %s378 = ssub.s32 %s25, 1
        // Predicated region
        $region13: #{tpu_custom_call.1} parent=11 // pred_check
          %p379 = pneg %p84
        $region14: #{tpu_custom_call.1} parent=11 // pred_check_branch
          %381 = sbr.rel (%p379) target = $region16
        $region15: #{tpu_custom_call.1} parent=11 // pred_region
          %383 = vsyncadd [#allocation6], 0
          %s385 = sshll.u32 %s1, 4
          %s386 = int_to_ptr.hbm [resolvable:$true] %s385
          %s387 = sshll.u32 [#allocation5], 4
          %s388 = int_to_ptr.vmem [resolvable:$true] %s387
          %390 = dma.hbm_to_vmem [thread:$0]  %s386, 16, %s388, [#allocation6]
        $region16: #{tpu_custom_call.1} parent=11 // pred_fallthru
          _
        // Predicated region
        $region17: #{tpu_custom_call.1} parent=11 // pred_check
          %p391 = pneg %p105
        $region18: #{tpu_custom_call.1} parent=11 // pred_check_branch
          %393 = sbr.rel (%p391) target = $region20
        $region19: #{tpu_custom_call.1} parent=11 // pred_region
          _
        $region20: #{tpu_custom_call.1} parent=11 // pred_fallthru
          _
        // Predicated region
        $region21: #{tpu_custom_call.1} parent=11 // pred_check
          %p394 = pneg %p126
        $region22: #{tpu_custom_call.1} parent=11 // pred_check_branch
          %396 = sbr.rel (%p394) target = $region24
        $region23: #{tpu_custom_call.1} parent=11 // pred_region
          _
        $region24: #{tpu_custom_call.1} parent=11 // pred_fallthru
          _
        // Predicated region
        $region25: #{tpu_custom_call.1} parent=11 // pred_check
          %p397 = pneg %p147
        $region26: #{tpu_custom_call.1} parent=11 // pred_check_branch
          %399 = sbr.rel (%p397) target = $region28
        $region27: #{tpu_custom_call.1} parent=11 // pred_region
          _
        $region28: #{tpu_custom_call.1} parent=11 // pred_fallthru
          _
        // Predicated region
        $region29: #{tpu_custom_call.1} parent=11 // pred_check
          %p400 = pneg %p168
        $region30: #{tpu_custom_call.1} parent=11 // pred_check_branch
          %402 = sbr.rel (%p400) target = $region32
        $region31: #{tpu_custom_call.1} parent=11 // pred_region
          _
        $region32: #{tpu_custom_call.1} parent=11 // pred_fallthru
          _
        // Predicated region
        $region33: #{tpu_custom_call.1} parent=11 // pred_check
          %p403 = pneg %p189
        $region34: #{tpu_custom_call.1} parent=11 // pred_check_branch
          %405 = sbr.rel (%p403) target = $region36
        $region35: #{tpu_custom_call.1} parent=11 // pred_region
          _
        $region36: #{tpu_custom_call.1} parent=11 // pred_fallthru
          _
        // Predicated region
        $region37: #{tpu_custom_call.1} parent=11 // pred_check
          %p406 = pneg %p210
        $region38: #{tpu_custom_call.1} parent=11 // pred_check_branch
          %408 = sbr.rel (%p406) target = $region40
        $region39: #{tpu_custom_call.1} parent=11 // pred_region
          _
        $region40: #{tpu_custom_call.1} parent=11 // pred_fallthru
          _
        // Predicated region
        $region41: #{tpu_custom_call.1} parent=11 // pred_check
          %p409 = pneg %p231
        $region42: #{tpu_custom_call.1} parent=11 // pred_check_branch
          %411 = sbr.rel (%p409) target = $region44
        $region43: #{tpu_custom_call.1} parent=11 // pred_region
          _
        $region44: #{tpu_custom_call.1} parent=11 // pred_fallthru
          _
        // Predicated region
        $region45: #{tpu_custom_call.1} parent=11 // pred_check
          %p412 = pneg %p252
        $region46: #{tpu_custom_call.1} parent=11 // pred_check_branch
          %414 = sbr.rel (%p412) target = $region48
        $region47: #{tpu_custom_call.1} parent=11 // pred_region
          _
        $region48: #{tpu_custom_call.1} parent=11 // pred_fallthru
          _
        // Predicated region
        $region49: #{tpu_custom_call.1} parent=11 // pred_check
          %p415 = pneg %p273
        $region50: #{tpu_custom_call.1} parent=11 // pred_check_branch
          %417 = sbr.rel (%p415) target = $region52
        $region51: #{tpu_custom_call.1} parent=11 // pred_region
          %419 = vsyncadd [#allocation9], 0
          %s420 = sshll.u32 %s10, 4
          %s421 = int_to_ptr.hbm [resolvable:$true] %s420
          %s422 = sshll.u32 [#allocation8], 4
          %s423 = int_to_ptr.vmem [resolvable:$true] %s422
          %428 = dma.hbm_to_vmem [thread:$0]  %s421, 256, %s423, [#allocation9], 64, 64, 4
        $region52: #{tpu_custom_call.1} parent=11 // pred_fallthru
          _
        // Predicated region
        $region53: #{tpu_custom_call.1} parent=11 // pred_check
          %p429 = pneg %p294
        $region54: #{tpu_custom_call.1} parent=11 // pred_check_branch
          %431 = sbr.rel (%p429) target = $region56
        $region55: #{tpu_custom_call.1} parent=11 // pred_region
          _
        $region56: #{tpu_custom_call.1} parent=11 // pred_fallthru
          _
        // Predicated region
        $region57: #{tpu_custom_call.1} parent=11 // pred_check
          %p432 = pneg %p315
        $region58: #{tpu_custom_call.1} parent=11 // pred_check_branch
          %434 = sbr.rel (%p432) target = $region60
        $region59: #{tpu_custom_call.1} parent=11 // pred_region
          _
        $region60: #{tpu_custom_call.1} parent=11 // pred_fallthru
          _
        // Predicated region
        $region61: #{tpu_custom_call.1} parent=11 // pred_check
          %p435 = pneg %p336
        $region62: #{tpu_custom_call.1} parent=11 // pred_check_branch
          %437 = sbr.rel (%p435) target = $region64
        $region63: #{tpu_custom_call.1} parent=11 // pred_region
          _
        $region64: #{tpu_custom_call.1} parent=11 // pred_fallthru
          _
      $region12: #{tpu_custom_call.1} parent=5 // pred_fallthru
        _
      %p438 = scmp.lt.s32.totalorder %s25, 2
      // Predicated region
      $region65: #{tpu_custom_call.1} parent=5 // pred_check
        %p439 = pneg %p438
      $region66: #{tpu_custom_call.1} parent=5 // pred_check_branch
        %441 = sbr.rel (%p439) target = $region68
      $region67: #{tpu_custom_call.1} parent=5 // pred_region
        // Predicated region
        $region69: #{tpu_custom_call.1} parent=67 // pred_check
          %p442 = pneg %p57
        $region70: #{tpu_custom_call.1} parent=67 // pred_check_branch
          %444 = sbr.rel (%p442) target = $region72
        $region71: #{tpu_custom_call.1} parent=67 // pred_region
          %p445 = scmp.lt.s32.totalorder %s32, 1
          %s446 = scalar_select %p445, %s32, 1
          %s447 = smul.addr %s446, 8
          %s448 = scalar_lea.vmem %s0, %s447
        $region72: #{tpu_custom_call.1} parent=67 // pred_fallthru
          _
      $region68: #{tpu_custom_call.1} parent=5 // pred_fallthru
        _
      %p449 = scmp.le.s32.totalorder 1, %s25
      %p450 = scmp.lt.s32.totalorder %s25, 3
      %p451 = pnand %p449, %p450
      %p452 = pneg %p451
      // Predicated region
      $region73: #{tpu_custom_call.1} parent=5 // pred_check
        _
      $region74: #{tpu_custom_call.1} parent=5 // pred_check_branch
        %454 = sbr.rel (%p451) target = $region76
      $region75: #{tpu_custom_call.1} parent=5 // pred_region
        %s455 = ssub.s32 %s25, 1
        // Predicated region
        $region77: #{tpu_custom_call.1} parent=75 // pred_check
          %p456 = pneg %p84
        $region78: #{tpu_custom_call.1} parent=75 // pred_check_branch
          %458 = sbr.rel (%p456) target = $region80
        $region79: #{tpu_custom_call.1} parent=75 // pred_region
          %460 = dma.done [#allocation6], 16
        $region80: #{tpu_custom_call.1} parent=75 // pred_fallthru
          _
        // Predicated region
        $region81: #{tpu_custom_call.1} parent=75 // pred_check
          %p461 = pneg %p273
        $region82: #{tpu_custom_call.1} parent=75 // pred_check_branch
          %463 = sbr.rel (%p461) target = $region84
        $region83: #{tpu_custom_call.1} parent=75 // pred_region
          %465 = dma.done [#allocation9], 256
        $region84: #{tpu_custom_call.1} parent=75 // pred_fallthru
          _
        %p466 = scmp.lt.s32.totalorder %s34, 1
        %s467 = scalar_select %p466, %s34, 1
        %s468 = smul.addr %s467, 8
        %s469 = scalar_lea.vmem %s0, %s468
        %p470 = pneg %p63
        %p471 = pneg %p60
        %p472 = pneg %p84
        %p473 = pneg %p81
        %p474 = pneg %p105
        %p475 = pneg %p102
        %p476 = pneg %p126
        %p477 = pneg %p123
        %p478 = pneg %p147
        %p479 = pneg %p144
        %p480 = pneg %p168
        %p481 = pneg %p165
        %p482 = pneg %p189
        %p483 = pneg %p186
        %p484 = pneg %p210
        %p485 = pneg %p207
        %p486 = pneg %p231
        %p487 = pneg %p228
        %p488 = pneg %p252
        %p489 = pneg %p249
        %p490 = pneg %p273
        %p491 = pneg %p270
        %p492 = pneg %p294
        %p493 = pneg %p291
        %p494 = pneg %p315
        %p495 = pneg %p312
        %p496 = pneg %p336
        %p497 = pneg %p333
        %p498 = pneg %p364
        %p499 = pneg %p361
        %s500 = sand.u32 %s351, 1
        %s501 = scalar_lea.sflag [#allocation7], %s500
        %s502 = sand.u32 %s351, 1
        %s503 = smul.addr %s502, 8
        %s504 = scalar_lea.vmem [#allocation10], %s503
        %p505 = scmp.lt.s32.totalorder %s34, 1
        %s506 = scalar_select %p505, %s34, 1
        %s507 = smul.addr %s506, 8
        %s508 = scalar_lea.vmem %s0, %s507
        %p510 = scmp.eq.s32.totalorder %s35, 0
        // Predicated region
        $region85: #{tpu_custom_call.1} parent=75 // pred_check
          %p511 = pneg %p510
        $region86: #{tpu_custom_call.1} parent=75 // pred_check_branch
          %513 = sbr.rel (%p511) target = $region88
        $region87: #{tpu_custom_call.1} parent=75 // pred_region
          %v514 = vld [vmem:[%s508] sm:$0xff]
          %v515 = vld [vmem:[#allocation5] sm:$0x1]
          %v516 = vld [vmem:[%s2] sm:$0x1]
          %vm517 = vcmask 261120
          %v518 = vsel %vm517, %v514, 0.0
          %519 = vadd.xlane.f32.xlu0 %v518
          %v520 = vpop.xlane.xlu0 %519
          %v521 = vrcp.pop 32.0
          %v522 = vmul.f32 32.0, %v521
          %v523 = vsub.f32 1.0, %v522
          %v524 = vmul.f32 %v521, %v523
          %v525 = vadd.f32 %v521, %v524
          %vm526 = vweird.f32 %v521
          %v527 = vsel %vm526, %v521, %v525
          %v528 = vmul.f32 %v520, %v527
          %v529 = vsub.f32 %v514, %v528
          %v530 = vmul.f32 %v529, %v529
          %v531 = vsel %vm517, %v530, 0.0
          %532 = vadd.xlane.f32.xlu0 %v531
          %v533 = vpop.xlane.xlu0 %532
          %v534 = vmul.f32 %v533, %v527
          %v535 = vadd.f32 %v534, 1e-05
          %v536 = vrsqrt.pop %v535
          %v537 = vmul.f32 %v536, %v535
          %v538 = vmul.f32 %v537, %v536
          %v539 = vmul.f32 0.5, %v538
          %v540 = vsub.f32 1.5, %v539
          %v541 = vmul.f32 %v536, %v540
          %vm542 = vweird.f32 %v535
          %vm543 = vweird.f32 %v536
          %vm544 = vmor %vm542, %vm543
          %v545 = vsel %vm544, %v536, %v541
          %v546 = vmul.f32 %v529, %v545
          %v548 = vperm.slane %v515, 0
          %v550 = vmul.f32 %v546, %v548
          %v552 = vperm.slane %v516, 0
          %v554 = vadd.f32 %v550, %v552
          %v555 = vpack.c.bf16 %v554, %v554
          %vm556 = vcmask 257024
          %557 = vst.msk [vmem:[#allocation2] sm:$0xf] %vm556, %v555
          %v558 = vld [vmem:[%s4] sm:$0xf]
          %v559 = vld [vmem:[%s4 + $0x4] sm:$0xf]
          %v560 = vld [vmem:[%s4 + $0x8] sm:$0xf]
          %v561 = vld [vmem:[%s4 + $0xc] sm:$0xf]
          %v566 = vunpack.c.l.b16 %v558
          %v567 = vunpack.c.l.b16 %v559
          %v568 = vunpack.c.l.b16 %v560
          %v569 = vunpack.c.l.b16 %v561
          %v570 = vpack.c.b16 %v567, %v566
          %v571 = vpack.c.b16 %v569, %v568
          %v573 = vsel %vm517, %v570, 0
          %v576 = vsel %vm517, %v571, 0
          %v579 = vsel %vm517, %v555, 0
          %581 = vmatpush.bf16.xpose.msra.mxu0 0
          %582 = vmatpush.bf16.xpose.msra.mxu0 0
          %583 = vmatpush.bf16.xpose.msra.mxu0 0
          %584 = vmatpush.bf16.xpose.msra.mxu0 0
          %585 = vmatpush.bf16.xpose.msra.mxu0 0
          %586 = vmatpush.bf16.xpose.msra.mxu0 0
          %587 = vmatpush.bf16.xpose.msra.mxu0 0
          %588 = vmatpush.bf16.xpose.msra.mxu0 %v579
          %589 = vmatmul.bf16.gmra.mxu0 %v573
          %v590 = vpop.f32.mrf.mxu0
          %v591 = vadd.f32 0.0, %v590
          %v592 = vpop.f32.mrf.mxu0
          %v593 = vadd.f32 0.0, %v592
          %594 = vmatmul.bf16.gmra.mxu0 %v576
          %v595 = vpop.f32.mrf.mxu0
          %v596 = vadd.f32 0.0, %v595
          %v597 = vpop.f32.mrf.mxu0
          %v598 = vadd.f32 0.0, %v597
          %599 = vdwg.mxu0
          %v600 = vld [vmem:[%s5] sm:$0xf]
          %v601 = vld [vmem:[%s5 + $0x4] sm:$0xf]
          %v602 = vld [vmem:[%s5 + $0x8] sm:$0xf]
          %v603 = vld [vmem:[%s5 + $0xc] sm:$0xf]
          %v608 = vunpack.c.l.b16 %v600
          %v609 = vunpack.c.l.b16 %v601
          %v610 = vunpack.c.l.b16 %v602
          %v611 = vunpack.c.l.b16 %v603
          %v612 = vpack.c.b16 %v609, %v608
          %v613 = vpack.c.b16 %v611, %v610
          %v615 = vsel %vm517, %v612, 0
          %v618 = vsel %vm517, %v613, 0
          %620 = vmatpush.bf16.xpose.msra.mxu0 0
          %621 = vmatpush.bf16.xpose.msra.mxu0 0
          %622 = vmatpush.bf16.xpose.msra.mxu0 0
          %623 = vmatpush.bf16.xpose.msra.mxu0 0
          %624 = vmatpush.bf16.xpose.msra.mxu0 0
          %625 = vmatpush.bf16.xpose.msra.mxu0 0
          %626 = vmatpush.bf16.xpose.msra.mxu0 0
          %627 = vmatpush.bf16.xpose.msra.mxu0 %v579
          %628 = vmatmul.bf16.gmra.mxu0 %v615
          %v629 = vpop.f32.mrf.mxu0
          %v630 = vadd.f32 0.0, %v629
          %v631 = vpop.f32.mrf.mxu0
          %v632 = vadd.f32 0.0, %v631
          %633 = vmatmul.bf16.gmra.mxu0 %v618
          %v634 = vpop.f32.mrf.mxu0
          %v635 = vadd.f32 0.0, %v634
          %v636 = vpop.f32.mrf.mxu0
          %v637 = vadd.f32 0.0, %v636
          %638 = vdwg.mxu0
          %v639 = vpack.c.bf16 %v591, %v591
          %v640 = vpack.c.bf16 %v593, %v593
          %v641 = vpack.c.bf16 %v596, %v596
          %v642 = vpack.c.bf16 %v598, %v598
          %v643 = vpack.c.bf16 %v630, %v630
          %v644 = vpack.c.bf16 %v632, %v632
          %v645 = vpack.c.bf16 %v635, %v635
          %v646 = vpack.c.bf16 %v637, %v637
          %vm647 = vcmask 60416
          %648 = vst.msk [vmem:[#allocation3] sm:$0xf] %vm647, %v639
          %649 = vst.msk [vmem:[#allocation4] sm:$0xf] %vm647, %v643
          %s650 = scalar_lea.vmem [#allocation3], 4
          %651 = vst.msk [vmem:[%s650] sm:$0xf] %vm647, %v640
          %s652 = scalar_lea.vmem [#allocation4], 4
          %653 = vst.msk [vmem:[%s652] sm:$0xf] %vm647, %v644
          %s654 = scalar_lea.vmem [#allocation3], 8
          %655 = vst.msk [vmem:[%s654] sm:$0xf] %vm647, %v641
          %s656 = scalar_lea.vmem [#allocation4], 8
          %657 = vst.msk [vmem:[%s656] sm:$0xf] %vm647, %v645
          %s658 = scalar_lea.vmem [#allocation3], 12
          %659 = vst.msk [vmem:[%s658] sm:$0xf] %vm647, %v642
          %s660 = scalar_lea.vmem [#allocation4], 12
          %661 = vst.msk [vmem:[%s660] sm:$0xf] %vm647, %v646
        $region88: #{tpu_custom_call.1} parent=75 // pred_fallthru
          _
        %s662 = smul.u32 %s35, 8
        %s663 = scalar_lea.vmem %s508, %s662
        %v664 = vld [vmem:[%s663] sm:$0xff]
        %s665 = sshra.s32 %s662, 3
        %s666 = sand.u32 %s662, 7
        %s667 = smul.addr %s665, 4
        %s668 = scalar_lea.vmem [#allocation2], %s667
        %v669 = vld [vmem:[%s668] sm:$0xf]
        %v670 = vld [vmem:[%s3] sm:$0xf]
        %v671 = vld [vmem:[%s3 + $0x4] sm:$0xf]
        %v672 = vld [vmem:[%s3 + $0x8] sm:$0xf]
        %v673 = vld [vmem:[%s3 + $0xc] sm:$0xf]
        %v678 = vunpack.c.l.b16 %v670
        %v679 = vunpack.c.l.b16 %v671
        %v680 = vunpack.c.l.b16 %v672
        %v681 = vunpack.c.l.b16 %v673
        %v682 = vpack.c.b16 %v679, %v678
        %v683 = vpack.c.b16 %v681, %v680
        %vm686 = vcmask 261120
        %v688 = vsel %vm686, %v669, 0
        %690 = vmatpush.bf16.msra.mxu0 0
        %691 = vmatpush.bf16.msra.mxu0 0
        %692 = vmatpush.bf16.msra.mxu0 0
        %693 = vmatpush.bf16.msra.mxu0 0
        %694 = vmatpush.bf16.msra.mxu0 0
        %695 = vmatpush.bf16.msra.mxu0 0
        %696 = vmatpush.bf16.msra.mxu0 %v683
        %697 = vmatpush.bf16.msra.mxu0 %v682
        %698 = vmatmul.bf16.gmra.mxu0 %v688
        %v699 = vpop.f32.mrf.mxu0
        %v700 = vadd.f32 0.0, %v699
        %v701 = vpop.f32.mrf.mxu0
        %702 = vdwg.mxu0
        %v703 = vmul.f32 %v700, 0.35355338
        %v704 = vpack.c.bf16 %v703, %v703
        %706 = vrot.lane.b32.xlu0 %v704, 120
        %v707 = vpop.permute.xlu0 %706
        %708 = vrot.lane.b32.xlu0 %v704, 112
        %v709 = vpop.permute.xlu0 %708
        %710 = vrot.lane.b32.xlu0 %v704, 104
        %v711 = vpop.permute.xlu0 %710
        %v712 = vld [vmem:[#allocation3] sm:$0xf]
        %v713 = vld [vmem:[#allocation3 + $0x4] sm:$0xf]
        %v714 = vld [vmem:[#allocation3 + $0x8] sm:$0xf]
        %v715 = vld [vmem:[#allocation3 + $0xc] sm:$0xf]
        %vm716 = vcmask 64512
        %v718 = vsel %vm716, %v704, 0
        %vm720 = vcmask 1043456
        %v722 = vsel %vm720, %v712, 0
        %724 = vmatpush.bf16.msra.mxu0 0
        %725 = vmatpush.bf16.msra.mxu0 0
        %726 = vmatpush.bf16.msra.mxu0 0
        %727 = vmatpush.bf16.msra.mxu0 0
        %728 = vmatpush.bf16.msra.mxu0 0
        %729 = vmatpush.bf16.msra.mxu0 0
        %730 = vmatpush.bf16.msra.mxu0 0
        %731 = vmatpush.bf16.msra.mxu0 %v722
        %732 = vmatmul.bf16.gmra.mxu0 %v718
        %v733 = vpop.f32.mrf.mxu0
        %v734 = vadd.f32 0.0, %v733
        %v735 = vpop.f32.mrf.mxu0
        %736 = vdwg.mxu0
        %v738 = vsel %vm716, %v707, 0
        %v741 = vsel %vm720, %v713, 0
        %743 = vmatpush.bf16.msra.mxu0 0
        %744 = vmatpush.bf16.msra.mxu0 0
        %745 = vmatpush.bf16.msra.mxu0 0
        %746 = vmatpush.bf16.msra.mxu0 0
        %747 = vmatpush.bf16.msra.mxu0 0
        %748 = vmatpush.bf16.msra.mxu0 0
        %749 = vmatpush.bf16.msra.mxu0 0
        %750 = vmatpush.bf16.msra.mxu0 %v741
        %751 = vmatmul.bf16.gmra.mxu0 %v738
        %v752 = vpop.f32.mrf.mxu0
        %v753 = vadd.f32 0.0, %v752
        %v754 = vpop.f32.mrf.mxu0
        %755 = vdwg.mxu0
        %v757 = vsel %vm716, %v709, 0
        %v760 = vsel %vm720, %v714, 0
        %762 = vmatpush.bf16.msra.mxu0 0
        %763 = vmatpush.bf16.msra.mxu0 0
        %764 = vmatpush.bf16.msra.mxu0 0
        %765 = vmatpush.bf16.msra.mxu0 0
        %766 = vmatpush.bf16.msra.mxu0 0
        %767 = vmatpush.bf16.msra.mxu0 0
        %768 = vmatpush.bf16.msra.mxu0 0
        %769 = vmatpush.bf16.msra.mxu0 %v760
        %770 = vmatmul.bf16.gmra.mxu0 %v757
        %v771 = vpop.f32.mrf.mxu0
        %v772 = vadd.f32 0.0, %v771
        %v773 = vpop.f32.mrf.mxu0
        %774 = vdwg.mxu0
        %v776 = vsel %vm716, %v711, 0
        %v779 = vsel %vm720, %v715, 0
        %781 = vmatpush.bf16.msra.mxu0 0
        %782 = vmatpush.bf16.msra.mxu0 0
        %783 = vmatpush.bf16.msra.mxu0 0
        %784 = vmatpush.bf16.msra.mxu0 0
        %785 = vmatpush.bf16.msra.mxu0 0
        %786 = vmatpush.bf16.msra.mxu0 0
        %787 = vmatpush.bf16.msra.mxu0 0
        %788 = vmatpush.bf16.msra.mxu0 %v779
        %789 = vmatmul.bf16.gmra.mxu0 %v776
        %v790 = vpop.f32.mrf.mxu0
        %v791 = vadd.f32 0.0, %v790
        %v792 = vpop.f32.mrf.mxu0
        %793 = vdwg.mxu0
        %v794 = vsel %vm716, %v734, -inf
        %795 = vmax.xlane.f32.xlu0 %v794
        %v796 = vpop.xlane.xlu0 %795
        %v797 = vsel %vm716, %v753, -inf
        %798 = vmax.xlane.f32.xlu0 %v797
        %v799 = vpop.xlane.xlu0 %798
        %v800 = vsel %vm716, %v772, -inf
        %801 = vmax.xlane.f32.xlu0 %v800
        %v802 = vpop.xlane.xlu0 %801
        %v803 = vsel %vm716, %v791, -inf
        %804 = vmax.xlane.f32.xlu0 %v803
        %v805 = vpop.xlane.xlu0 %804
        %v806 = vsub.f32 %v734, %v796
        %v807 = vsub.f32 %v753, %v799
        %v808 = vsub.f32 %v772, %v802
        %v809 = vsub.f32 %v791, %v805
        %v810 = vmul.f32 %v806, 1.442695
        %v811 = vpow.pop %v810
        %v812 = vmul.f32 %v807, 1.442695
        %v813 = vpow.pop %v812
        %v814 = vmul.f32 %v808, 1.442695
        %v815 = vpow.pop %v814
        %v816 = vmul.f32 %v809, 1.442695
        %v817 = vpow.pop %v816
        %v818 = vsel %vm716, %v811, 0.0
        %819 = vadd.xlane.f32.xlu0 %v818
        %v820 = vpop.xlane.xlu0 %819
        %v821 = vsel %vm716, %v813, 0.0
        %822 = vadd.xlane.f32.xlu0 %v821
        %v823 = vpop.xlane.xlu0 %822
        %v824 = vsel %vm716, %v815, 0.0
        %825 = vadd.xlane.f32.xlu0 %v824
        %v826 = vpop.xlane.xlu0 %825
        %v827 = vsel %vm716, %v817, 0.0
        %828 = vadd.xlane.f32.xlu0 %v827
        %v829 = vpop.xlane.xlu0 %828
        %v830 = vpack.c.bf16 %v811, %v811
        %v831 = vpack.c.bf16 %v813, %v813
        %v832 = vpack.c.bf16 %v815, %v815
        %v833 = vpack.c.bf16 %v817, %v817
        %v834 = vld [vmem:[#allocation4] sm:$0xf]
        %v835 = vld [vmem:[#allocation4 + $0x4] sm:$0xf]
        %v836 = vld [vmem:[#allocation4 + $0x8] sm:$0xf]
        %v837 = vld [vmem:[#allocation4 + $0xc] sm:$0xf]
        %v839 = vsel %vm716, %v830, 0
        %v842 = vsel %vm716, %v834, 0
        %844 = vmatpush.bf16.xpose.msra.mxu0 0
        %845 = vmatpush.bf16.xpose.msra.mxu0 0
        %846 = vmatpush.bf16.xpose.msra.mxu0 0
        %847 = vmatpush.bf16.xpose.msra.mxu0 0
        %848 = vmatpush.bf16.xpose.msra.mxu0 0
        %849 = vmatpush.bf16.xpose.msra.mxu0 0
        %850 = vmatpush.bf16.xpose.msra.mxu0 0
        %851 = vmatpush.bf16.xpose.msra.mxu0 %v842
        %852 = vmatmul.bf16.gmra.mxu0 %v839
        %v853 = vpop.f32.mrf.mxu0
        %v854 = vadd.f32 0.0, %v853
        %v855 = vpop.f32.mrf.mxu0
        %856 = vdwg.mxu0
        %v858 = vsel %vm716, %v831, 0
        %v861 = vsel %vm716, %v835, 0
        %863 = vmatpush.bf16.xpose.msra.mxu0 0
        %864 = vmatpush.bf16.xpose.msra.mxu0 0
        %865 = vmatpush.bf16.xpose.msra.mxu0 0
        %866 = vmatpush.bf16.xpose.msra.mxu0 0
        %867 = vmatpush.bf16.xpose.msra.mxu0 0
        %868 = vmatpush.bf16.xpose.msra.mxu0 0
        %869 = vmatpush.bf16.xpose.msra.mxu0 0
        %870 = vmatpush.bf16.xpose.msra.mxu0 %v861
        %871 = vmatmul.bf16.gmra.mxu0 %v858
        %v872 = vpop.f32.mrf.mxu0
        %v873 = vadd.f32 0.0, %v872
        %v874 = vpop.f32.mrf.mxu0
        %875 = vdwg.mxu0
        %v877 = vsel %vm716, %v832, 0
        %v880 = vsel %vm716, %v836, 0
        %882 = vmatpush.bf16.xpose.msra.mxu0 0
        %883 = vmatpush.bf16.xpose.msra.mxu0 0
        %884 = vmatpush.bf16.xpose.msra.mxu0 0
        %885 = vmatpush.bf16.xpose.msra.mxu0 0
        %886 = vmatpush.bf16.xpose.msra.mxu0 0
        %887 = vmatpush.bf16.xpose.msra.mxu0 0
        %888 = vmatpush.bf16.xpose.msra.mxu0 0
        %889 = vmatpush.bf16.xpose.msra.mxu0 %v880
        %890 = vmatmul.bf16.gmra.mxu0 %v877
        %v891 = vpop.f32.mrf.mxu0
        %v892 = vadd.f32 0.0, %v891
        %v893 = vpop.f32.mrf.mxu0
        %894 = vdwg.mxu0
        %v896 = vsel %vm716, %v833, 0
        %v899 = vsel %vm716, %v837, 0
        %901 = vmatpush.bf16.xpose.msra.mxu0 0
        %902 = vmatpush.bf16.xpose.msra.mxu0 0
        %903 = vmatpush.bf16.xpose.msra.mxu0 0
        %904 = vmatpush.bf16.xpose.msra.mxu0 0
        %905 = vmatpush.bf16.xpose.msra.mxu0 0
        %906 = vmatpush.bf16.xpose.msra.mxu0 0
        %907 = vmatpush.bf16.xpose.msra.mxu0 0
        %908 = vmatpush.bf16.xpose.msra.mxu0 %v899
        %909 = vmatmul.bf16.gmra.mxu0 %v896
        %v910 = vpop.f32.mrf.mxu0
        %v911 = vadd.f32 0.0, %v910
        %v912 = vpop.f32.mrf.mxu0
        %913 = vdwg.mxu0
        %v914 = vrcp.pop %v820
        %v915 = vrcp.pop %v823
        %v916 = vrcp.pop %v826
        %v917 = vrcp.pop %v829
        %v918 = vmul.f32 %v854, %v914
        %v919 = vmul.f32 %v873, %v915
        %v920 = vmul.f32 %v892, %v916
        %v921 = vmul.f32 %v911, %v917
        %v922 = vrot.slane %v920, 4
        %vm923 = vcmask 1047556
        %v924 = vsel %vm923, %v922, %v918
        %v925 = vrot.slane %v918, 4
        %v926 = vsel %vm923, %v920, %v925
        %v928 = vunpack.c.l.s4 1983009808
        %v929 = vunpack.c.0.s8 %v928
        %v930 = vperm.slane %v924, %v929
        %v932 = vunpack.c.l.s4 1983009808
        %v933 = vunpack.c.0.s8 %v932
        %v934 = vperm.slane %v926, %v933
        %v935 = vrot.slane %v921, 4
        %v936 = vsel %vm923, %v935, %v919
        %v937 = vrot.slane %v919, 4
        %v938 = vsel %vm923, %v921, %v937
        %v940 = vunpack.c.l.s4 1983009808
        %v941 = vunpack.c.0.s8 %v940
        %v942 = vperm.slane %v936, %v941
        %v944 = vunpack.c.l.s4 1983009808
        %v945 = vunpack.c.0.s8 %v944
        %v946 = vperm.slane %v938, %v945
        %v947 = vrot.slane %v942, 4
        %v948 = vsel %vm923, %v947, %v930
        %v949 = vrot.slane %v930, 4
        %v950 = vsel %vm923, %v942, %v949
        %v952 = vunpack.c.l.s4 1934713408
        %v953 = vunpack.c.0.s8 %v952
        %v954 = vperm.slane %v948, %v953
        %v956 = vunpack.c.l.s4 1934713408
        %v957 = vunpack.c.0.s8 %v956
        %v958 = vperm.slane %v950, %v957
        %v959 = vrot.slane %v946, 4
        %v960 = vsel %vm923, %v959, %v934
        %v961 = vrot.slane %v934, 4
        %v962 = vsel %vm923, %v946, %v961
        %v964 = vunpack.c.l.s4 1934713408
        %v965 = vunpack.c.0.s8 %v964
        %v966 = vperm.slane %v960, %v965
        %v968 = vunpack.c.l.s4 1934713408
        %v969 = vunpack.c.0.s8 %v968
        %v970 = vperm.slane %v962, %v969
        %v971 = vrot.slane %v954, 4
        %v972 = vsel %vm923, 0.0, %v971
        %v973 = vrot.slane %v958, 4
        %v974 = vsel %vm923, 0.0, %v973
        %v975 = vrot.slane %v966, 4
        %v976 = vsel %vm923, 0.0, %v975
        %v977 = vrot.slane %v970, 4
        %v978 = vsel %vm923, 0.0, %v977
        %v979 = vsel %vm923, %v973, %v954
        %v981 = vunpack.c.l.s4 1983009808
        %v982 = vunpack.c.0.s8 %v981
        %v983 = vperm.slane %v979, %v982
        %v984 = vrot.slane %v974, 4
        %v985 = vsel %vm923, %v984, %v972
        %v987 = vunpack.c.l.s4 1983009808
        %v988 = vunpack.c.0.s8 %v987
        %v989 = vperm.slane %v985, %v988
        %v990 = vsel %vm923, %v977, %v966
        %v992 = vunpack.c.l.s4 1983009808
        %v993 = vunpack.c.0.s8 %v992
        %v994 = vperm.slane %v990, %v993
        %v995 = vrot.slane %v978, 4
        %v996 = vsel %vm923, %v995, %v976
        %v998 = vunpack.c.l.s4 1983009808
        %v999 = vunpack.c.0.s8 %v998
        %v1000 = vperm.slane %v996, %v999
        %v1001 = vrot.slane %v989, 4
        %v1002 = vsel %vm923, %v1001, %v983
        %v1003 = vrot.slane %v983, 4
        %v1004 = vsel %vm923, %v989, %v1003
        %v1006 = vunpack.c.l.s4 1934713408
        %v1007 = vunpack.c.0.s8 %v1006
        %v1008 = vperm.slane %v1002, %v1007
        %v1010 = vunpack.c.l.s4 1934713408
        %v1011 = vunpack.c.0.s8 %v1010
        %v1012 = vperm.slane %v1004, %v1011
        %v1013 = vrot.slane %v1000, 4
        %v1014 = vsel %vm923, %v1013, %v994
        %v1015 = vrot.slane %v994, 4
        %v1016 = vsel %vm923, %v1000, %v1015
        %v1018 = vunpack.c.l.s4 1934713408
        %v1019 = vunpack.c.0.s8 %v1018
        %v1020 = vperm.slane %v1014, %v1019
        %v1022 = vunpack.c.l.s4 1934713408
        %v1023 = vunpack.c.0.s8 %v1022
        %v1024 = vperm.slane %v1016, %v1023
        %v1025 = vrot.slane %v1020, 4
        %v1026 = vsel %vm923, %v1025, %v1008
        %v1027 = vrot.slane %v1008, 4
        %v1028 = vsel %vm923, %v1020, %v1027
        %v1029 = vrot.slane %v1024, 4
        %v1030 = vsel %vm923, %v1029, %v1012
        %v1031 = vrot.slane %v1012, 4
        %v1032 = vsel %vm923, %v1024, %v1031
        %1034 = vrot.lane.b32.xlu0 %v1028, 8
        %v1035 = vpop.permute.xlu0 %1034
        %1038 = vrot.lane.b32.xlu0 %v1030, 16
        %v1039 = vpop.permute.xlu0 %1038
        %1042 = vrot.lane.b32.xlu0 %v1032, 24
        %v1043 = vpop.permute.xlu0 %1042
        %v1045 = vsel %vm716, %v1026, %v1035
        %vm1046 = vcmask 130048
        %v1047 = vsel %vm1046, %v1045, %v1039
        %vm1048 = vcmask 195584
        %v1049 = vsel %vm1048, %v1047, %v1043
        %v1050 = vpack.c.bf16 %v1049, %v1049
        %v1051 = vld [vmem:[%s6] sm:$0xf]
        %v1052 = vld [vmem:[%s6 + $0x4] sm:$0xf]
        %v1053 = vld [vmem:[%s6 + $0x8] sm:$0xf]
        %v1054 = vld [vmem:[%s6 + $0xc] sm:$0xf]
        %v1055 = vld [vmem:[%s7] sm:$0x1]
        %v1057 = vperm.slane %v1055, 0
        %v1063 = vunpack.c.l.b16 %v1051
        %v1064 = vunpack.c.l.b16 %v1052
        %v1065 = vunpack.c.l.b16 %v1053
        %v1066 = vunpack.c.l.b16 %v1054
        %v1067 = vpack.c.b16 %v1064, %v1063
        %v1068 = vpack.c.b16 %v1066, %v1065
        %v1072 = vsel %vm686, %v1050, 0
        %1074 = vmatpush.bf16.msra.mxu0 0
        %1075 = vmatpush.bf16.msra.mxu0 0
        %1076 = vmatpush.bf16.msra.mxu0 0
        %1077 = vmatpush.bf16.msra.mxu0 0
        %1078 = vmatpush.bf16.msra.mxu0 0
        %1079 = vmatpush.bf16.msra.mxu0 0
        %1080 = vmatpush.bf16.msra.mxu0 %v1068
        %1081 = vmatpush.bf16.msra.mxu0 %v1067
        %1082 = vmatmul.bf16.gmra.mxu0 %v1072
        %v1083 = vpop.f32.mrf.mxu0
        %v1084 = vadd.f32 %v1057, %v1083
        %v1085 = vpop.f32.mrf.mxu0
        %1086 = vdwg.mxu0
        %v1087 = vadd.f32 %v664, %v1084
        %v1088 = vld [vmem:[%s8] sm:$0x1]
        %v1089 = vld [vmem:[%s9] sm:$0x1]
        %v1090 = vsel %vm686, %v1087, 0.0
        %1091 = vadd.xlane.f32.xlu0 %v1090
        %v1092 = vpop.xlane.xlu0 %1091
        %v1093 = vrcp.pop 32.0
        %v1094 = vmul.f32 32.0, %v1093
        %v1095 = vsub.f32 1.0, %v1094
        %v1096 = vmul.f32 %v1093, %v1095
        %v1097 = vadd.f32 %v1093, %v1096
        %vm1098 = vweird.f32 %v1093
        %v1099 = vsel %vm1098, %v1093, %v1097
        %v1100 = vmul.f32 %v1092, %v1099
        %v1101 = vsub.f32 %v1087, %v1100
        %v1102 = vmul.f32 %v1101, %v1101
        %v1103 = vsel %vm686, %v1102, 0.0
        %1104 = vadd.xlane.f32.xlu0 %v1103
        %v1105 = vpop.xlane.xlu0 %1104
        %v1106 = vmul.f32 %v1105, %v1099
        %v1107 = vadd.f32 %v1106, 1e-05
        %v1108 = vrsqrt.pop %v1107
        %v1109 = vmul.f32 %v1108, %v1107
        %v1110 = vmul.f32 %v1109, %v1108
        %v1111 = vmul.f32 0.5, %v1110
        %v1112 = vsub.f32 1.5, %v1111
        %v1113 = vmul.f32 %v1108, %v1112
        %vm1114 = vweird.f32 %v1107
        %vm1115 = vweird.f32 %v1108
        %vm1116 = vmor %vm1114, %vm1115
        %v1117 = vsel %vm1116, %v1108, %v1113
        %v1118 = vmul.f32 %v1101, %v1117
        %v1120 = vperm.slane %v1088, 0
        %v1122 = vmul.f32 %v1118, %v1120
        %v1124 = vperm.slane %v1089, 0
        %v1126 = vadd.f32 %v1122, %v1124
        %v1127 = vpack.c.bf16 %v1126, %v1126
        %v1128 = vld [vmem:[#allocation8] sm:$0xf]
        %v1129 = vld [vmem:[#allocation8 + $0x4] sm:$0xf]
        %v1130 = vld [vmem:[#allocation8 + $0x8] sm:$0xf]
        %v1131 = vld [vmem:[#allocation8 + $0xc] sm:$0xf]
        %v1132 = vld [vmem:[%s11] sm:$0x1]
        %v1134 = vperm.slane %v1132, 0
        %v1140 = vunpack.c.l.b16 %v1128
        %v1141 = vunpack.c.l.b16 %v1129
        %v1142 = vunpack.c.l.b16 %v1130
        %v1143 = vunpack.c.l.b16 %v1131
        %v1144 = vpack.c.b16 %v1141, %v1140
        %v1145 = vpack.c.b16 %v1143, %v1142
        %v1149 = vsel %vm686, %v1127, 0
        %1151 = vmatpush.bf16.msra.mxu0 0
        %1152 = vmatpush.bf16.msra.mxu0 0
        %1153 = vmatpush.bf16.msra.mxu0 0
        %1154 = vmatpush.bf16.msra.mxu0 0
        %1155 = vmatpush.bf16.msra.mxu0 0
        %1156 = vmatpush.bf16.msra.mxu0 0
        %1157 = vmatpush.bf16.msra.mxu0 %v1145
        %1158 = vmatpush.bf16.msra.mxu0 %v1144
        %1159 = vmatmul.bf16.gmra.mxu0 %v1149
        %v1160 = vpop.f32.mrf.mxu0
        %v1161 = vadd.f32 %v1134, %v1160
        %v1162 = vpop.f32.mrf.mxu0
        %1163 = vdwg.mxu0
        %v1164 = vmul.f32 %v1161, 0.5
        %v1165 = vmul.f32 %v1161, 0.70710677
        %v1166 = vmul.f32 %v1165, %v1165
        %v1167 = vmin.f32 16.0, %v1166
        %v1168 = vmul.f32 %v1167, 2.1237322e-06
        %v1169 = vadd.f32 %v1168, 0.00028619796
        %v1170 = vmul.f32 %v1167, %v1169
        %v1171 = vadd.f32 %v1170, 0.0036580483
        %v1172 = vmul.f32 %v1167, %v1171
        %v1173 = vadd.f32 %v1172, 0.05243302
        %v1174 = vmul.f32 %v1167, %v1173
        %v1175 = vadd.f32 %v1174, 0.18741608
        %v1176 = vmul.f32 %v1167, %v1175
        %v1177 = vadd.f32 %v1176, 1.1283791
        %v1178 = vmul.f32 %v1165, %v1177
        %v1179 = vmul.f32 %v1167, 3.8918573e-05
        %v1180 = vadd.f32 %v1179, 0.001143296
        %v1181 = vmul.f32 %v1167, %v1180
        %v1182 = vadd.f32 %v1181, 0.014752088
        %v1183 = vmul.f32 %v1167, %v1182
        %v1184 = vadd.f32 %v1183, 0.112945676
        %v1185 = vmul.f32 %v1167, %v1184
        %v1186 = vadd.f32 %v1185, 0.4994258
        %v1187 = vmul.f32 %v1167, %v1186
        %v1188 = vadd.f32 %v1187, 1.0
        %v1189 = vrcp.pop %v1188
        %v1190 = vmul.f32 %v1188, %v1189
        %v1191 = vsub.f32 1.0, %v1190
        %v1192 = vmul.f32 %v1189, %v1191
        %v1193 = vadd.f32 %v1189, %v1192
        %vm1194 = vweird.f32 %v1188
        %vm1195 = vweird.f32 %v1189
        %vm1196 = vmor %vm1194, %vm1195
        %v1197 = vsel %vm1196, %v1189, %v1193
        %v1198 = vand.u32 2147483647, %v1188
        %vm1199 = vcmp.eq.f32.partialorder %v1198, 8.507059e+37
        %v1200 = vand.u32 %v1188, 2147483648
        %v1201 = vor.u32 1.1754944e-38, %v1200
        %v1202 = vsel %vm1199, %v1201, %v1197
        %v1203 = vmul.f32 %v1178, %v1202
        %v1204 = vmin.f32 %v1203, 1.0
        %v1205 = vmax.f32 %v1204, -1.0
        %v1206 = vadd.f32 %v1205, 1.0
        %v1207 = vmul.f32 %v1164, %v1206
        %v1208 = vpack.c.bf16 %v1207, %v1207
        %v1209 = vld [vmem:[%s12] sm:$0xf]
        %v1210 = vld [vmem:[%s12 + $0x4] sm:$0xf]
        %v1211 = vld [vmem:[%s12 + $0x8] sm:$0xf]
        %v1212 = vld [vmem:[%s12 + $0xc] sm:$0xf]
        %v1213 = vld [vmem:[%s12 + $0x10] sm:$0xf]
        %v1214 = vld [vmem:[%s12 + $0x14] sm:$0xf]
        %v1215 = vld [vmem:[%s12 + $0x18] sm:$0xf]
        %v1216 = vld [vmem:[%s12 + $0x1c] sm:$0xf]
        %v1217 = vld [vmem:[%s12 + $0x20] sm:$0xf]
        %v1218 = vld [vmem:[%s12 + $0x24] sm:$0xf]
        %v1219 = vld [vmem:[%s12 + $0x28] sm:$0xf]
        %v1220 = vld [vmem:[%s12 + $0x2c] sm:$0xf]
        %v1221 = vld [vmem:[%s12 + $0x30] sm:$0xf]
        %v1222 = vld [vmem:[%s12 + $0x34] sm:$0xf]
        %v1223 = vld [vmem:[%s12 + $0x38] sm:$0xf]
        %v1224 = vld [vmem:[%s12 + $0x3c] sm:$0xf]
        %v1225 = vld [vmem:[%s13] sm:$0x1]
        %v1227 = vperm.slane %v1225, 0
        %v1245 = vunpack.c.l.b16 %v1209
        %v1246 = vunpack.c.l.b16 %v1210
        %v1247 = vunpack.c.l.b16 %v1211
        %v1248 = vunpack.c.l.b16 %v1212
        %v1249 = vunpack.c.l.b16 %v1213
        %v1250 = vunpack.c.l.b16 %v1214
        %v1251 = vunpack.c.l.b16 %v1215
        %v1252 = vunpack.c.l.b16 %v1216
        %v1253 = vunpack.c.l.b16 %v1217
        %v1254 = vunpack.c.l.b16 %v1218
        %v1255 = vunpack.c.l.b16 %v1219
        %v1256 = vunpack.c.l.b16 %v1220
        %v1257 = vunpack.c.l.b16 %v1221
        %v1258 = vunpack.c.l.b16 %v1222
        %v1259 = vunpack.c.l.b16 %v1223
        %v1260 = vunpack.c.l.b16 %v1224
        %v1261 = vpack.c.b16 %v1246, %v1245
        %v1262 = vpack.c.b16 %v1248, %v1247
        %v1263 = vpack.c.b16 %v1250, %v1249
        %v1264 = vpack.c.b16 %v1252, %v1251
        %v1265 = vpack.c.b16 %v1254, %v1253
        %v1266 = vpack.c.b16 %v1256, %v1255
        %v1267 = vpack.c.b16 %v1258, %v1257
        %v1268 = vpack.c.b16 %v1260, %v1259
        %1277 = vmatpush.bf16.msra.mxu0 %v1268
        %1278 = vmatpush.bf16.msra.mxu0 %v1267
        %1279 = vmatpush.bf16.msra.mxu0 %v1266
        %1280 = vmatpush.bf16.msra.mxu0 %v1265
        %1281 = vmatpush.bf16.msra.mxu0 %v1264
        %1282 = vmatpush.bf16.msra.mxu0 %v1263
        %1283 = vmatpush.bf16.msra.mxu0 %v1262
        %1284 = vmatpush.bf16.msra.mxu0 %v1261
        %1285 = vmatmul.bf16.gmra.mxu0 %v1208
        %v1286 = vpop.f32.mrf.mxu0
        %v1287 = vadd.f32 %v1227, %v1286
        %v1288 = vpop.f32.mrf.mxu0
        %1289 = vdwg.mxu0
        %v1290 = vadd.f32 %v1087, %v1287
        %1291 = vst.msk [vmem:[%s504] sm:$0xff] %vm686, %v1290
        %s1292 = sand.u32 %s351, 1
        %s1293 = scalar_lea.sflag [#allocation7], %s1292
        %s1294 = sand.u32 %s351, 1
        %s1295 = smul.addr %s1294, 8
        %s1296 = scalar_lea.vmem [#allocation10], %s1295
        // Predicated region
        $region89: #{tpu_custom_call.1} parent=75 // pred_check
          %p1297 = pneg %p361
        $region90: #{tpu_custom_call.1} parent=75 // pred_check_branch
          %1299 = sbr.rel (%p1297) target = $region92
        $region91: #{tpu_custom_call.1} parent=75 // pred_region
          %1301 = vsyncadd %s1293, 0
          %s1302 = sadd.s32 %s35, %s34
          %s1303 = smul.addr %s1302, 8
          %s1304 = scalar_lea.hbm %s14, %s1303
          %s1306 = sshll.u32 %s1296, 4
          %s1307 = int_to_ptr.vmem [resolvable:$true] %s1306
          %s1308 = sshll.u32 %s1304, 4
          %s1309 = int_to_ptr.hbm [resolvable:$true] %s1308
          %1311 = dma.vmem_to_hbm [thread:$0]  %s1307, 128, %s1309, %s1293
        $region92: #{tpu_custom_call.1} parent=75 // pred_fallthru
          _
      $region76: #{tpu_custom_call.1} parent=5 // pred_fallthru
        _
      %p1312 = scmp.le.s32.totalorder 2, %s25
      // Predicated region
      $region93: #{tpu_custom_call.1} parent=5 // pred_check
        %p1313 = pneg %p1312
      $region94: #{tpu_custom_call.1} parent=5 // pred_check_branch
        %1315 = sbr.rel (%p1313) target = $region96
      $region95: #{tpu_custom_call.1} parent=5 // pred_region
        %s1316 = ssub.s32 %s25, 2
        // Predicated region
        $region97: #{tpu_custom_call.1} parent=95 // pred_check
          %p1317 = pneg %p367
        $region98: #{tpu_custom_call.1} parent=95 // pred_check_branch
          %1319 = sbr.rel (%p1317) target = $region100
        $region99: #{tpu_custom_call.1} parent=95 // pred_region
          %s1320 = sand.u32 %s352, 1
          %s1321 = scalar_lea.sflag [#allocation7], %s1320
          %s1322 = sand.u32 %s352, 1
          %s1323 = smul.addr %s1322, 8
          %s1324 = scalar_lea.vmem [#allocation10], %s1323
          %1326 = dma.done %s1321, 128
        $region100: #{tpu_custom_call.1} parent=95 // pred_fallthru
          _
      $region96: #{tpu_custom_call.1} parent=5 // pred_fallthru
        _
    $region6: #{tpu_custom_call.1} parent=1 // loop_footer
      %s29 = sadd.s32 1, %s25
    $region7: #{tpu_custom_call.1} parent=1 // loop_footer_branch
      %24 = sbr.rel target = $region3
    $region8: #{tpu_custom_call.1} parent=1 // loop_exit
      _
    %1327 = vsyncpa [#allocation6], 1
    %s1328 = scalar_lea.sflag [#allocation6], 1
    %1329 = vsyncpa %s1328, 1
    %1330 = vsyncpa [#allocation9], 1
    %1331 = vsyncpa [#allocation7], 1
    %s1332 = scalar_lea.sflag [#allocation7], 1
    %1333 = vsyncpa %s1332, 1

</llo_original>
